<compile_context>
chip_gen: v7x
topology: tpu7x:2x2x1
jax: 0.10.0
libtpu: 0.0.40
codegen_flags: <defaults>
</compile_context>

<pallas_src>
import functools

import numpy as np
import jax
import jax.numpy as jnp
from jax.experimental import pallas as pl
from jax.experimental.pallas import tpu as pltpu


# ------------------------------ fused DoubleConv kernel ------------------------------

def _double_conv_kernel(num_row_tiles,
                        x_ref, w1_ref, s1_ref, b1_ref, w2_ref, s2_ref, b2_ref,
                        o_ref, xpad_ref, midpad_ref):
    # x_ref:      (1, H, W, Cin)     full image for this batch element (resident across row tiles)
    # w1_ref:     (9, Cin, Cout)     per-tap weights, tap k = 3*dy + dx
    # w2_ref:     (9, Cout, Cout)
    # s*/b*_ref:  (1, Cout)          folded BN scale / bias (conv bias folded in), f32
    # o_ref:      (1, TH, W, Cout)   output row tile
    # xpad_ref:   (TH+4, W+2, Cin)   VMEM: zero-bordered input window (2-row halo)
    # midpad_ref: (TH+2, W+2, Cout)  VMEM: zero-bordered conv1 activation (1-row halo)
    t = pl.program_id(1)
    T = num_row_tiles
    TH = xpad_ref.shape[0] - 4
    W = xpad_ref.shape[1] - 2
    Cin = xpad_ref.shape[2]
    Cout = o_ref.shape[-1]
    cdt = xpad_ref.dtype
    rows1 = TH + 2                                      # conv1 rows incl. 1-row halo

    # ---- stage the (TH+4)-row input window with a 1-px zero border ------------------
    # Zero only the border strips (left/right columns always; top/bottom halo rows only
    # on the first/last tile), never the interior.
    xpad_ref[:, 0:1, :] = jnp.zeros((TH + 4, 1, Cin), cdt)
    xpad_ref[:, W + 1:W + 2, :] = jnp.zeros((TH + 4, 1, Cin), cdt)
    zrows2 = jnp.zeros((2, W, Cin), cdt)

    if T == 1:
        xpad_ref[0:2, 1:W + 1, :] = zrows2
        xpad_ref[2:TH + 2, 1:W + 1, :] = x_ref[0]
        xpad_ref[TH + 2:TH + 4, 1:W + 1, :] = zrows2
    else:
        @pl.when(t == 0)
        def _():
            xpad_ref[0:2, 1:W + 1, :] = zrows2
            xpad_ref[2:TH + 4, 1:W + 1, :] = x_ref[0, 0:TH + 2, :, :]

        if T > 2:
            @pl.when(jnp.logical_and(t > 0, t < T - 1))
            def _():
                xpad_ref[0:TH + 4, 1:W + 1, :] = x_ref[0, pl.ds(t * TH - 2, TH + 4), :, :]

        @pl.when(t == T - 1)
        def _():
            xpad_ref[0:TH + 2, 1:W + 1, :] = x_ref[0, pl.ds(t * TH - 2, TH + 2), :, :]
            xpad_ref[TH + 2:TH + 4, 1:W + 1, :] = zrows2

    # ---- conv1: 9 accumulating MXU dots on shifted views, f32 accumulation ----------
    acc1 = None
    for k in range(9):                                   # statically unrolled
        dy, dx = divmod(k, 3)
        lhs = xpad_ref[dy:dy + rows1, dx:dx + W, :].reshape(rows1 * W, Cin)
        d = jnp.dot(lhs, w1_ref[k], preferred_element_type=jnp.float32)
        acc1 = d if acc1 is None else acc1 + d
    y1 = jnp.maximum(acc1 * s1_ref[...] + b1_ref[...], 0.0)   # BN(eval) + ReLU, f32

    # ---- stage conv1 activation (incl. halo) with a 1-px zero border (stays in VMEM) -
    midpad_ref[:, 0:1, :] = jnp.zeros((rows1, 1, Cout), cdt)
    midpad_ref[:, W + 1:W + 2, :] = jnp.zeros((rows1, 1, Cout), cdt)
    midpad_ref[:, 1:W + 1, :] = y1.reshape(rows1, W, Cout).astype(cdt)

    # Halo rows that fall outside the image are conv2's zero padding.
    zrow = jnp.zeros((1, W + 2, Cout), cdt)
    if T == 1:
        midpad_ref[0:1, :, :] = zrow
        midpad_ref[TH + 1:TH + 2, :, :] = zrow
    else:
        @pl.when(t == 0)
        def _():
            midpad_ref[0:1, :, :] = zrow

        @pl.when(t == T - 1)
        def _():
            midpad_ref[TH + 1:TH + 2, :, :] = zrow

    # ---- conv2: 9 accumulating MXU dots, f32 accumulation, f32 epilogue --------------
    acc2 = None
    for k in range(9):
        dy, dx = divmod(k, 3)
        lhs = midpad_ref[dy:dy + TH, dx:dx + W, :].reshape(TH * W, Cout)
        d = jnp.dot(lhs, w2_ref[k], preferred_element_type=jnp.float32)
        acc2 = d if acc2 is None else acc2 + d
    y2 = jnp.maximum(acc2 * s2_ref[...] + b2_ref[...], 0.0)

    o_ref[0] = y2.reshape(TH, W, Cout).astype(o_ref.dtype)


# --------------------------------- tile-size selection -------------------------------

def _pick_tile_rows(H, W, Cin, Cout, itemsize, budget_bytes=12 << 20):
    # Per-tile working set (scratch + double-buffered f32 output block); budget chosen
    # conservatively so the whole kernel (plus the resident input block + weights) stays
    # well inside v7x's 64 MiB VMEM while leaving the compiler headroom.
    def tile_bytes(th):
        return ((th + 4) * (W + 2) * Cin * itemsize       # xpad scratch
                + (th + 2) * (W + 2) * Cout * itemsize    # midpad scratch
                + 2 * th * W * Cout * 4)                  # double-buffered out block (f32)

    divs = [d for d in range(2, H + 1) if H % d == 0] or [H]
    fitting = [d for d in divs if tile_bytes(d) <= budget_bytes] or [divs[0]]
    # Prefer >= 2 row tiles (keeps both v7x TensorCores busy even at batch==1) as long as
    # the flattened matmul M dim (TH*W) stays MXU-friendly.
    multi = [d for d in fitting if d < H and d * W >= 128]
    return max(multi) if multi else max(fitting)


# ---------------------------------- fused forward (NHWC) -----------------------------

def _double_conv_nhwc(x_nhwc, params, *, mxu_dtype=jnp.bfloat16, tile_rows=None):
    N, H, W, Cin = x_nhwc.shape
    Cout = params["s1"].shape[0]
    itemsize = np.dtype(mxu_dtype).itemsize

    TH = tile_rows if tile_rows is not None else _pick_tile_rows(H, W, Cin, Cout, itemsize)
    assert H % TH == 0, (H, TH)
    T = H // TH
    assert T == 1 or TH >= 2, (H, TH)

    x = x_nhwc.astype(mxu_dtype)
    w1 = params["w1_taps"].astype(mxu_dtype)               # (9, Cin, Cout)
    w2 = params["w2_taps"].astype(mxu_dtype)               # (9, Cout, Cout)
    s1 = params["s1"].reshape(1, Cout).astype(jnp.float32)
    b1 = params["b1"].reshape(1, Cout).astype(jnp.float32)
    s2 = params["s2"].reshape(1, Cout).astype(jnp.float32)
    b2 = params["b2"].reshape(1, Cout).astype(jnp.float32)

    # VMEM budget: tile scratch + resident/double-buffered blocks (+2x safety margin).
    scratch_bytes = ((TH + 4) * (W + 2) * Cin + (TH + 2) * (W + 2) * Cout) * itemsize
    block_bytes = (2 * H * W * Cin * itemsize              # resident input image block
                   + 2 * TH * W * Cout * 4                 # output tile (f32)
                   + (w1.size + w2.size) * itemsize
                   + 4 * Cout * 4)
    vmem_limit = int(min(100 << 20, max(32 << 20, 2 * (scratch_bytes + block_bytes))))

    # conv1 recomputes its 2 halo rows per tile -> (TH+2)/TH factor on conv1 flops.
    conv1_flops = 2 * N * T * (TH + 2) * W * 9 * Cin * Cout
    conv2_flops = 2 * N * H * W * 9 * Cout * Cout
    bytes_accessed = (x.size * itemsize
                      + N * H * W * Cout * 4
                      + (w1.size + w2.size) * itemsize
                      + 4 * Cout * 4)
    cost = pl.CostEstimate(flops=conv1_flops + conv2_flops, transcendentals=0,
                           bytes_accessed=bytes_accessed)

    kernel = functools.partial(_double_conv_kernel, T)

    return pl.pallas_call(
        kernel,
        out_shape=jax.ShapeDtypeStruct((N, H, W, Cout), jnp.float32),
        grid=(N, T),
        in_specs=[
            pl.BlockSpec((1, H, W, Cin), lambda n, t: (n, 0, 0, 0)),   # resident per batch
            pl.BlockSpec((9, Cin, Cout), lambda n, t: (0, 0, 0)),
            pl.BlockSpec((1, Cout), lambda n, t: (0, 0)),
            pl.BlockSpec((1, Cout), lambda n, t: (0, 0)),
            pl.BlockSpec((9, Cout, Cout), lambda n, t: (0, 0, 0)),
            pl.BlockSpec((1, Cout), lambda n, t: (0, 0)),
            pl.BlockSpec((1, Cout), lambda n, t: (0, 0)),
        ],
        out_specs=pl.BlockSpec((1, TH, W, Cout), lambda n, t: (n, t, 0, 0)),
        scratch_shapes=[
            pltpu.VMEM((TH + 4, W + 2, Cin), mxu_dtype),    # padded input window
            pltpu.VMEM((TH + 2, W + 2, Cout), mxu_dtype),   # padded conv1 activation
        ],
        compiler_params=pltpu.CompilerParams(
            dimension_semantics=("parallel", "parallel"),
            vmem_limit_bytes=vmem_limit,
        ),
        cost_estimate=cost,
    )(x, w1, s1, b1, w2, s2, b2)


# --------------------------------- parameter setup -----------------------------------

def _fold_bn(gamma, beta, running_mean, running_var, conv_bias, eps=1e-5):
    scale = gamma / jnp.sqrt(running_var + eps)
    bias = beta + scale * (conv_bias - running_mean)
    return scale, bias


def _oihw_to_taps(w_oihw):
    # (Cout, Cin, 3, 3) -> (3, 3, Cin, Cout) -> (9, Cin, Cout); tap k = 3*dy + dx.
    cout, cin = w_oihw.shape[0], w_oihw.shape[1]
    return jnp.transpose(w_oihw, (2, 3, 1, 0)).reshape(9, cin, cout)


def init_double_conv_params(key, in_channels, out_channels):
    ks = jax.random.split(key, 8)

    def conv_init(kw, kb, cin, cout):
        fan_in = cin * 9
        bound = 1.0 / jnp.sqrt(jnp.float32(fan_in))
        w = jax.random.uniform(kw, (cout, cin, 3, 3), jnp.float32, -bound, bound)
        b = jax.random.uniform(kb, (cout,), jnp.float32, -bound, bound)
        return w, b

    w1, cb1 = conv_init(ks[0], ks[1], in_channels, out_channels)
    w2, cb2 = conv_init(ks[2], ks[3], out_channels, out_channels)
    g1 = jax.random.uniform(ks[4], (out_channels,), jnp.float32, 0.5, 1.5)
    be1 = jax.random.uniform(ks[5], (out_channels,), jnp.float32, -0.1, 0.1)
    g2 = jax.random.uniform(ks[6], (out_channels,), jnp.float32, 0.5, 1.5)
    be2 = jax.random.uniform(ks[7], (out_channels,), jnp.float32, -0.1, 0.1)
    rm = jnp.zeros((out_channels,), jnp.float32)
    rv = jnp.ones((out_channels,), jnp.float32)

    s1, b1 = _fold_bn(g1, be1, rm, rv, cb1)
    s2, b2 = _fold_bn(g2, be2, rm, rv, cb2)
    return {
        "w1_taps": _oihw_to_taps(w1), "s1": s1, "b1": b1,
        "w2_taps": _oihw_to_taps(w2), "s2": s2, "b2": b2,
        # raw weights kept only for the pure-JAX reference check in __main__
        "w1_oihw": w1, "w2_oihw": w2,
    }


# ---------------------------------- public forward -----------------------------------

def double_conv_forward(x_nchw, params, *, mxu_dtype=jnp.bfloat16, tile_rows=None):
    # x_nchw: (N, Cin, H, W) -> (N, Cout, H, W), matching the PyTorch DoubleConv.
    x = jnp.transpose(x_nchw, (0, 2, 3, 1))               # NCHW -> NHWC
    y = _double_conv_nhwc(x, params, mxu_dtype=mxu_dtype, tile_rows=tile_rows)
    return jnp.transpose(y, (0, 3, 1, 2))                 # NHWC -> NCHW


# ----------------------------- pure-JAX reference (check) ----------------------------

def _reference_double_conv(x_nchw, params):
    x = jnp.transpose(x_nchw, (0, 2, 3, 1))

    def block(x, w_oihw, s, b):
        w_hwio = jnp.transpose(w_oihw, (2, 3, 1, 0))
        y = jax.lax.conv_general_dilated(
            x, w_hwio, window_strides=(1, 1), padding="SAME",
            dimension_numbers=("NHWC", "HWIO", "NHWC"),
            precision=jax.lax.Precision.HIGHEST)
        return jnp.maximum(y * s + b, 0.0)

    x = block(x, params["w1_oihw"], params["s1"], params["b1"])
    x = block(x, params["w2_oihw"], params["s2"], params["b2"])
    return jnp.transpose(x, (0, 3, 1, 2))


if __name__ == "__main__":
    N, Cin, H, W = 2, 4, 16, 16
    Cout = 8

    key = jax.random.PRNGKey(0)
    kx, kp = jax.random.split(key)
    x = jax.random.normal(kx, (N, Cin, H, W), dtype=jnp.float32)
    params = init_double_conv_params(kp, Cin, Cout)

    ref = jax.block_until_ready(_reference_double_conv(x, params))

    # Exact-precision path (f32 MXU operands); exercises 2 row tiles (TH=8, T=2).
    out_f32 = jax.block_until_ready(
        double_conv_forward(x, params, mxu_dtype=jnp.float32))
    assert out_f32.shape == (N, Cout, H, W), out_f32.shape
    assert out_f32.dtype == jnp.float32
    assert bool(jnp.all(jnp.isfinite(out_f32)))
    assert bool(jnp.all(out_f32 >= 0.0))                   # final ReLU
    assert bool(jnp.allclose(out_f32, ref, atol=2e-2, rtol=2e-2)), (
        float(jnp.max(jnp.abs(out_f32 - ref))))

    # Default fast path: bf16 MXU operands, f32 accumulation + f32 BN/ReLU epilogue
    # (deliberate quantization of the conv1 activation -> looser tolerance).
    out_bf16 = jax.block_until_ready(double_conv_forward(x, params))
    assert out_bf16.shape == (N, Cout, H, W), out_bf16.shape
    assert out_bf16.dtype == jnp.float32
    assert bool(jnp.all(jnp.isfinite(out_bf16)))
    assert bool(jnp.all(out_bf16 >= 0.0))
    assert bool(jnp.allclose(out_bf16, ref, atol=1e-1, rtol=1e-1)), (
        float(jnp.max(jnp.abs(out_bf16 - ref))))

    print("KERNEL_OK")
</pallas_src>

<mosaic_0001>
module attributes {stable_mosaic.version = 11 : i64} {
  func.func @_double_conv_kernel(%arg0: i32, %arg1: i32, %arg2: memref<1x16x16x4xf32, #tpu.memory_space<vmem>>, %arg3: memref<9x4x8xf32, #tpu.memory_space<vmem>>, %arg4: memref<1x8xf32, #tpu.memory_space<vmem>>, %arg5: memref<1x8xf32, #tpu.memory_space<vmem>>, %arg6: memref<9x8x8xf32, #tpu.memory_space<vmem>>, %arg7: memref<1x8xf32, #tpu.memory_space<vmem>>, %arg8: memref<1x8xf32, #tpu.memory_space<vmem>>, %arg9: memref<1x8x16x8xf32, #tpu.memory_space<vmem>>, %arg10: memref<12x18x4xf32, #tpu.memory_space<vmem>>, %arg11: memref<10x18x8xf32, #tpu.memory_space<vmem>>) attributes {dimension_semantics = [#tpu.dimension_semantics<parallel>, #tpu.dimension_semantics<parallel>], iteration_bounds = array<i64: 2, 2>, scalar_prefetch = 0 : i64, scratch_operands = 2 : i64, tpu.core_type = #tpu.core_type<tc>, window_params = [{transform_indices = @transform_0, window_bounds = array<i64: 1, 16, 16, 4>}, {pipeline_mode = #tpu.pipeline_mode<synchronous>, transform_indices = @transform_1, window_bounds = array<i64: 9, 4, 8>}, {pipeline_mode = #tpu.pipeline_mode<synchronous>, transform_indices = @transform_2, window_bounds = array<i64: 1, 8>}, {pipeline_mode = #tpu.pipeline_mode<synchronous>, transform_indices = @transform_3, window_bounds = array<i64: 1, 8>}, {pipeline_mode = #tpu.pipeline_mode<synchronous>, transform_indices = @transform_4, window_bounds = array<i64: 9, 8, 8>}, {pipeline_mode = #tpu.pipeline_mode<synchronous>, transform_indices = @transform_5, window_bounds = array<i64: 1, 8>}, {pipeline_mode = #tpu.pipeline_mode<synchronous>, transform_indices = @transform_6, window_bounds = array<i64: 1, 8>}, {transform_indices = @transform_7, window_bounds = array<i64: 1, 8, 16, 8>}]} {
    %cst = arith.constant 0.000000e+00 : f32
    %0 = vector.broadcast %cst : f32 to vector<12x1x4xf32>
    %c0 = arith.constant 0 : index
    %c0_0 = arith.constant 0 : index
    %c0_1 = arith.constant 0 : index
    %1 = vector.load %arg10[%c0, %c0_0, %c0_1] : memref<12x18x4xf32, #tpu.memory_space<vmem>>, vector<12x1x4xf32>
    tpu.vector_store %arg10[%c0, %c0_0, %c0_1], %0 {strides = array<i32>} : memref<12x18x4xf32, #tpu.memory_space<vmem>>, vector<12x1x4xf32>,
    %cst_2 = arith.constant 0.000000e+00 : f32
    %2 = vector.broadcast %cst_2 : f32 to vector<12x1x4xf32>
    %c0_3 = arith.constant 0 : index
    %c17 = arith.constant 17 : index
    %c0_4 = arith.constant 0 : index
    %3 = vector.load %arg10[%c0_3, %c17, %c0_4] : memref<12x18x4xf32, #tpu.memory_space<vmem>>, vector<12x1x4xf32>
    tpu.vector_store %arg10[%c0_3, %c17, %c0_4], %2 {strides = array<i32>} : memref<12x18x4xf32, #tpu.memory_space<vmem>>, vector<12x1x4xf32>,
    %cst_5 = arith.constant 0.000000e+00 : f32
    %4 = vector.broadcast %cst_5 : f32 to vector<2x16x4xf32>
    %c0_i32 = arith.constant 0 : i32
    %5 = arith.cmpi eq, %arg1, %c0_i32 : i32
    %6 = arith.extui %5 : i1 to i32
    %c0_i32_6 = arith.constant 0 : i32
    %7 = arith.cmpi ne, %6, %c0_i32_6 : i32
    scf.if %7 {
      %c0_156 = arith.constant 0 : index
      %c1_157 = arith.constant 1 : index
      %c0_158 = arith.constant 0 : index
      %150 = vector.load %arg10[%c0_156, %c1_157, %c0_158] : memref<12x18x4xf32, #tpu.memory_space<vmem>>, vector<2x16x4xf32>
      tpu.vector_store %arg10[%c0_156, %c1_157, %c0_158], %4 {strides = array<i32>} : memref<12x18x4xf32, #tpu.memory_space<vmem>>, vector<2x16x4xf32>,
      %c0_159 = arith.constant 0 : index
      %c0_160 = arith.constant 0 : index
      %c0_161 = arith.constant 0 : index
      %c0_162 = arith.constant 0 : index
      %151 = vector.load %arg2[%c0_159, %c0_160, %c0_161, %c0_162] : memref<1x16x16x4xf32, #tpu.memory_space<vmem>>, vector<1x10x16x4xf32>
      %152 = vector.shape_cast %151 : vector<1x10x16x4xf32> to vector<10x16x4xf32>
      %c2_163 = arith.constant 2 : index
      %c1_164 = arith.constant 1 : index
      %c0_165 = arith.constant 0 : index
      %153 = vector.load %arg10[%c2_163, %c1_164, %c0_165] : memref<12x18x4xf32, #tpu.memory_space<vmem>>, vector<10x16x4xf32>
      tpu.vector_store %arg10[%c2_163, %c1_164, %c0_165], %152 {strides = array<i32>} : memref<12x18x4xf32, #tpu.memory_space<vmem>>, vector<10x16x4xf32>,
    } else {
    }
    %c1_i32 = arith.constant 1 : i32
    %8 = arith.cmpi eq, %arg1, %c1_i32 : i32
    %9 = arith.extui %8 : i1 to i32
    %c0_i32_7 = arith.constant 0 : i32
    %10 = arith.cmpi ne, %9, %c0_i32_7 : i32
    scf.if %10 {
      %c8_i32 = arith.constant 8 : i32
      %150 = arith.muli %arg1, %c8_i32 : i32
      %c2_i32 = arith.constant 2 : i32
      %151 = arith.subi %150, %c2_i32 : i32
      %c0_156 = arith.constant 0 : index
      %152 = arith.index_cast %151 : i32 to index
      %c0_157 = arith.constant 0 : index
      %c0_158 = arith.constant 0 : index
      %153 = vector.load %arg2[%c0_156, %152, %c0_157, %c0_158] : memref<1x16x16x4xf32, #tpu.memory_space<vmem>>, vector<1x10x16x4xf32>
      %154 = vector.shape_cast %153 : vector<1x10x16x4xf32> to vector<10x16x4xf32>
      %c0_159 = arith.constant 0 : index
      %c1_160 = arith.constant 1 : index
      %c0_161 = arith.constant 0 : index
      %155 = vector.load %arg10[%c0_159, %c1_160, %c0_161] : memref<12x18x4xf32, #tpu.memory_space<vmem>>, vector<10x16x4xf32>
      tpu.vector_store %arg10[%c0_159, %c1_160, %c0_161], %154 {strides = array<i32>} : memref<12x18x4xf32, #tpu.memory_space<vmem>>, vector<10x16x4xf32>,
      %c10 = arith.constant 10 : index
      %c1_162 = arith.constant 1 : index
      %c0_163 = arith.constant 0 : index
      %156 = vector.load %arg10[%c10, %c1_162, %c0_163] : memref<12x18x4xf32, #tpu.memory_space<vmem>>, vector<2x16x4xf32>
      tpu.vector_store %arg10[%c10, %c1_162, %c0_163], %4 {strides = array<i32>} : memref<12x18x4xf32, #tpu.memory_space<vmem>>, vector<2x16x4xf32>,
    } else {
    }
    %c0_8 = arith.constant 0 : index
    %c0_9 = arith.constant 0 : index
    %c0_10 = arith.constant 0 : index
    %11 = vector.load %arg10[%c0_8, %c0_9, %c0_10] : memref<12x18x4xf32, #tpu.memory_space<vmem>>, vector<10x16x4xf32>
    %12 = vector.shape_cast %11 : vector<10x16x4xf32> to vector<160x4xf32>
    %c0_11 = arith.constant 0 : index
    %c0_12 = arith.constant 0 : index
    %c0_13 = arith.constant 0 : index
    %13 = vector.load %arg3[%c0_11, %c0_12, %c0_13] : memref<9x4x8xf32, #tpu.memory_space<vmem>>, vector<1x4x8xf32>
    %14 = vector.shape_cast %13 : vector<1x4x8xf32> to vector<4x8xf32>
    %cst_14 = arith.constant dense<0.000000e+00> : vector<160x8xf32>
    %15 = tpu.matmul %12, %14, %cst_14 {dimension_numbers = #tpu.dot_dimension_numbers<[1], [0], [0], [1], [0, 0, 1, 1], [], []>} : vector<160x4xf32>, vector<4x8xf32>, vector<160x8xf32> -> vector<160x8xf32>
    %c0_15 = arith.constant 0 : index
    %c1 = arith.constant 1 : index
    %c0_16 = arith.constant 0 : index
    %16 = vector.load %arg10[%c0_15, %c1, %c0_16] : memref<12x18x4xf32, #tpu.memory_space<vmem>>, vector<10x16x4xf32>
    %17 = vector.shape_cast %16 : vector<10x16x4xf32> to vector<160x4xf32>
    %c1_17 = arith.constant 1 : index
    %c0_18 = arith.constant 0 : index
    %c0_19 = arith.constant 0 : index
    %18 = vector.load %arg3[%c1_17, %c0_18, %c0_19] : memref<9x4x8xf32, #tpu.memory_space<vmem>>, vector<1x4x8xf32>
    %19 = vector.shape_cast %18 : vector<1x4x8xf32> to vector<4x8xf32>
    %cst_20 = arith.constant dense<0.000000e+00> : vector<160x8xf32>
    %20 = tpu.matmul %17, %19, %cst_20 {dimension_numbers = #tpu.dot_dimension_numbers<[1], [0], [0], [1], [0, 0, 1, 1], [], []>} : vector<160x4xf32>, vector<4x8xf32>, vector<160x8xf32> -> vector<160x8xf32>
    %21 = arith.addf %15, %20 : vector<160x8xf32>
    %c0_21 = arith.constant 0 : index
    %c2 = arith.constant 2 : index
    %c0_22 = arith.constant 0 : index
    %22 = vector.load %arg10[%c0_21, %c2, %c0_22] : memref<12x18x4xf32, #tpu.memory_space<vmem>>, vector<10x16x4xf32>
    %23 = vector.shape_cast %22 : vector<10x16x4xf32> to vector<160x4xf32>
    %c2_23 = arith.constant 2 : index
    %c0_24 = arith.constant 0 : index
    %c0_25 = arith.constant 0 : index
    %24 = vector.load %arg3[%c2_23, %c0_24, %c0_25] : memref<9x4x8xf32, #tpu.memory_space<vmem>>, vector<1x4x8xf32>
    %25 = vector.shape_cast %24 : vector<1x4x8xf32> to vector<4x8xf32>
    %cst_26 = arith.constant dense<0.000000e+00> : vector<160x8xf32>
    %26 = tpu.matmul %23, %25, %cst_26 {dimension_numbers = #tpu.dot_dimension_numbers<[1], [0], [0], [1], [0, 0, 1, 1], [], []>} : vector<160x4xf32>, vector<4x8xf32>, vector<160x8xf32> -> vector<160x8xf32>
    %27 = arith.addf %21, %26 : vector<160x8xf32>
    %c1_27 = arith.constant 1 : index
    %c0_28 = arith.constant 0 : index
    %c0_29 = arith.constant 0 : index
    %28 = vector.load %arg10[%c1_27, %c0_28, %c0_29] : memref<12x18x4xf32, #tpu.memory_space<vmem>>, vector<10x16x4xf32>
    %29 = vector.shape_cast %28 : vector<10x16x4xf32> to vector<160x4xf32>
    %c3 = arith.constant 3 : index
    %c0_30 = arith.constant 0 : index
    %c0_31 = arith.constant 0 : index
    %30 = vector.load %arg3[%c3, %c0_30, %c0_31] : memref<9x4x8xf32, #tpu.memory_space<vmem>>, vector<1x4x8xf32>
    %31 = vector.shape_cast %30 : vector<1x4x8xf32> to vector<4x8xf32>
    %cst_32 = arith.constant dense<0.000000e+00> : vector<160x8xf32>
    %32 = tpu.matmul %29, %31, %cst_32 {dimension_numbers = #tpu.dot_dimension_numbers<[1], [0], [0], [1], [0, 0, 1, 1], [], []>} : vector<160x4xf32>, vector<4x8xf32>, vector<160x8xf32> -> vector<160x8xf32>
    %33 = arith.addf %27, %32 : vector<160x8xf32>
    %c1_33 = arith.constant 1 : index
    %c1_34 = arith.constant 1 : index
    %c0_35 = arith.constant 0 : index
    %34 = vector.load %arg10[%c1_33, %c1_34, %c0_35] : memref<12x18x4xf32, #tpu.memory_space<vmem>>, vector<10x16x4xf32>
    %35 = vector.shape_cast %34 : vector<10x16x4xf32> to vector<160x4xf32>
    %c4 = arith.constant 4 : index
    %c0_36 = arith.constant 0 : index
    %c0_37 = arith.constant 0 : index
    %36 = vector.load %arg3[%c4, %c0_36, %c0_37] : memref<9x4x8xf32, #tpu.memory_space<vmem>>, vector<1x4x8xf32>
    %37 = vector.shape_cast %36 : vector<1x4x8xf32> to vector<4x8xf32>
    %cst_38 = arith.constant dense<0.000000e+00> : vector<160x8xf32>
    %38 = tpu.matmul %35, %37, %cst_38 {dimension_numbers = #tpu.dot_dimension_numbers<[1], [0], [0], [1], [0, 0, 1, 1], [], []>} : vector<160x4xf32>, vector<4x8xf32>, vector<160x8xf32> -> vector<160x8xf32>
    %39 = arith.addf %33, %38 : vector<160x8xf32>
    %c1_39 = arith.constant 1 : index
    %c2_40 = arith.constant 2 : index
    %c0_41 = arith.constant 0 : index
    %40 = vector.load %arg10[%c1_39, %c2_40, %c0_41] : memref<12x18x4xf32, #tpu.memory_space<vmem>>, vector<10x16x4xf32>
    %41 = vector.shape_cast %40 : vector<10x16x4xf32> to vector<160x4xf32>
    %c5 = arith.constant 5 : index
    %c0_42 = arith.constant 0 : index
    %c0_43 = arith.constant 0 : index
    %42 = vector.load %arg3[%c5, %c0_42, %c0_43] : memref<9x4x8xf32, #tpu.memory_space<vmem>>, vector<1x4x8xf32>
    %43 = vector.shape_cast %42 : vector<1x4x8xf32> to vector<4x8xf32>
    %cst_44 = arith.constant dense<0.000000e+00> : vector<160x8xf32>
    %44 = tpu.matmul %41, %43, %cst_44 {dimension_numbers = #tpu.dot_dimension_numbers<[1], [0], [0], [1], [0, 0, 1, 1], [], []>} : vector<160x4xf32>, vector<4x8xf32>, vector<160x8xf32> -> vector<160x8xf32>
    %45 = arith.addf %39, %44 : vector<160x8xf32>
    %c2_45 = arith.constant 2 : index
    %c0_46 = arith.constant 0 : index
    %c0_47 = arith.constant 0 : index
    %46 = vector.load %arg10[%c2_45, %c0_46, %c0_47] : memref<12x18x4xf32, #tpu.memory_space<vmem>>, vector<10x16x4xf32>
    %47 = vector.shape_cast %46 : vector<10x16x4xf32> to vector<160x4xf32>
    %c6 = arith.constant 6 : index
    %c0_48 = arith.constant 0 : index
    %c0_49 = arith.constant 0 : index
    %48 = vector.load %arg3[%c6, %c0_48, %c0_49] : memref<9x4x8xf32, #tpu.memory_space<vmem>>, vector<1x4x8xf32>
    %49 = vector.shape_cast %48 : vector<1x4x8xf32> to vector<4x8xf32>
    %cst_50 = arith.constant dense<0.000000e+00> : vector<160x8xf32>
    %50 = tpu.matmul %47, %49, %cst_50 {dimension_numbers = #tpu.dot_dimension_numbers<[1], [0], [0], [1], [0, 0, 1, 1], [], []>} : vector<160x4xf32>, vector<4x8xf32>, vector<160x8xf32> -> vector<160x8xf32>
    %51 = arith.addf %45, %50 : vector<160x8xf32>
    %c2_51 = arith.constant 2 : index
    %c1_52 = arith.constant 1 : index
    %c0_53 = arith.constant 0 : index
    %52 = vector.load %arg10[%c2_51, %c1_52, %c0_53] : memref<12x18x4xf32, #tpu.memory_space<vmem>>, vector<10x16x4xf32>
    %53 = vector.shape_cast %52 : vector<10x16x4xf32> to vector<160x4xf32>
    %c7 = arith.constant 7 : index
    %c0_54 = arith.constant 0 : index
    %c0_55 = arith.constant 0 : index
    %54 = vector.load %arg3[%c7, %c0_54, %c0_55] : memref<9x4x8xf32, #tpu.memory_space<vmem>>, vector<1x4x8xf32>
    %55 = vector.shape_cast %54 : vector<1x4x8xf32> to vector<4x8xf32>
    %cst_56 = arith.constant dense<0.000000e+00> : vector<160x8xf32>
    %56 = tpu.matmul %53, %55, %cst_56 {dimension_numbers = #tpu.dot_dimension_numbers<[1], [0], [0], [1], [0, 0, 1, 1], [], []>} : vector<160x4xf32>, vector<4x8xf32>, vector<160x8xf32> -> vector<160x8xf32>
    %57 = arith.addf %51, %56 : vector<160x8xf32>
    %c2_57 = arith.constant 2 : index
    %c2_58 = arith.constant 2 : index
    %c0_59 = arith.constant 0 : index
    %58 = vector.load %arg10[%c2_57, %c2_58, %c0_59] : memref<12x18x4xf32, #tpu.memory_space<vmem>>, vector<10x16x4xf32>
    %59 = vector.shape_cast %58 : vector<10x16x4xf32> to vector<160x4xf32>
    %c8 = arith.constant 8 : index
    %c0_60 = arith.constant 0 : index
    %c0_61 = arith.constant 0 : index
    %60 = vector.load %arg3[%c8, %c0_60, %c0_61] : memref<9x4x8xf32, #tpu.memory_space<vmem>>, vector<1x4x8xf32>
    %61 = vector.shape_cast %60 : vector<1x4x8xf32> to vector<4x8xf32>
    %cst_62 = arith.constant dense<0.000000e+00> : vector<160x8xf32>
    %62 = tpu.matmul %59, %61, %cst_62 {dimension_numbers = #tpu.dot_dimension_numbers<[1], [0], [0], [1], [0, 0, 1, 1], [], []>} : vector<160x4xf32>, vector<4x8xf32>, vector<160x8xf32> -> vector<160x8xf32>
    %63 = arith.addf %57, %62 : vector<160x8xf32>
    %c0_63 = arith.constant 0 : index
    %c0_64 = arith.constant 0 : index
    %64 = vector.load %arg4[%c0_63, %c0_64] : memref<1x8xf32, #tpu.memory_space<vmem>>, vector<1x8xf32>
    %65 = vector.broadcast %64 : vector<1x8xf32> to vector<160x8xf32>
    %66 = arith.mulf %63, %65 : vector<160x8xf32>
    %c0_65 = arith.constant 0 : index
    %c0_66 = arith.constant 0 : index
    %67 = vector.load %arg5[%c0_65, %c0_66] : memref<1x8xf32, #tpu.memory_space<vmem>>, vector<1x8xf32>
    %68 = vector.broadcast %67 : vector<1x8xf32> to vector<160x8xf32>
    %69 = arith.addf %66, %68 : vector<160x8xf32>
    %cst_67 = arith.constant 0.000000e+00 : f32
    %70 = vector.broadcast %cst_67 : f32 to vector<160x8xf32>
    %71 = arith.maximumf %69, %70 : vector<160x8xf32>
    %cst_68 = arith.constant 0.000000e+00 : f32
    %72 = vector.broadcast %cst_68 : f32 to vector<10x1x8xf32>
    %c0_69 = arith.constant 0 : index
    %c0_70 = arith.constant 0 : index
    %c0_71 = arith.constant 0 : index
    %73 = vector.load %arg11[%c0_69, %c0_70, %c0_71] : memref<10x18x8xf32, #tpu.memory_space<vmem>>, vector<10x1x8xf32>
    tpu.vector_store %arg11[%c0_69, %c0_70, %c0_71], %72 {strides = array<i32>} : memref<10x18x8xf32, #tpu.memory_space<vmem>>, vector<10x1x8xf32>,
    %cst_72 = arith.constant 0.000000e+00 : f32
    %74 = vector.broadcast %cst_72 : f32 to vector<10x1x8xf32>
    %c0_73 = arith.constant 0 : index
    %c17_74 = arith.constant 17 : index
    %c0_75 = arith.constant 0 : index
    %75 = vector.load %arg11[%c0_73, %c17_74, %c0_75] : memref<10x18x8xf32, #tpu.memory_space<vmem>>, vector<10x1x8xf32>
    tpu.vector_store %arg11[%c0_73, %c17_74, %c0_75], %74 {strides = array<i32>} : memref<10x18x8xf32, #tpu.memory_space<vmem>>, vector<10x1x8xf32>,
    %76 = vector.shape_cast %71 : vector<160x8xf32> to vector<10x16x8xf32>
    %c0_76 = arith.constant 0 : index
    %c1_77 = arith.constant 1 : index
    %c0_78 = arith.constant 0 : index
    %77 = vector.load %arg11[%c0_76, %c1_77, %c0_78] : memref<10x18x8xf32, #tpu.memory_space<vmem>>, vector<10x16x8xf32>
    tpu.vector_store %arg11[%c0_76, %c1_77, %c0_78], %76 {strides = array<i32>} : memref<10x18x8xf32, #tpu.memory_space<vmem>>, vector<10x16x8xf32>,
    %cst_79 = arith.constant 0.000000e+00 : f32
    %78 = vector.broadcast %cst_79 : f32 to vector<1x18x8xf32>
    %c0_i32_80 = arith.constant 0 : i32
    %79 = arith.cmpi eq, %arg1, %c0_i32_80 : i32
    %80 = arith.extui %79 : i1 to i32
    %c0_i32_81 = arith.constant 0 : i32
    %81 = arith.cmpi ne, %80, %c0_i32_81 : i32
    scf.if %81 {
      %c0_156 = arith.constant 0 : index
      %c0_157 = arith.constant 0 : index
      %c0_158 = arith.constant 0 : index
      %150 = vector.load %arg11[%c0_156, %c0_157, %c0_158] : memref<10x18x8xf32, #tpu.memory_space<vmem>>, vector<1x18x8xf32>
      tpu.vector_store %arg11[%c0_156, %c0_157, %c0_158], %78 {strides = array<i32>} : memref<10x18x8xf32, #tpu.memory_space<vmem>>, vector<1x18x8xf32>,
    } else {
    }
    %c1_i32_82 = arith.constant 1 : i32
    %82 = arith.cmpi eq, %arg1, %c1_i32_82 : i32
    %83 = arith.extui %82 : i1 to i32
    %c0_i32_83 = arith.constant 0 : i32
    %84 = arith.cmpi ne, %83, %c0_i32_83 : i32
    scf.if %84 {
      %c9 = arith.constant 9 : index
      %c0_156 = arith.constant 0 : index
      %c0_157 = arith.constant 0 : index
      %150 = vector.load %arg11[%c9, %c0_156, %c0_157] : memref<10x18x8xf32, #tpu.memory_space<vmem>>, vector<1x18x8xf32>
      tpu.vector_store %arg11[%c9, %c0_156, %c0_157], %78 {strides = array<i32>} : memref<10x18x8xf32, #tpu.memory_space<vmem>>, vector<1x18x8xf32>,
    } else {
    }
    %c0_84 = arith.constant 0 : index
    %c0_85 = arith.constant 0 : index
    %c0_86 = arith.constant 0 : index
    %85 = vector.load %arg11[%c0_84, %c0_85, %c0_86] : memref<10x18x8xf32, #tpu.memory_space<vmem>>, vector<8x16x8xf32>
    %86 = vector.shape_cast %85 : vector<8x16x8xf32> to vector<128x8xf32>
    %c0_87 = arith.constant 0 : index
    %c0_88 = arith.constant 0 : index
    %c0_89 = arith.constant 0 : index
    %87 = vector.load %arg6[%c0_87, %c0_88, %c0_89] : memref<9x8x8xf32, #tpu.memory_space<vmem>>, vector<1x8x8xf32>
    %88 = vector.shape_cast %87 : vector<1x8x8xf32> to vector<8x8xf32>
    %cst_90 = arith.constant dense<0.000000e+00> : vector<128x8xf32>
    %89 = tpu.matmul %86, %88, %cst_90 {dimension_numbers = #tpu.dot_dimension_numbers<[1], [0], [0], [1], [0, 0, 1, 1], [], []>} : vector<128x8xf32>, vector<8x8xf32>, vector<128x8xf32> -> vector<128x8xf32>
    %c0_91 = arith.constant 0 : index
    %c1_92 = arith.constant 1 : index
    %c0_93 = arith.constant 0 : index
    %90 = vector.load %arg11[%c0_91, %c1_92, %c0_93] : memref<10x18x8xf32, #tpu.memory_space<vmem>>, vector<8x16x8xf32>
    %91 = vector.shape_cast %90 : vector<8x16x8xf32> to vector<128x8xf32>
    %c1_94 = arith.constant 1 : index
    %c0_95 = arith.constant 0 : index
    %c0_96 = arith.constant 0 : index
    %92 = vector.load %arg6[%c1_94, %c0_95, %c0_96] : memref<9x8x8xf32, #tpu.memory_space<vmem>>, vector<1x8x8xf32>
    %93 = vector.shape_cast %92 : vector<1x8x8xf32> to vector<8x8xf32>
    %cst_97 = arith.constant dense<0.000000e+00> : vector<128x8xf32>
    %94 = tpu.matmul %91, %93, %cst_97 {dimension_numbers = #tpu.dot_dimension_numbers<[1], [0], [0], [1], [0, 0, 1, 1], [], []>} : vector<128x8xf32>, vector<8x8xf32>, vector<128x8xf32> -> vector<128x8xf32>
    %95 = arith.addf %89, %94 : vector<128x8xf32>
    %c0_98 = arith.constant 0 : index
    %c2_99 = arith.constant 2 : index
    %c0_100 = arith.constant 0 : index
    %96 = vector.load %arg11[%c0_98, %c2_99, %c0_100] : memref<10x18x8xf32, #tpu.memory_space<vmem>>, vector<8x16x8xf32>
    %97 = vector.shape_cast %96 : vector<8x16x8xf32> to vector<128x8xf32>
    %c2_101 = arith.constant 2 : index
    %c0_102 = arith.constant 0 : index
    %c0_103 = arith.constant 0 : index
    %98 = vector.load %arg6[%c2_101, %c0_102, %c0_103] : memref<9x8x8xf32, #tpu.memory_space<vmem>>, vector<1x8x8xf32>
    %99 = vector.shape_cast %98 : vector<1x8x8xf32> to vector<8x8xf32>
    %cst_104 = arith.constant dense<0.000000e+00> : vector<128x8xf32>
    %100 = tpu.matmul %97, %99, %cst_104 {dimension_numbers = #tpu.dot_dimension_numbers<[1], [0], [0], [1], [0, 0, 1, 1], [], []>} : vector<128x8xf32>, vector<8x8xf32>, vector<128x8xf32> -> vector<128x8xf32>
    %101 = arith.addf %95, %100 : vector<128x8xf32>
    %c1_105 = arith.constant 1 : index
    %c0_106 = arith.constant 0 : index
    %c0_107 = arith.constant 0 : index
    %102 = vector.load %arg11[%c1_105, %c0_106, %c0_107] : memref<10x18x8xf32, #tpu.memory_space<vmem>>, vector<8x16x8xf32>
    %103 = vector.shape_cast %102 : vector<8x16x8xf32> to vector<128x8xf32>
    %c3_108 = arith.constant 3 : index
    %c0_109 = arith.constant 0 : index
    %c0_110 = arith.constant 0 : index
    %104 = vector.load %arg6[%c3_108, %c0_109, %c0_110] : memref<9x8x8xf32, #tpu.memory_space<vmem>>, vector<1x8x8xf32>
    %105 = vector.shape_cast %104 : vector<1x8x8xf32> to vector<8x8xf32>
    %cst_111 = arith.constant dense<0.000000e+00> : vector<128x8xf32>
    %106 = tpu.matmul %103, %105, %cst_111 {dimension_numbers = #tpu.dot_dimension_numbers<[1], [0], [0], [1], [0, 0, 1, 1], [], []>} : vector<128x8xf32>, vector<8x8xf32>, vector<128x8xf32> -> vector<128x8xf32>
    %107 = arith.addf %101, %106 : vector<128x8xf32>
    %c1_112 = arith.constant 1 : index
    %c1_113 = arith.constant 1 : index
    %c0_114 = arith.constant 0 : index
    %108 = vector.load %arg11[%c1_112, %c1_113, %c0_114] : memref<10x18x8xf32, #tpu.memory_space<vmem>>, vector<8x16x8xf32>
    %109 = vector.shape_cast %108 : vector<8x16x8xf32> to vector<128x8xf32>
    %c4_115 = arith.constant 4 : index
    %c0_116 = arith.constant 0 : index
    %c0_117 = arith.constant 0 : index
    %110 = vector.load %arg6[%c4_115, %c0_116, %c0_117] : memref<9x8x8xf32, #tpu.memory_space<vmem>>, vector<1x8x8xf32>
    %111 = vector.shape_cast %110 : vector<1x8x8xf32> to vector<8x8xf32>
    %cst_118 = arith.constant dense<0.000000e+00> : vector<128x8xf32>
    %112 = tpu.matmul %109, %111, %cst_118 {dimension_numbers = #tpu.dot_dimension_numbers<[1], [0], [0], [1], [0, 0, 1, 1], [], []>} : vector<128x8xf32>, vector<8x8xf32>, vector<128x8xf32> -> vector<128x8xf32>
    %113 = arith.addf %107, %112 : vector<128x8xf32>
    %c1_119 = arith.constant 1 : index
    %c2_120 = arith.constant 2 : index
    %c0_121 = arith.constant 0 : index
    %114 = vector.load %arg11[%c1_119, %c2_120, %c0_121] : memref<10x18x8xf32, #tpu.memory_space<vmem>>, vector<8x16x8xf32>
    %115 = vector.shape_cast %114 : vector<8x16x8xf32> to vector<128x8xf32>
    %c5_122 = arith.constant 5 : index
    %c0_123 = arith.constant 0 : index
    %c0_124 = arith.constant 0 : index
    %116 = vector.load %arg6[%c5_122, %c0_123, %c0_124] : memref<9x8x8xf32, #tpu.memory_space<vmem>>, vector<1x8x8xf32>
    %117 = vector.shape_cast %116 : vector<1x8x8xf32> to vector<8x8xf32>
    %cst_125 = arith.constant dense<0.000000e+00> : vector<128x8xf32>
    %118 = tpu.matmul %115, %117, %cst_125 {dimension_numbers = #tpu.dot_dimension_numbers<[1], [0], [0], [1], [0, 0, 1, 1], [], []>} : vector<128x8xf32>, vector<8x8xf32>, vector<128x8xf32> -> vector<128x8xf32>
    %119 = arith.addf %113, %118 : vector<128x8xf32>
    %c2_126 = arith.constant 2 : index
    %c0_127 = arith.constant 0 : index
    %c0_128 = arith.constant 0 : index
    %120 = vector.load %arg11[%c2_126, %c0_127, %c0_128] : memref<10x18x8xf32, #tpu.memory_space<vmem>>, vector<8x16x8xf32>
    %121 = vector.shape_cast %120 : vector<8x16x8xf32> to vector<128x8xf32>
    %c6_129 = arith.constant 6 : index
    %c0_130 = arith.constant 0 : index
    %c0_131 = arith.constant 0 : index
    %122 = vector.load %arg6[%c6_129, %c0_130, %c0_131] : memref<9x8x8xf32, #tpu.memory_space<vmem>>, vector<1x8x8xf32>
    %123 = vector.shape_cast %122 : vector<1x8x8xf32> to vector<8x8xf32>
    %cst_132 = arith.constant dense<0.000000e+00> : vector<128x8xf32>
    %124 = tpu.matmul %121, %123, %cst_132 {dimension_numbers = #tpu.dot_dimension_numbers<[1], [0], [0], [1], [0, 0, 1, 1], [], []>} : vector<128x8xf32>, vector<8x8xf32>, vector<128x8xf32> -> vector<128x8xf32>
    %125 = arith.addf %119, %124 : vector<128x8xf32>
    %c2_133 = arith.constant 2 : index
    %c1_134 = arith.constant 1 : index
    %c0_135 = arith.constant 0 : index
    %126 = vector.load %arg11[%c2_133, %c1_134, %c0_135] : memref<10x18x8xf32, #tpu.memory_space<vmem>>, vector<8x16x8xf32>
    %127 = vector.shape_cast %126 : vector<8x16x8xf32> to vector<128x8xf32>
    %c7_136 = arith.constant 7 : index
    %c0_137 = arith.constant 0 : index
    %c0_138 = arith.constant 0 : index
    %128 = vector.load %arg6[%c7_136, %c0_137, %c0_138] : memref<9x8x8xf32, #tpu.memory_space<vmem>>, vector<1x8x8xf32>
    %129 = vector.shape_cast %128 : vector<1x8x8xf32> to vector<8x8xf32>
    %cst_139 = arith.constant dense<0.000000e+00> : vector<128x8xf32>
    %130 = tpu.matmul %127, %129, %cst_139 {dimension_numbers = #tpu.dot_dimension_numbers<[1], [0], [0], [1], [0, 0, 1, 1], [], []>} : vector<128x8xf32>, vector<8x8xf32>, vector<128x8xf32> -> vector<128x8xf32>
    %131 = arith.addf %125, %130 : vector<128x8xf32>
    %c2_140 = arith.constant 2 : index
    %c2_141 = arith.constant 2 : index
    %c0_142 = arith.constant 0 : index
    %132 = vector.load %arg11[%c2_140, %c2_141, %c0_142] : memref<10x18x8xf32, #tpu.memory_space<vmem>>, vector<8x16x8xf32>
    %133 = vector.shape_cast %132 : vector<8x16x8xf32> to vector<128x8xf32>
    %c8_143 = arith.constant 8 : index
    %c0_144 = arith.constant 0 : index
    %c0_145 = arith.constant 0 : index
    %134 = vector.load %arg6[%c8_143, %c0_144, %c0_145] : memref<9x8x8xf32, #tpu.memory_space<vmem>>, vector<1x8x8xf32>
    %135 = vector.shape_cast %134 : vector<1x8x8xf32> to vector<8x8xf32>
    %cst_146 = arith.constant dense<0.000000e+00> : vector<128x8xf32>
    %136 = tpu.matmul %133, %135, %cst_146 {dimension_numbers = #tpu.dot_dimension_numbers<[1], [0], [0], [1], [0, 0, 1, 1], [], []>} : vector<128x8xf32>, vector<8x8xf32>, vector<128x8xf32> -> vector<128x8xf32>
    %137 = arith.addf %131, %136 : vector<128x8xf32>
    %c0_147 = arith.constant 0 : index
    %c0_148 = arith.constant 0 : index
    %138 = vector.load %arg7[%c0_147, %c0_148] : memref<1x8xf32, #tpu.memory_space<vmem>>, vector<1x8xf32>
    %139 = vector.broadcast %138 : vector<1x8xf32> to vector<128x8xf32>
    %140 = arith.mulf %137, %139 : vector<128x8xf32>
    %c0_149 = arith.constant 0 : index
    %c0_150 = arith.constant 0 : index
    %141 = vector.load %arg8[%c0_149, %c0_150] : memref<1x8xf32, #tpu.memory_space<vmem>>, vector<1x8xf32>
    %142 = vector.broadcast %141 : vector<1x8xf32> to vector<128x8xf32>
    %143 = arith.addf %140, %142 : vector<128x8xf32>
    %cst_151 = arith.constant 0.000000e+00 : f32
    %144 = vector.broadcast %cst_151 : f32 to vector<128x8xf32>
    %145 = arith.maximumf %143, %144 : vector<128x8xf32>
    %146 = vector.shape_cast %145 : vector<128x8xf32> to vector<8x16x8xf32>
    %c0_152 = arith.constant 0 : index
    %c0_153 = arith.constant 0 : index
    %c0_154 = arith.constant 0 : index
    %c0_155 = arith.constant 0 : index
    %147 = vector.load %arg9[%c0_152, %c0_153, %c0_154, %c0_155] : memref<1x8x16x8xf32, #tpu.memory_space<vmem>>, vector<1x8x16x8xf32>
    %148 = vector.shape_cast %147 : vector<1x8x16x8xf32> to vector<8x16x8xf32>
    %149 = vector.shape_cast %146 : vector<8x16x8xf32> to vector<1x8x16x8xf32>
    tpu.vector_store %arg9[%c0_152, %c0_153, %c0_154, %c0_155], %149 {strides = array<i32>} : memref<1x8x16x8xf32, #tpu.memory_space<vmem>>, vector<1x8x16x8xf32>,
    return
  }
  func.func @transform_0(%arg0: i32, %arg1: i32) -> (i32, i32, i32, i32) {
    %c0_i32 = arith.constant 0 : i32
    %c0_i32_0 = arith.constant 0 : i32
    %c0_i32_1 = arith.constant 0 : i32
    %c0_i32_2 = arith.constant 0 : i32
    return %arg0, %c0_i32, %c0_i32_0, %c0_i32_1 : i32, i32, i32, i32
  }
  func.func @transform_1(%arg0: i32, %arg1: i32) -> (i32, i32, i32) {
    %c0_i32 = arith.constant 0 : i32
    %c0_i32_0 = arith.constant 0 : i32
    %c0_i32_1 = arith.constant 0 : i32
    %c0_i32_2 = arith.constant 0 : i32
    return %c0_i32, %c0_i32_0, %c0_i32_1 : i32, i32, i32
  }
  func.func @transform_2(%arg0: i32, %arg1: i32) -> (i32, i32) {
    %c0_i32 = arith.constant 0 : i32
    %c0_i32_0 = arith.constant 0 : i32
    %c0_i32_1 = arith.constant 0 : i32
    return %c0_i32, %c0_i32_0 : i32, i32
  }
  func.func @transform_3(%arg0: i32, %arg1: i32) -> (i32, i32) {
    %c0_i32 = arith.constant 0 : i32
    %c0_i32_0 = arith.constant 0 : i32
    %c0_i32_1 = arith.constant 0 : i32
    return %c0_i32, %c0_i32_0 : i32, i32
  }
  func.func @transform_4(%arg0: i32, %arg1: i32) -> (i32, i32, i32) {
    %c0_i32 = arith.constant 0 : i32
    %c0_i32_0 = arith.constant 0 : i32
    %c0_i32_1 = arith.constant 0 : i32
    %c0_i32_2 = arith.constant 0 : i32
    return %c0_i32, %c0_i32_0, %c0_i32_1 : i32, i32, i32
  }
  func.func @transform_5(%arg0: i32, %arg1: i32) -> (i32, i32) {
    %c0_i32 = arith.constant 0 : i32
    %c0_i32_0 = arith.constant 0 : i32
    %c0_i32_1 = arith.constant 0 : i32
    return %c0_i32, %c0_i32_0 : i32, i32
  }
  func.func @transform_6(%arg0: i32, %arg1: i32) -> (i32, i32) {
    %c0_i32 = arith.constant 0 : i32
    %c0_i32_0 = arith.constant 0 : i32
    %c0_i32_1 = arith.constant 0 : i32
    return %c0_i32, %c0_i32_0 : i32, i32
  }
  func.func @transform_7(%arg0: i32, %arg1: i32) -> (i32, i32, i32, i32) {
    %c0_i32 = arith.constant 0 : i32
    %c0_i32_0 = arith.constant 0 : i32
    %c0_i32_1 = arith.constant 0 : i32
    return %arg0, %arg1, %c0_i32, %c0_i32_0 : i32, i32, i32, i32
  }
}

</mosaic_0001>

<llo_original>
// kernel: tpu_custom_call.1
$region0: #{tpu_custom_call.1}
  #allocation0 [shape = 'u32[]', space=smem, size = 0x4, offset = 0x4, fixed_abs, tag = 'smem constant byte address 0x4 - core index']
  #allocation1 [shape = 'u32[144,128]{1,0:T(1,128)}', space=vmem, size = 0x12000, scoped, tag = 'internal scratch']
  #allocation2 [shape = 'f32[12,18,4]{2,1,0:T(8,128)}', space=vmem, size = 0x24000, scoped, tag = 'scratch operand']
  #allocation3 [shape = 'f32[10,18,8]{2,1,0:T(8,128)}', space=vmem, size = 0x1e000, scoped, tag = 'scratch operand']
  %s0 = inlined_call_operand.vmem [shape: f32[2,16,16,4], index: 0, kind: input, shape index: {}]
  %s1 = inlined_call_operand.vmem [shape: f32[9,4,8], index: 1, kind: input, shape index: {}]
  %s2 = inlined_call_operand.vmem [shape: f32[1,8], index: 2, kind: input, shape index: {}]
  %s3 = inlined_call_operand.vmem [shape: f32[1,8], index: 3, kind: input, shape index: {}]
  %s4 = inlined_call_operand.vmem [shape: f32[9,8,8], index: 4, kind: input, shape index: {}]
  %s5 = inlined_call_operand.vmem [shape: f32[1,8], index: 5, kind: input, shape index: {}]
  %s6 = inlined_call_operand.vmem [shape: f32[1,8], index: 6, kind: input, shape index: {}]
  %s7 = inlined_call_operand.vmem [shape: f32[2,16,16,8], index: 7, kind: output, shape index: {}]
  %s8 = sld [smem:[#allocation0]]
  $region77: #{tpu_custom_call.1} parent=0
    _
  %s10 = ssub.s32 1, %s8
  %s11 = scalar_select 0, %s10, %s8
  loop: start=0, step=1, limit=6
  $region2: #{tpu_custom_call.1} parent=0 // loop_pre_header
    _
  $region3: #{tpu_custom_call.1} parent=0 // loop_header
    %s13 = sphi 0, %s17
    %p14 = scmp.ge.s32.totalorder %s13, 6
    %s20 = sphi 0, %s32
    %s21 = sphi 0, %s28
    %s22 = sphi 0, %s20
    %s23 = sphi 0, %s21
    %s24 = sphi 0, %s22
    %s25 = sphi 0, %s23
    %s35 = sphi 0, %s37
    %s38 = sphi 0, %s35
    %s39 = sphi 0, %s38
    %s55 = sphi 0, %s39
    %s59 = sphi 0, %s59
    %s61 = sphi 0, %s59
    %s62 = sphi 0, %s61
    %s76 = sphi 0, %s62
    %s80 = sphi 0, %s80
    %s82 = sphi 0, %s80
    %s83 = sphi 0, %s82
    %s97 = sphi 0, %s83
    %s101 = sphi 0, %s101
    %s103 = sphi 0, %s101
    %s104 = sphi 0, %s103
    %s118 = sphi 0, %s104
    %s122 = sphi 0, %s122
    %s124 = sphi 0, %s122
    %s125 = sphi 0, %s124
    %s139 = sphi 0, %s125
    %s143 = sphi 0, %s143
    %s145 = sphi 0, %s143
    %s146 = sphi 0, %s145
    %s160 = sphi 0, %s146
    %s164 = sphi 0, %s164
    %s166 = sphi 0, %s164
    %s167 = sphi 0, %s166
    %s181 = sphi 0, %s167
    %s189 = sphi 0, %s191
    %s192 = sphi 0, %s189
    %s193 = sphi 0, %s192
    %s209 = sphi 0, %s193
  $region4: #{tpu_custom_call.1} parent=0 // loop_header_branch
    %16 = sbr.rel (%p14) target = $region8
  $region5: #{tpu_custom_call.1} parent=0 // loop_body
    %s18 = ssub.s32 %s13, 1
    %s19 = ssub.s32 %s13, 2
    %s26 = sadd.s32 1, %s21
    %p27 = scmp.ge.s32.totalorder %s26, 2
    %s28 = scalar_select %p27, 0, %s26
    %s29 = sadd.s32 1, %s20
    %s30 = scalar_select %p27, %s29, %s20
    %p31 = scmp.ge.s32.totalorder %s30, 2
    %s32 = scalar_select %p31, 0, %s30
    %s33 = ssub.s32 %s20, %s32
    %p34 = scmp.eq.s32.totalorder %s33, 0
    %s36 = sadd.s32 %s35, 1
    %s37 = scalar_select %p34, %s35, %s36
    %p40 = pneg %p34
    %p41 = scmp.eq.s32.totalorder %s13, 3
    %p42 = por %p40, %p41
    %p43 = scmp.ne.s32.totalorder %s35, %s38
    %p44 = scmp.eq.s32.totalorder %s13, 0
    %p45 = por %p43, %p44
    %p46 = scmp.ne.s32.totalorder %s35, %s38
    %p47 = scmp.eq.s32.totalorder %s18, 3
    %p48 = por %p46, %p47
    %p49 = scmp.ne.s32.totalorder %s38, %s39
    %p50 = scmp.eq.s32.totalorder %s18, 0
    %p51 = por %p49, %p50
    %p52 = scmp.ne.s32.totalorder %s38, %s39
    %p53 = scmp.eq.s32.totalorder %s19, 3
    %p54 = por %p52, %p53
    %p56 = scmp.ne.s32.totalorder %s39, %s55
    %p57 = scmp.eq.s32.totalorder %s19, 0
    %p58 = por %p56, %p57
    %s60 = sadd.s32 %s59, 1
    %p63 = scmp.eq.s32.totalorder %s13, 3
    %p64 = scmp.ne.s32.totalorder %s59, %s61
    %p65 = scmp.eq.s32.totalorder %s13, 0
    %p66 = por %p64, %p65
    %p67 = scmp.ne.s32.totalorder %s59, %s61
    %p68 = scmp.eq.s32.totalorder %s18, 3
    %p69 = por %p67, %p68
    %p70 = scmp.ne.s32.totalorder %s61, %s62
    %p71 = scmp.eq.s32.totalorder %s18, 0
    %p72 = por %p70, %p71
    %p73 = scmp.ne.s32.totalorder %s61, %s62
    %p74 = scmp.eq.s32.totalorder %s19, 3
    %p75 = por %p73, %p74
    %p77 = scmp.ne.s32.totalorder %s62, %s76
    %p78 = scmp.eq.s32.totalorder %s19, 0
    %p79 = por %p77, %p78
    %s81 = sadd.s32 %s80, 1
    %p84 = scmp.eq.s32.totalorder %s13, 3
    %p85 = scmp.ne.s32.totalorder %s80, %s82
    %p86 = scmp.eq.s32.totalorder %s13, 0
    %p87 = por %p85, %p86
    %p88 = scmp.ne.s32.totalorder %s80, %s82
    %p89 = scmp.eq.s32.totalorder %s18, 3
    %p90 = por %p88, %p89
    %p91 = scmp.ne.s32.totalorder %s82, %s83
    %p92 = scmp.eq.s32.totalorder %s18, 0
    %p93 = por %p91, %p92
    %p94 = scmp.ne.s32.totalorder %s82, %s83
    %p95 = scmp.eq.s32.totalorder %s19, 3
    %p96 = por %p94, %p95
    %p98 = scmp.ne.s32.totalorder %s83, %s97
    %p99 = scmp.eq.s32.totalorder %s19, 0
    %p100 = por %p98, %p99
    %s102 = sadd.s32 %s101, 1
    %p105 = scmp.eq.s32.totalorder %s13, 3
    %p106 = scmp.ne.s32.totalorder %s101, %s103
    %p107 = scmp.eq.s32.totalorder %s13, 0
    %p108 = por %p106, %p107
    %p109 = scmp.ne.s32.totalorder %s101, %s103
    %p110 = scmp.eq.s32.totalorder %s18, 3
    %p111 = por %p109, %p110
    %p112 = scmp.ne.s32.totalorder %s103, %s104
    %p113 = scmp.eq.s32.totalorder %s18, 0
    %p114 = por %p112, %p113
    %p115 = scmp.ne.s32.totalorder %s103, %s104
    %p116 = scmp.eq.s32.totalorder %s19, 3
    %p117 = por %p115, %p116
    %p119 = scmp.ne.s32.totalorder %s104, %s118
    %p120 = scmp.eq.s32.totalorder %s19, 0
    %p121 = por %p119, %p120
    %s123 = sadd.s32 %s122, 1
    %p126 = scmp.eq.s32.totalorder %s13, 3
    %p127 = scmp.ne.s32.totalorder %s122, %s124
    %p128 = scmp.eq.s32.totalorder %s13, 0
    %p129 = por %p127, %p128
    %p130 = scmp.ne.s32.totalorder %s122, %s124
    %p131 = scmp.eq.s32.totalorder %s18, 3
    %p132 = por %p130, %p131
    %p133 = scmp.ne.s32.totalorder %s124, %s125
    %p134 = scmp.eq.s32.totalorder %s18, 0
    %p135 = por %p133, %p134
    %p136 = scmp.ne.s32.totalorder %s124, %s125
    %p137 = scmp.eq.s32.totalorder %s19, 3
    %p138 = por %p136, %p137
    %p140 = scmp.ne.s32.totalorder %s125, %s139
    %p141 = scmp.eq.s32.totalorder %s19, 0
    %p142 = por %p140, %p141
    %s144 = sadd.s32 %s143, 1
    %p147 = scmp.eq.s32.totalorder %s13, 3
    %p148 = scmp.ne.s32.totalorder %s143, %s145
    %p149 = scmp.eq.s32.totalorder %s13, 0
    %p150 = por %p148, %p149
    %p151 = scmp.ne.s32.totalorder %s143, %s145
    %p152 = scmp.eq.s32.totalorder %s18, 3
    %p153 = por %p151, %p152
    %p154 = scmp.ne.s32.totalorder %s145, %s146
    %p155 = scmp.eq.s32.totalorder %s18, 0
    %p156 = por %p154, %p155
    %p157 = scmp.ne.s32.totalorder %s145, %s146
    %p158 = scmp.eq.s32.totalorder %s19, 3
    %p159 = por %p157, %p158
    %p161 = scmp.ne.s32.totalorder %s146, %s160
    %p162 = scmp.eq.s32.totalorder %s19, 0
    %p163 = por %p161, %p162
    %s165 = sadd.s32 %s164, 1
    %p168 = scmp.eq.s32.totalorder %s13, 3
    %p169 = scmp.ne.s32.totalorder %s164, %s166
    %p170 = scmp.eq.s32.totalorder %s13, 0
    %p171 = por %p169, %p170
    %p172 = scmp.ne.s32.totalorder %s164, %s166
    %p173 = scmp.eq.s32.totalorder %s18, 3
    %p174 = por %p172, %p173
    %p175 = scmp.ne.s32.totalorder %s166, %s167
    %p176 = scmp.eq.s32.totalorder %s18, 0
    %p177 = por %p175, %p176
    %p178 = scmp.ne.s32.totalorder %s166, %s167
    %p179 = scmp.eq.s32.totalorder %s19, 3
    %p180 = por %p178, %p179
    %p182 = scmp.ne.s32.totalorder %s167, %s181
    %p183 = scmp.eq.s32.totalorder %s19, 0
    %p184 = por %p182, %p183
    %s185 = ssub.s32 %s20, %s32
    %s186 = ssub.s32 %s21, %s28
    %s187 = sor.u32 %s185, %s186
    %p188 = scmp.eq.s32.totalorder %s187, 0
    %s190 = sadd.s32 %s189, 1
    %s191 = scalar_select %p188, %s189, %s190
    %p194 = pneg %p188
    %p195 = scmp.eq.s32.totalorder %s13, 3
    %p196 = por %p194, %p195
    %p197 = scmp.ne.s32.totalorder %s189, %s192
    %p198 = scmp.eq.s32.totalorder %s13, 0
    %p199 = por %p197, %p198
    %p200 = scmp.ne.s32.totalorder %s189, %s192
    %p201 = scmp.eq.s32.totalorder %s18, 3
    %p202 = por %p200, %p201
    %p203 = scmp.ne.s32.totalorder %s192, %s193
    %p204 = scmp.eq.s32.totalorder %s18, 0
    %p205 = por %p203, %p204
    %p206 = scmp.ne.s32.totalorder %s192, %s193
    %p207 = scmp.eq.s32.totalorder %s19, 3
    %p208 = por %p206, %p207
    %p210 = scmp.ne.s32.totalorder %s193, %s209
    %p211 = scmp.eq.s32.totalorder %s19, 0
    %p212 = por %p210, %p211
    %p213 = scmp.le.s32.totalorder 1, %s13
    %p214 = scmp.lt.s32.totalorder %s13, 5
    %p215 = pnand %p213, %p214
    %p216 = pneg %p215
    // Predicated region
    $region9: #{tpu_custom_call.1} parent=5 // pred_check
      _
    $region10: #{tpu_custom_call.1} parent=5 // pred_check_branch
      %218 = sbr.rel (%p215) target = $region12
    $region11: #{tpu_custom_call.1} parent=5 // pred_region
      %s219 = ssub.s32 %s13, 1
      // Predicated region
      $region13: #{tpu_custom_call.1} parent=11 // pred_check
        %p220 = pneg %p72
      $region14: #{tpu_custom_call.1} parent=11 // pred_check_branch
        %222 = sbr.rel (%p220) target = $region16
      $region15: #{tpu_custom_call.1} parent=11 // pred_region
        _
      $region16: #{tpu_custom_call.1} parent=11 // pred_fallthru
        _
      // Predicated region
      $region17: #{tpu_custom_call.1} parent=11 // pred_check
        %p223 = pneg %p93
      $region18: #{tpu_custom_call.1} parent=11 // pred_check_branch
        %225 = sbr.rel (%p223) target = $region20
      $region19: #{tpu_custom_call.1} parent=11 // pred_region
        _
      $region20: #{tpu_custom_call.1} parent=11 // pred_fallthru
        _
      // Predicated region
      $region21: #{tpu_custom_call.1} parent=11 // pred_check
        %p226 = pneg %p114
      $region22: #{tpu_custom_call.1} parent=11 // pred_check_branch
        %228 = sbr.rel (%p226) target = $region24
      $region23: #{tpu_custom_call.1} parent=11 // pred_region
        _
      $region24: #{tpu_custom_call.1} parent=11 // pred_fallthru
        _
      // Predicated region
      $region25: #{tpu_custom_call.1} parent=11 // pred_check
        %p229 = pneg %p135
      $region26: #{tpu_custom_call.1} parent=11 // pred_check_branch
        %231 = sbr.rel (%p229) target = $region28
      $region27: #{tpu_custom_call.1} parent=11 // pred_region
        _
      $region28: #{tpu_custom_call.1} parent=11 // pred_fallthru
        _
      // Predicated region
      $region29: #{tpu_custom_call.1} parent=11 // pred_check
        %p232 = pneg %p156
      $region30: #{tpu_custom_call.1} parent=11 // pred_check_branch
        %234 = sbr.rel (%p232) target = $region32
      $region31: #{tpu_custom_call.1} parent=11 // pred_region
        _
      $region32: #{tpu_custom_call.1} parent=11 // pred_fallthru
        _
      // Predicated region
      $region33: #{tpu_custom_call.1} parent=11 // pred_check
        %p235 = pneg %p177
      $region34: #{tpu_custom_call.1} parent=11 // pred_check_branch
        %237 = sbr.rel (%p235) target = $region36
      $region35: #{tpu_custom_call.1} parent=11 // pred_region
        _
      $region36: #{tpu_custom_call.1} parent=11 // pred_fallthru
        _
    $region12: #{tpu_custom_call.1} parent=5 // pred_fallthru
      _
    %p238 = scmp.lt.s32.totalorder %s13, 4
    // Predicated region
    $region37: #{tpu_custom_call.1} parent=5 // pred_check
      %p239 = pneg %p238
    $region38: #{tpu_custom_call.1} parent=5 // pred_check_branch
      %241 = sbr.rel (%p239) target = $region40
    $region39: #{tpu_custom_call.1} parent=5 // pred_region
      // Predicated region
      $region41: #{tpu_custom_call.1} parent=39 // pred_check
        %p242 = pneg %p45
      $region42: #{tpu_custom_call.1} parent=39 // pred_check_branch
        %244 = sbr.rel (%p242) target = $region44
      $region43: #{tpu_custom_call.1} parent=39 // pred_region
        %p245 = scmp.lt.s32.totalorder %s20, 1
        %s246 = scalar_select %p245, %s20, 1
        %s247 = smul.addr %s246, 32
        %s248 = smul.addr %s247, 8
        %s249 = scalar_lea.vmem %s0, %s248
      $region44: #{tpu_custom_call.1} parent=39 // pred_fallthru
        _
    $region40: #{tpu_custom_call.1} parent=5 // pred_fallthru
      _
    %p250 = scmp.le.s32.totalorder 1, %s13
    %p251 = scmp.lt.s32.totalorder %s13, 5
    %p252 = pnand %p250, %p251
    %p253 = pneg %p252
    // Predicated region
    $region45: #{tpu_custom_call.1} parent=5 // pred_check
      _
    $region46: #{tpu_custom_call.1} parent=5 // pred_check_branch
      %255 = sbr.rel (%p252) target = $region48
    $region47: #{tpu_custom_call.1} parent=5 // pred_region
      %s256 = ssub.s32 %s13, 1
      %p257 = scmp.lt.s32.totalorder %s22, 1
      %s258 = scalar_select %p257, %s22, 1
      %s259 = smul.addr %s258, 32
      %s260 = smul.addr %s259, 8
      %s261 = scalar_lea.vmem %s0, %s260
      %p262 = pneg %p51
      %p263 = pneg %p48
      %p264 = pneg %p72
      %p265 = pneg %p69
      %p266 = pneg %p93
      %p267 = pneg %p90
      %p268 = pneg %p114
      %p269 = pneg %p111
      %p270 = pneg %p135
      %p271 = pneg %p132
      %p272 = pneg %p156
      %p273 = pneg %p153
      %p274 = pneg %p177
      %p275 = pneg %p174
      %p276 = pneg %p205
      %p277 = pneg %p202
      %s278 = smul.u32 8, %s23
      %p279 = scmp.lt.s32.totalorder %s22, 1
      %s280 = scalar_select %p279, %s22, 1
      %p281 = scmp.lt.s32.totalorder %s278, 15
      %s282 = scalar_select %p281, %s278, 15
      %s283 = smul.addr %s282, 2
      %s284 = smul.addr %s280, 32
      %s285 = sadd.s32 %s283, %s284
      %s286 = smul.addr %s285, 8
      %s287 = scalar_lea.vmem %s7, %s286
      %p288 = scmp.lt.s32.totalorder %s22, 1
      %s289 = scalar_select %p288, %s22, 1
      %s290 = smul.addr %s289, 32
      %s291 = smul.addr %s290, 8
      %s292 = scalar_lea.vmem %s0, %s291
      %s293 = smul.u32 8, %s23
      %p294 = scmp.lt.s32.totalorder %s22, 1
      %s295 = scalar_select %p294, %s22, 1
      %p296 = scmp.lt.s32.totalorder %s293, 15
      %s297 = scalar_select %p296, %s293, 15
      %s298 = smul.addr %s297, 2
      %s299 = smul.addr %s295, 32
      %s300 = sadd.s32 %s298, %s299
      %s301 = smul.addr %s300, 8
      %s302 = scalar_lea.vmem %s7, %s301
      %s303 = smul.u32 8, %s23
      %vm304 = vcmask 24576
      %305 = vst.msk [vmem:[#allocation2] sm:$0x1] %vm304, 0.0
      %306 = vst.msk [vmem:[#allocation2 + $0x18] sm:$0x1] %vm304, 0.0
      %307 = vst.msk [vmem:[#allocation2 + $0x30] sm:$0x1] %vm304, 0.0
      %308 = vst.msk [vmem:[#allocation2 + $0x48] sm:$0x1] %vm304, 0.0
      %309 = vst.msk [vmem:[#allocation2 + $0x60] sm:$0x1] %vm304, 0.0
      %310 = vst.msk [vmem:[#allocation2 + $0x78] sm:$0x1] %vm304, 0.0
      %311 = vst.msk [vmem:[#allocation2 + $0x90] sm:$0x1] %vm304, 0.0
      %312 = vst.msk [vmem:[#allocation2 + $0xa8] sm:$0x1] %vm304, 0.0
      %313 = vst.msk [vmem:[#allocation2 + $0xc0] sm:$0x1] %vm304, 0.0
      %314 = vst.msk [vmem:[#allocation2 + $0xd8] sm:$0x1] %vm304, 0.0
      %315 = vst.msk [vmem:[#allocation2 + $0xf0] sm:$0x1] %vm304, 0.0
      %316 = vst.msk [vmem:[#allocation2 + $0x108] sm:$0x1] %vm304, 0.0
      %317 = vst.msk [vmem:[#allocation2 + $0x11] sm:$0x1] %vm304, 0.0
      %318 = vst.msk [vmem:[#allocation2 + $0x29] sm:$0x1] %vm304, 0.0
      %319 = vst.msk [vmem:[#allocation2 + $0x41] sm:$0x1] %vm304, 0.0
      %320 = vst.msk [vmem:[#allocation2 + $0x59] sm:$0x1] %vm304, 0.0
      %321 = vst.msk [vmem:[#allocation2 + $0x71] sm:$0x1] %vm304, 0.0
      %322 = vst.msk [vmem:[#allocation2 + $0x89] sm:$0x1] %vm304, 0.0
      %323 = vst.msk [vmem:[#allocation2 + $0xa1] sm:$0x1] %vm304, 0.0
      %324 = vst.msk [vmem:[#allocation2 + $0xb9] sm:$0x1] %vm304, 0.0
      %325 = vst.msk [vmem:[#allocation2 + $0xd1] sm:$0x1] %vm304, 0.0
      %326 = vst.msk [vmem:[#allocation2 + $0xe9] sm:$0x1] %vm304, 0.0
      %327 = vst.msk [vmem:[#allocation2 + $0x101] sm:$0x1] %vm304, 0.0
      %328 = vst.msk [vmem:[#allocation2 + $0x119] sm:$0x1] %vm304, 0.0
      %p329 = scmp.eq.s32.totalorder %s23, 0
      // Predicated region
      $region49: #{tpu_custom_call.1} parent=47 // pred_check
        %p330 = pneg %p329
      $region50: #{tpu_custom_call.1} parent=47 // pred_check_branch
        %332 = sbr.rel (%p330) target = $region52
      $region51: #{tpu_custom_call.1} parent=47 // pred_region
        %vm333 = vcmask 31744
        %334 = vst.msk [vmem:[#allocation2 + $0x1] sm:$0xff] %vm333, 0.0
        %335 = vst.msk [vmem:[#allocation2 + $0x9] sm:$0xff] %vm333, 0.0
        %336 = vst.msk [vmem:[#allocation2 + $0x19] sm:$0xff] %vm333, 0.0
        %337 = vst.msk [vmem:[#allocation2 + $0x21] sm:$0xff] %vm333, 0.0
        %v338 = vld [vmem:[%s292] sm:$0xff]
        %v339 = vld [vmem:[%s292 + $0x8] sm:$0xff]
        %v340 = vld [vmem:[%s292 + $0x10] sm:$0xff]
        %v341 = vld [vmem:[%s292 + $0x18] sm:$0xff]
        %v342 = vld [vmem:[%s292 + $0x20] sm:$0xff]
        %v343 = vld [vmem:[%s292 + $0x28] sm:$0xff]
        %v344 = vld [vmem:[%s292 + $0x30] sm:$0xff]
        %v345 = vld [vmem:[%s292 + $0x38] sm:$0xff]
        %v346 = vld [vmem:[%s292 + $0x40] sm:$0xff]
        %v347 = vld [vmem:[%s292 + $0x48] sm:$0xff]
        %v348 = vld [vmem:[%s292 + $0x50] sm:$0xff]
        %v349 = vld [vmem:[%s292 + $0x58] sm:$0xff]
        %v350 = vld [vmem:[%s292 + $0x60] sm:$0xff]
        %v351 = vld [vmem:[%s292 + $0x68] sm:$0xff]
        %v352 = vld [vmem:[%s292 + $0x70] sm:$0xff]
        %v353 = vld [vmem:[%s292 + $0x78] sm:$0xff]
        %v354 = vld [vmem:[%s292 + $0x80] sm:$0xff]
        %v355 = vld [vmem:[%s292 + $0x88] sm:$0xff]
        %v356 = vld [vmem:[%s292 + $0x90] sm:$0xff]
        %v357 = vld [vmem:[%s292 + $0x98] sm:$0xff]
        %s358 = scalar_lea.vmem [#allocation2], 48
        %359 = vst.msk [vmem:[%s358 + $0x1] sm:$0xff] %vm333, %v338
        %360 = vst.msk [vmem:[%s358 + $0x9] sm:$0xff] %vm333, %v339
        %361 = vst.msk [vmem:[%s358 + $0x19] sm:$0xff] %vm333, %v340
        %362 = vst.msk [vmem:[%s358 + $0x21] sm:$0xff] %vm333, %v341
        %363 = vst.msk [vmem:[%s358 + $0x31] sm:$0xff] %vm333, %v342
        %364 = vst.msk [vmem:[%s358 + $0x39] sm:$0xff] %vm333, %v343
        %365 = vst.msk [vmem:[%s358 + $0x49] sm:$0xff] %vm333, %v344
        %366 = vst.msk [vmem:[%s358 + $0x51] sm:$0xff] %vm333, %v345
        %367 = vst.msk [vmem:[%s358 + $0x61] sm:$0xff] %vm333, %v346
        %368 = vst.msk [vmem:[%s358 + $0x69] sm:$0xff] %vm333, %v347
        %369 = vst.msk [vmem:[%s358 + $0x79] sm:$0xff] %vm333, %v348
        %370 = vst.msk [vmem:[%s358 + $0x81] sm:$0xff] %vm333, %v349
        %371 = vst.msk [vmem:[%s358 + $0x91] sm:$0xff] %vm333, %v350
        %372 = vst.msk [vmem:[%s358 + $0x99] sm:$0xff] %vm333, %v351
        %373 = vst.msk [vmem:[%s358 + $0xa9] sm:$0xff] %vm333, %v352
        %374 = vst.msk [vmem:[%s358 + $0xb1] sm:$0xff] %vm333, %v353
        %375 = vst.msk [vmem:[%s358 + $0xc1] sm:$0xff] %vm333, %v354
        %376 = vst.msk [vmem:[%s358 + $0xc9] sm:$0xff] %vm333, %v355
        %377 = vst.msk [vmem:[%s358 + $0xd9] sm:$0xff] %vm333, %v356
        %378 = vst.msk [vmem:[%s358 + $0xe1] sm:$0xff] %vm333, %v357
      $region52: #{tpu_custom_call.1} parent=47 // pred_fallthru
        _
      %p379 = scmp.eq.s32.totalorder %s23, 1
      // Predicated region
      $region53: #{tpu_custom_call.1} parent=47 // pred_check
        %p380 = pneg %p379
      $region54: #{tpu_custom_call.1} parent=47 // pred_check_branch
        %382 = sbr.rel (%p380) target = $region56
      $region55: #{tpu_custom_call.1} parent=47 // pred_region
        %s383 = smul.u32 %s23, 8
        %s384 = ssub.s32 %s383, 2
        %s385 = smul.u32 %s384, 16
        %s386 = scalar_lea.vmem %s292, %s385
        %v387 = vld [vmem:[%s386] sm:$0xff]
        %v388 = vld [vmem:[%s386 + $0x8] sm:$0xff]
        %v389 = vld [vmem:[%s386 + $0x10] sm:$0xff]
        %v390 = vld [vmem:[%s386 + $0x18] sm:$0xff]
        %v391 = vld [vmem:[%s386 + $0x20] sm:$0xff]
        %v392 = vld [vmem:[%s386 + $0x28] sm:$0xff]
        %v393 = vld [vmem:[%s386 + $0x30] sm:$0xff]
        %v394 = vld [vmem:[%s386 + $0x38] sm:$0xff]
        %v395 = vld [vmem:[%s386 + $0x40] sm:$0xff]
        %v396 = vld [vmem:[%s386 + $0x48] sm:$0xff]
        %v397 = vld [vmem:[%s386 + $0x50] sm:$0xff]
        %v398 = vld [vmem:[%s386 + $0x58] sm:$0xff]
        %v399 = vld [vmem:[%s386 + $0x60] sm:$0xff]
        %v400 = vld [vmem:[%s386 + $0x68] sm:$0xff]
        %v401 = vld [vmem:[%s386 + $0x70] sm:$0xff]
        %v402 = vld [vmem:[%s386 + $0x78] sm:$0xff]
        %v403 = vld [vmem:[%s386 + $0x80] sm:$0xff]
        %v404 = vld [vmem:[%s386 + $0x88] sm:$0xff]
        %v405 = vld [vmem:[%s386 + $0x90] sm:$0xff]
        %v406 = vld [vmem:[%s386 + $0x98] sm:$0xff]
        %vm407 = vcmask 31744
        %408 = vst.msk [vmem:[#allocation2 + $0x1] sm:$0xff] %vm407, %v387
        %409 = vst.msk [vmem:[#allocation2 + $0x9] sm:$0xff] %vm407, %v388
        %410 = vst.msk [vmem:[#allocation2 + $0x19] sm:$0xff] %vm407, %v389
        %411 = vst.msk [vmem:[#allocation2 + $0x21] sm:$0xff] %vm407, %v390
        %412 = vst.msk [vmem:[#allocation2 + $0x31] sm:$0xff] %vm407, %v391
        %413 = vst.msk [vmem:[#allocation2 + $0x39] sm:$0xff] %vm407, %v392
        %414 = vst.msk [vmem:[#allocation2 + $0x49] sm:$0xff] %vm407, %v393
        %415 = vst.msk [vmem:[#allocation2 + $0x51] sm:$0xff] %vm407, %v394
        %416 = vst.msk [vmem:[#allocation2 + $0x61] sm:$0xff] %vm407, %v395
        %417 = vst.msk [vmem:[#allocation2 + $0x69] sm:$0xff] %vm407, %v396
        %418 = vst.msk [vmem:[#allocation2 + $0x79] sm:$0xff] %vm407, %v397
        %419 = vst.msk [vmem:[#allocation2 + $0x81] sm:$0xff] %vm407, %v398
        %420 = vst.msk [vmem:[#allocation2 + $0x91] sm:$0xff] %vm407, %v399
        %421 = vst.msk [vmem:[#allocation2 + $0x99] sm:$0xff] %vm407, %v400
        %422 = vst.msk [vmem:[#allocation2 + $0xa9] sm:$0xff] %vm407, %v401
        %423 = vst.msk [vmem:[#allocation2 + $0xb1] sm:$0xff] %vm407, %v402
        %424 = vst.msk [vmem:[#allocation2 + $0xc1] sm:$0xff] %vm407, %v403
        %425 = vst.msk [vmem:[#allocation2 + $0xc9] sm:$0xff] %vm407, %v404
        %426 = vst.msk [vmem:[#allocation2 + $0xd9] sm:$0xff] %vm407, %v405
        %427 = vst.msk [vmem:[#allocation2 + $0xe1] sm:$0xff] %vm407, %v406
        %s428 = scalar_lea.vmem [#allocation2], 240
        %429 = vst.msk [vmem:[%s428 + $0x1] sm:$0xff] %vm407, 0.0
        %430 = vst.msk [vmem:[%s428 + $0x9] sm:$0xff] %vm407, 0.0
        %431 = vst.msk [vmem:[%s428 + $0x19] sm:$0xff] %vm407, 0.0
        %432 = vst.msk [vmem:[%s428 + $0x21] sm:$0xff] %vm407, 0.0
      $region56: #{tpu_custom_call.1} parent=47 // pred_fallthru
        _
      %v433 = vld [vmem:[#allocation2] sm:$0xff]
      %v434 = vld [vmem:[#allocation2 + $0x8] sm:$0xff]
      %v435 = vld [vmem:[#allocation2 + $0x18] sm:$0xff]
      %v436 = vld [vmem:[#allocation2 + $0x20] sm:$0xff]
      %v437 = vld [vmem:[#allocation2 + $0x30] sm:$0xff]
      %v438 = vld [vmem:[#allocation2 + $0x38] sm:$0xff]
      %v439 = vld [vmem:[#allocation2 + $0x48] sm:$0xff]
      %v440 = vld [vmem:[#allocation2 + $0x50] sm:$0xff]
      %v441 = vld [vmem:[#allocation2 + $0x60] sm:$0xff]
      %v442 = vld [vmem:[#allocation2 + $0x68] sm:$0xff]
      %v443 = vld [vmem:[#allocation2 + $0x78] sm:$0xff]
      %v444 = vld [vmem:[#allocation2 + $0x80] sm:$0xff]
      %v445 = vld [vmem:[#allocation2 + $0x90] sm:$0xff]
      %v446 = vld [vmem:[#allocation2 + $0x98] sm:$0xff]
      %v447 = vld [vmem:[#allocation2 + $0xa8] sm:$0xff]
      %v448 = vld [vmem:[#allocation2 + $0xb0] sm:$0xff]
      %v449 = vld [vmem:[#allocation2 + $0xc0] sm:$0xff]
      %v450 = vld [vmem:[#allocation2 + $0xc8] sm:$0xff]
      %v451 = vld [vmem:[#allocation2 + $0xd8] sm:$0xff]
      %v452 = vld [vmem:[#allocation2 + $0xe0] sm:$0xff]
      %v453 = vld [vmem:[%s1] sm:$0xf]
      %v454 = vld [vmem:[#allocation2 + $0x1] sm:$0xff]
      %v455 = vld [vmem:[#allocation2 + $0x9] sm:$0xff]
      %v456 = vld [vmem:[#allocation2 + $0x19] sm:$0xff]
      %v457 = vld [vmem:[#allocation2 + $0x21] sm:$0xff]
      %v458 = vld [vmem:[#allocation2 + $0x31] sm:$0xff]
      %v459 = vld [vmem:[#allocation2 + $0x39] sm:$0xff]
      %v460 = vld [vmem:[#allocation2 + $0x49] sm:$0xff]
      %v461 = vld [vmem:[#allocation2 + $0x51] sm:$0xff]
      %v462 = vld [vmem:[#allocation2 + $0x61] sm:$0xff]
      %v463 = vld [vmem:[#allocation2 + $0x69] sm:$0xff]
      %v464 = vld [vmem:[#allocation2 + $0x79] sm:$0xff]
      %v465 = vld [vmem:[#allocation2 + $0x81] sm:$0xff]
      %v466 = vld [vmem:[#allocation2 + $0x91] sm:$0xff]
      %v467 = vld [vmem:[#allocation2 + $0x99] sm:$0xff]
      %v468 = vld [vmem:[#allocation2 + $0xa9] sm:$0xff]
      %v469 = vld [vmem:[#allocation2 + $0xb1] sm:$0xff]
      %v470 = vld [vmem:[#allocation2 + $0xc1] sm:$0xff]
      %v471 = vld [vmem:[#allocation2 + $0xc9] sm:$0xff]
      %v472 = vld [vmem:[#allocation2 + $0xd9] sm:$0xff]
      %v473 = vld [vmem:[#allocation2 + $0xe1] sm:$0xff]
      %s474 = scalar_lea.vmem %s1, 4
      %v475 = vld [vmem:[%s474] sm:$0xf]
      %vm476 = vcmask 31744
      %v478 = vsel %vm476, %v454, 0
      %v481 = vsel %vm476, %v455, 0
      %v484 = vsel %vm476, %v456, 0
      %v487 = vsel %vm476, %v457, 0
      %v490 = vsel %vm476, %v458, 0
      %v493 = vsel %vm476, %v459, 0
      %v496 = vsel %vm476, %v460, 0
      %v499 = vsel %vm476, %v461, 0
      %v502 = vsel %vm476, %v462, 0
      %v505 = vsel %vm476, %v463, 0
      %v508 = vsel %vm476, %v464, 0
      %v511 = vsel %vm476, %v465, 0
      %v514 = vsel %vm476, %v466, 0
      %v517 = vsel %vm476, %v467, 0
      %v520 = vsel %vm476, %v468, 0
      %v523 = vsel %vm476, %v469, 0
      %v526 = vsel %vm476, %v470, 0
      %v529 = vsel %vm476, %v471, 0
      %v532 = vsel %vm476, %v472, 0
      %v535 = vsel %vm476, %v473, 0
      %vm537 = vcmask 1043456
      %v539 = vsel %vm537, %v475, 0
      %541 = vmatprep.subr.mxu0 0.0
      %542 = vmatpush1.msra.mxu0 %v539
      %543 = vmatprep.subr.mxu0 0.0
      %544 = vmatpush1.msra.mxu0 0.0
      %545 = vmatprep.subr.mxu0 0.0
      %546 = vmatpush1.msra.mxu0 0.0
      %547 = vmatprep.subr.mxu0 0.0
      %548 = vmatpush1.msra.mxu0 0.0
      %549 = vmatprep.subr.mxu0 0.0
      %550 = vmatpush1.msra.mxu0 0.0
      %551 = vmatprep.subr.mxu0 0.0
      %552 = vmatpush1.msra.mxu0 0.0
      %553 = vmatprep.subr.mxu0 0.0
      %554 = vmatpush1.msra.mxu0 0.0
      %555 = vmatprep.subr.mxu0 0.0
      %556 = vmatpush1.msra.mxu0 0.0
      %557 = vmatprep.subr.mxu0 0.0
      %558 = vmatpush1.msra.mxu0 0.0
      %559 = vmatprep.subr.mxu0 0.0
      %560 = vmatpush1.msra.mxu0 0.0
      %561 = vmatprep.subr.mxu0 0.0
      %562 = vmatpush1.msra.mxu0 0.0
      %563 = vmatprep.subr.mxu0 0.0
      %564 = vmatpush1.msra.mxu0 0.0
      %565 = vmatprep.subr.mxu0 0.0
      %566 = vmatpush1.msra.mxu0 0.0
      %567 = vmatprep.subr.mxu0 0.0
      %568 = vmatpush1.msra.mxu0 0.0
      %569 = vmatprep.subr.mxu0 0.0
      %570 = vmatpush1.msra.mxu0 0.0
      %571 = vmatprep.subr.mxu0 0.0
      %572 = vmatpush1.msra.mxu0 0.0
      %573 = vmatprep.subr.mxu0 0.0
      %574 = vmatpush1.msra.mxu0 0.0
      %575 = vmatprep.subr.mxu0 0.0
      %576 = vmatpush1.msra.mxu0 0.0
      %577 = vmatprep.subr.mxu0 0.0
      %578 = vmatpush1.msra.mxu0 0.0
      %579 = vmatprep.subr.mxu0 0.0
      %580 = vmatpush1.msra.mxu0 0.0
      %581 = vmatprep.subr.mxu0 0.0
      %582 = vmatpush1.msra.mxu0 0.0
      %583 = vmatprep.subr.mxu0 0.0
      %584 = vmatpush1.msra.mxu0 0.0
      %585 = vmatprep.subr.mxu0 0.0
      %586 = vmatpush1.msra.mxu0 0.0
      %587 = vmatprep.subr.mxu0 0.0
      %588 = vmatpush1.msra.mxu0 0.0
      %589 = vmatprep.subr.mxu0 0.0
      %590 = vmatpush1.msra.mxu0 0.0
      %591 = vmatprep.subr.mxu0 0.0
      %592 = vmatpush1.msra.mxu0 0.0
      %593 = vmatprep.subr.mxu0 0.0
      %594 = vmatpush1.msra.mxu0 0.0
      %595 = vmatprep.subr.mxu0 0.0
      %596 = vmatpush1.msra.mxu0 0.0
      %597 = vmatprep.subr.mxu0 0.0
      %598 = vmatpush1.msra.mxu0 0.0
      %599 = vmatprep.subr.mxu0 0.0
      %600 = vmatpush1.msra.mxu0 0.0
      %601 = vmatprep.subr.mxu0 0.0
      %602 = vmatpush1.msra.mxu0 0.0
      %603 = vmatprep.subr.mxu0 0.0
      %604 = vmatpush1.msra.mxu0 0.0
      %605 = vmatprep.mubr.f32.mxu0 0.0
      %606 = vmatmul.mubr.f32.gmra.mrb[0].mxu0 %v478
      %v607 = vpop.f32.mrb[0].mxu0
      %v608 = vadd.f32 0.0, %v607
      %v609 = vpop.f32.mrb[0].mxu0
      %610 = vmatprep.mubr.f32.mxu0 0.0
      %611 = vmatmul.mubr.f32.gmra.mrb[0].mxu0 %v481
      %v612 = vpop.f32.mrb[0].mxu0
      %v613 = vadd.f32 0.0, %v612
      %v614 = vpop.f32.mrb[0].mxu0
      %615 = vmatprep.mubr.f32.mxu0 0.0
      %616 = vmatmul.mubr.f32.gmra.mrb[0].mxu0 %v484
      %v617 = vpop.f32.mrb[0].mxu0
      %v618 = vadd.f32 0.0, %v617
      %v619 = vpop.f32.mrb[0].mxu0
      %620 = vmatprep.mubr.f32.mxu0 0.0
      %621 = vmatmul.mubr.f32.gmra.mrb[0].mxu0 %v487
      %v622 = vpop.f32.mrb[0].mxu0
      %v623 = vadd.f32 0.0, %v622
      %v624 = vpop.f32.mrb[0].mxu0
      %625 = vmatprep.mubr.f32.mxu0 0.0
      %626 = vmatmul.mubr.f32.gmra.mrb[0].mxu0 %v490
      %v627 = vpop.f32.mrb[0].mxu0
      %v628 = vadd.f32 0.0, %v627
      %v629 = vpop.f32.mrb[0].mxu0
      %630 = vmatprep.mubr.f32.mxu0 0.0
      %631 = vmatmul.mubr.f32.gmra.mrb[0].mxu0 %v493
      %v632 = vpop.f32.mrb[0].mxu0
      %v633 = vadd.f32 0.0, %v632
      %v634 = vpop.f32.mrb[0].mxu0
      %635 = vmatprep.mubr.f32.mxu0 0.0
      %636 = vmatmul.mubr.f32.gmra.mrb[0].mxu0 %v496
      %v637 = vpop.f32.mrb[0].mxu0
      %v638 = vadd.f32 0.0, %v637
      %v639 = vpop.f32.mrb[0].mxu0
      %640 = vmatprep.mubr.f32.mxu0 0.0
      %641 = vmatmul.mubr.f32.gmra.mrb[0].mxu0 %v499
      %v642 = vpop.f32.mrb[0].mxu0
      %v643 = vadd.f32 0.0, %v642
      %v644 = vpop.f32.mrb[0].mxu0
      %645 = vmatprep.mubr.f32.mxu0 0.0
      %646 = vmatmul.mubr.f32.gmra.mrb[0].mxu0 %v502
      %v647 = vpop.f32.mrb[0].mxu0
      %v648 = vadd.f32 0.0, %v647
      %v649 = vpop.f32.mrb[0].mxu0
      %650 = vmatprep.mubr.f32.mxu0 0.0
      %651 = vmatmul.mubr.f32.gmra.mrb[0].mxu0 %v505
      %v652 = vpop.f32.mrb[0].mxu0
      %v653 = vadd.f32 0.0, %v652
      %v654 = vpop.f32.mrb[0].mxu0
      %655 = vmatprep.mubr.f32.mxu0 0.0
      %656 = vmatmul.mubr.f32.gmra.mrb[0].mxu0 %v508
      %v657 = vpop.f32.mrb[0].mxu0
      %v658 = vadd.f32 0.0, %v657
      %v659 = vpop.f32.mrb[0].mxu0
      %660 = vmatprep.mubr.f32.mxu0 0.0
      %661 = vmatmul.mubr.f32.gmra.mrb[0].mxu0 %v511
      %v662 = vpop.f32.mrb[0].mxu0
      %v663 = vadd.f32 0.0, %v662
      %v664 = vpop.f32.mrb[0].mxu0
      %665 = vmatprep.mubr.f32.mxu0 0.0
      %666 = vmatmul.mubr.f32.gmra.mrb[0].mxu0 %v514
      %v667 = vpop.f32.mrb[0].mxu0
      %v668 = vadd.f32 0.0, %v667
      %v669 = vpop.f32.mrb[0].mxu0
      %670 = vmatprep.mubr.f32.mxu0 0.0
      %671 = vmatmul.mubr.f32.gmra.mrb[0].mxu0 %v517
      %v672 = vpop.f32.mrb[0].mxu0
      %v673 = vadd.f32 0.0, %v672
      %v674 = vpop.f32.mrb[0].mxu0
      %675 = vmatprep.mubr.f32.mxu0 0.0
      %676 = vmatmul.mubr.f32.gmra.mrb[0].mxu0 %v520
      %v677 = vpop.f32.mrb[0].mxu0
      %v678 = vadd.f32 0.0, %v677
      %v679 = vpop.f32.mrb[0].mxu0
      %680 = vmatprep.mubr.f32.mxu0 0.0
      %681 = vmatmul.mubr.f32.gmra.mrb[0].mxu0 %v523
      %v682 = vpop.f32.mrb[0].mxu0
      %v683 = vadd.f32 0.0, %v682
      %v684 = vpop.f32.mrb[0].mxu0
      %685 = vmatprep.mubr.f32.mxu0 0.0
      %686 = vmatmul.mubr.f32.gmra.mrb[0].mxu0 %v526
      %v687 = vpop.f32.mrb[0].mxu0
      %v688 = vadd.f32 0.0, %v687
      %v689 = vpop.f32.mrb[0].mxu0
      %690 = vmatprep.mubr.f32.mxu0 0.0
      %691 = vmatmul.mubr.f32.gmra.mrb[0].mxu0 %v529
      %v692 = vpop.f32.mrb[0].mxu0
      %v693 = vadd.f32 0.0, %v692
      %v694 = vpop.f32.mrb[0].mxu0
      %695 = vmatprep.mubr.f32.mxu0 0.0
      %696 = vmatmul.mubr.f32.gmra.mrb[0].mxu0 %v532
      %v697 = vpop.f32.mrb[0].mxu0
      %v698 = vadd.f32 0.0, %v697
      %v699 = vpop.f32.mrb[0].mxu0
      %700 = vmatprep.mubr.f32.mxu0 0.0
      %701 = vmatmul.mubr.f32.gmra.mrb[0].mxu0 %v535
      %v702 = vpop.f32.mrb[0].mxu0
      %v703 = vadd.f32 0.0, %v702
      %v704 = vpop.f32.mrb[0].mxu0
      %705 = vdwg.mxu0
      %v707 = vsel %vm476, %v433, 0
      %v710 = vsel %vm476, %v434, 0
      %v713 = vsel %vm476, %v435, 0
      %v716 = vsel %vm476, %v436, 0
      %v719 = vsel %vm476, %v437, 0
      %v722 = vsel %vm476, %v438, 0
      %v725 = vsel %vm476, %v439, 0
      %v728 = vsel %vm476, %v440, 0
      %v731 = vsel %vm476, %v441, 0
      %v734 = vsel %vm476, %v442, 0
      %v737 = vsel %vm476, %v443, 0
      %v740 = vsel %vm476, %v444, 0
      %v743 = vsel %vm476, %v445, 0
      %v746 = vsel %vm476, %v446, 0
      %v749 = vsel %vm476, %v447, 0
      %v752 = vsel %vm476, %v448, 0
      %v755 = vsel %vm476, %v449, 0
      %v758 = vsel %vm476, %v450, 0
      %v761 = vsel %vm476, %v451, 0
      %v764 = vsel %vm476, %v452, 0
      %v767 = vsel %vm537, %v453, 0
      %769 = vmatprep.subr.mxu0 0.0
      %770 = vmatpush1.msra.mxu0 %v767
      %771 = vmatprep.subr.mxu0 0.0
      %772 = vmatpush1.msra.mxu0 0.0
      %773 = vmatprep.subr.mxu0 0.0
      %774 = vmatpush1.msra.mxu0 0.0
      %775 = vmatprep.subr.mxu0 0.0
      %776 = vmatpush1.msra.mxu0 0.0
      %777 = vmatprep.subr.mxu0 0.0
      %778 = vmatpush1.msra.mxu0 0.0
      %779 = vmatprep.subr.mxu0 0.0
      %780 = vmatpush1.msra.mxu0 0.0
      %781 = vmatprep.subr.mxu0 0.0
      %782 = vmatpush1.msra.mxu0 0.0
      %783 = vmatprep.subr.mxu0 0.0
      %784 = vmatpush1.msra.mxu0 0.0
      %785 = vmatprep.subr.mxu0 0.0
      %786 = vmatpush1.msra.mxu0 0.0
      %787 = vmatprep.subr.mxu0 0.0
      %788 = vmatpush1.msra.mxu0 0.0
      %789 = vmatprep.subr.mxu0 0.0
      %790 = vmatpush1.msra.mxu0 0.0
      %791 = vmatprep.subr.mxu0 0.0
      %792 = vmatpush1.msra.mxu0 0.0
      %793 = vmatprep.subr.mxu0 0.0
      %794 = vmatpush1.msra.mxu0 0.0
      %795 = vmatprep.subr.mxu0 0.0
      %796 = vmatpush1.msra.mxu0 0.0
      %797 = vmatprep.subr.mxu0 0.0
      %798 = vmatpush1.msra.mxu0 0.0
      %799 = vmatprep.subr.mxu0 0.0
      %800 = vmatpush1.msra.mxu0 0.0
      %801 = vmatprep.subr.mxu0 0.0
      %802 = vmatpush1.msra.mxu0 0.0
      %803 = vmatprep.subr.mxu0 0.0
      %804 = vmatpush1.msra.mxu0 0.0
      %805 = vmatprep.subr.mxu0 0.0
      %806 = vmatpush1.msra.mxu0 0.0
      %807 = vmatprep.subr.mxu0 0.0
      %808 = vmatpush1.msra.mxu0 0.0
      %809 = vmatprep.subr.mxu0 0.0
      %810 = vmatpush1.msra.mxu0 0.0
      %811 = vmatprep.subr.mxu0 0.0
      %812 = vmatpush1.msra.mxu0 0.0
      %813 = vmatprep.subr.mxu0 0.0
      %814 = vmatpush1.msra.mxu0 0.0
      %815 = vmatprep.subr.mxu0 0.0
      %816 = vmatpush1.msra.mxu0 0.0
      %817 = vmatprep.subr.mxu0 0.0
      %818 = vmatpush1.msra.mxu0 0.0
      %819 = vmatprep.subr.mxu0 0.0
      %820 = vmatpush1.msra.mxu0 0.0
      %821 = vmatprep.subr.mxu0 0.0
      %822 = vmatpush1.msra.mxu0 0.0
      %823 = vmatprep.subr.mxu0 0.0
      %824 = vmatpush1.msra.mxu0 0.0
      %825 = vmatprep.subr.mxu0 0.0
      %826 = vmatpush1.msra.mxu0 0.0
      %827 = vmatprep.subr.mxu0 0.0
      %828 = vmatpush1.msra.mxu0 0.0
      %829 = vmatprep.subr.mxu0 0.0
      %830 = vmatpush1.msra.mxu0 0.0
      %831 = vmatprep.subr.mxu0 0.0
      %832 = vmatpush1.msra.mxu0 0.0
      %833 = vmatprep.mubr.f32.mxu0 0.0
      %834 = vmatmul.mubr.f32.gmra.mrb[0].mxu0 %v707
      %v835 = vpop.f32.mrb[0].mxu0
      %v836 = vadd.f32 %v608, %v835
      %v837 = vpop.f32.mrb[0].mxu0
      %838 = vmatprep.mubr.f32.mxu0 0.0
      %839 = vmatmul.mubr.f32.gmra.mrb[0].mxu0 %v710
      %v840 = vpop.f32.mrb[0].mxu0
      %v841 = vadd.f32 %v613, %v840
      %v842 = vpop.f32.mrb[0].mxu0
      %843 = vmatprep.mubr.f32.mxu0 0.0
      %844 = vmatmul.mubr.f32.gmra.mrb[0].mxu0 %v713
      %v845 = vpop.f32.mrb[0].mxu0
      %v846 = vadd.f32 %v618, %v845
      %v847 = vpop.f32.mrb[0].mxu0
      %848 = vmatprep.mubr.f32.mxu0 0.0
      %849 = vmatmul.mubr.f32.gmra.mrb[0].mxu0 %v716
      %v850 = vpop.f32.mrb[0].mxu0
      %v851 = vadd.f32 %v623, %v850
      %v852 = vpop.f32.mrb[0].mxu0
      %853 = vmatprep.mubr.f32.mxu0 0.0
      %854 = vmatmul.mubr.f32.gmra.mrb[0].mxu0 %v719
      %v855 = vpop.f32.mrb[0].mxu0
      %v856 = vadd.f32 %v628, %v855
      %v857 = vpop.f32.mrb[0].mxu0
      %858 = vmatprep.mubr.f32.mxu0 0.0
      %859 = vmatmul.mubr.f32.gmra.mrb[0].mxu0 %v722
      %v860 = vpop.f32.mrb[0].mxu0
      %v861 = vadd.f32 %v633, %v860
      %v862 = vpop.f32.mrb[0].mxu0
      %863 = vmatprep.mubr.f32.mxu0 0.0
      %864 = vmatmul.mubr.f32.gmra.mrb[0].mxu0 %v725
      %v865 = vpop.f32.mrb[0].mxu0
      %v866 = vadd.f32 %v638, %v865
      %v867 = vpop.f32.mrb[0].mxu0
      %868 = vmatprep.mubr.f32.mxu0 0.0
      %869 = vmatmul.mubr.f32.gmra.mrb[0].mxu0 %v728
      %v870 = vpop.f32.mrb[0].mxu0
      %v871 = vadd.f32 %v643, %v870
      %v872 = vpop.f32.mrb[0].mxu0
      %873 = vmatprep.mubr.f32.mxu0 0.0
      %874 = vmatmul.mubr.f32.gmra.mrb[0].mxu0 %v731
      %v875 = vpop.f32.mrb[0].mxu0
      %v876 = vadd.f32 %v648, %v875
      %v877 = vpop.f32.mrb[0].mxu0
      %878 = vmatprep.mubr.f32.mxu0 0.0
      %879 = vmatmul.mubr.f32.gmra.mrb[0].mxu0 %v734
      %v880 = vpop.f32.mrb[0].mxu0
      %v881 = vadd.f32 %v653, %v880
      %v882 = vpop.f32.mrb[0].mxu0
      %883 = vmatprep.mubr.f32.mxu0 0.0
      %884 = vmatmul.mubr.f32.gmra.mrb[0].mxu0 %v737
      %v885 = vpop.f32.mrb[0].mxu0
      %v886 = vadd.f32 %v658, %v885
      %v887 = vpop.f32.mrb[0].mxu0
      %888 = vmatprep.mubr.f32.mxu0 0.0
      %889 = vmatmul.mubr.f32.gmra.mrb[0].mxu0 %v740
      %v890 = vpop.f32.mrb[0].mxu0
      %v891 = vadd.f32 %v663, %v890
      %v892 = vpop.f32.mrb[0].mxu0
      %893 = vmatprep.mubr.f32.mxu0 0.0
      %894 = vmatmul.mubr.f32.gmra.mrb[0].mxu0 %v743
      %v895 = vpop.f32.mrb[0].mxu0
      %v896 = vadd.f32 %v668, %v895
      %v897 = vpop.f32.mrb[0].mxu0
      %898 = vmatprep.mubr.f32.mxu0 0.0
      %899 = vmatmul.mubr.f32.gmra.mrb[0].mxu0 %v746
      %v900 = vpop.f32.mrb[0].mxu0
      %v901 = vadd.f32 %v673, %v900
      %v902 = vpop.f32.mrb[0].mxu0
      %903 = vmatprep.mubr.f32.mxu0 0.0
      %904 = vmatmul.mubr.f32.gmra.mrb[0].mxu0 %v749
      %v905 = vpop.f32.mrb[0].mxu0
      %v906 = vadd.f32 %v678, %v905
      %v907 = vpop.f32.mrb[0].mxu0
      %908 = vmatprep.mubr.f32.mxu0 0.0
      %909 = vmatmul.mubr.f32.gmra.mrb[0].mxu0 %v752
      %v910 = vpop.f32.mrb[0].mxu0
      %v911 = vadd.f32 %v683, %v910
      %v912 = vpop.f32.mrb[0].mxu0
      %913 = vmatprep.mubr.f32.mxu0 0.0
      %914 = vmatmul.mubr.f32.gmra.mrb[0].mxu0 %v755
      %v915 = vpop.f32.mrb[0].mxu0
      %v916 = vadd.f32 %v688, %v915
      %v917 = vpop.f32.mrb[0].mxu0
      %918 = vmatprep.mubr.f32.mxu0 0.0
      %919 = vmatmul.mubr.f32.gmra.mrb[0].mxu0 %v758
      %v920 = vpop.f32.mrb[0].mxu0
      %v921 = vadd.f32 %v693, %v920
      %v922 = vpop.f32.mrb[0].mxu0
      %923 = vmatprep.mubr.f32.mxu0 0.0
      %924 = vmatmul.mubr.f32.gmra.mrb[0].mxu0 %v761
      %v925 = vpop.f32.mrb[0].mxu0
      %v926 = vadd.f32 %v698, %v925
      %v927 = vpop.f32.mrb[0].mxu0
      %928 = vmatprep.mubr.f32.mxu0 0.0
      %929 = vmatmul.mubr.f32.gmra.mrb[0].mxu0 %v764
      %v930 = vpop.f32.mrb[0].mxu0
      %v931 = vadd.f32 %v703, %v930
      %v932 = vpop.f32.mrb[0].mxu0
      %933 = vdwg.mxu0
      %v934 = vld [vmem:[#allocation2 + $0x2] sm:$0xff]
      %v935 = vld [vmem:[#allocation2 + $0xa] sm:$0xff]
      %v936 = vld [vmem:[#allocation2 + $0x1a] sm:$0xff]
      %v937 = vld [vmem:[#allocation2 + $0x22] sm:$0xff]
      %v938 = vld [vmem:[#allocation2 + $0x32] sm:$0xff]
      %v939 = vld [vmem:[#allocation2 + $0x3a] sm:$0xff]
      %v940 = vld [vmem:[#allocation2 + $0x4a] sm:$0xff]
      %v941 = vld [vmem:[#allocation2 + $0x52] sm:$0xff]
      %v942 = vld [vmem:[#allocation2 + $0x62] sm:$0xff]
      %v943 = vld [vmem:[#allocation2 + $0x6a] sm:$0xff]
      %v944 = vld [vmem:[#allocation2 + $0x7a] sm:$0xff]
      %v945 = vld [vmem:[#allocation2 + $0x82] sm:$0xff]
      %v946 = vld [vmem:[#allocation2 + $0x92] sm:$0xff]
      %v947 = vld [vmem:[#allocation2 + $0x9a] sm:$0xff]
      %v948 = vld [vmem:[#allocation2 + $0xaa] sm:$0xff]
      %v949 = vld [vmem:[#allocation2 + $0xb2] sm:$0xff]
      %v950 = vld [vmem:[#allocation2 + $0xc2] sm:$0xff]
      %v951 = vld [vmem:[#allocation2 + $0xca] sm:$0xff]
      %v952 = vld [vmem:[#allocation2 + $0xda] sm:$0xff]
      %v953 = vld [vmem:[#allocation2 + $0xe2] sm:$0xff]
      %s954 = scalar_lea.vmem %s1, 8
      %v955 = vld [vmem:[%s954] sm:$0xf]
      %v957 = vsel %vm476, %v934, 0
      %v960 = vsel %vm476, %v935, 0
      %v963 = vsel %vm476, %v936, 0
      %v966 = vsel %vm476, %v937, 0
      %v969 = vsel %vm476, %v938, 0
      %v972 = vsel %vm476, %v939, 0
      %v975 = vsel %vm476, %v940, 0
      %v978 = vsel %vm476, %v941, 0
      %v981 = vsel %vm476, %v942, 0
      %v984 = vsel %vm476, %v943, 0
      %v987 = vsel %vm476, %v944, 0
      %v990 = vsel %vm476, %v945, 0
      %v993 = vsel %vm476, %v946, 0
      %v996 = vsel %vm476, %v947, 0
      %v999 = vsel %vm476, %v948, 0
      %v1002 = vsel %vm476, %v949, 0
      %v1005 = vsel %vm476, %v950, 0
      %v1008 = vsel %vm476, %v951, 0
      %v1011 = vsel %vm476, %v952, 0
      %v1014 = vsel %vm476, %v953, 0
      %v1017 = vsel %vm537, %v955, 0
      %1019 = vmatprep.subr.mxu0 0.0
      %1020 = vmatpush1.msra.mxu0 %v1017
      %1021 = vmatprep.subr.mxu0 0.0
      %1022 = vmatpush1.msra.mxu0 0.0
      %1023 = vmatprep.subr.mxu0 0.0
      %1024 = vmatpush1.msra.mxu0 0.0
      %1025 = vmatprep.subr.mxu0 0.0
      %1026 = vmatpush1.msra.mxu0 0.0
      %1027 = vmatprep.subr.mxu0 0.0
      %1028 = vmatpush1.msra.mxu0 0.0
      %1029 = vmatprep.subr.mxu0 0.0
      %1030 = vmatpush1.msra.mxu0 0.0
      %1031 = vmatprep.subr.mxu0 0.0
      %1032 = vmatpush1.msra.mxu0 0.0
      %1033 = vmatprep.subr.mxu0 0.0
      %1034 = vmatpush1.msra.mxu0 0.0
      %1035 = vmatprep.subr.mxu0 0.0
      %1036 = vmatpush1.msra.mxu0 0.0
      %1037 = vmatprep.subr.mxu0 0.0
      %1038 = vmatpush1.msra.mxu0 0.0
      %1039 = vmatprep.subr.mxu0 0.0
      %1040 = vmatpush1.msra.mxu0 0.0
      %1041 = vmatprep.subr.mxu0 0.0
      %1042 = vmatpush1.msra.mxu0 0.0
      %1043 = vmatprep.subr.mxu0 0.0
      %1044 = vmatpush1.msra.mxu0 0.0
      %1045 = vmatprep.subr.mxu0 0.0
      %1046 = vmatpush1.msra.mxu0 0.0
      %1047 = vmatprep.subr.mxu0 0.0
      %1048 = vmatpush1.msra.mxu0 0.0
      %1049 = vmatprep.subr.mxu0 0.0
      %1050 = vmatpush1.msra.mxu0 0.0
      %1051 = vmatprep.subr.mxu0 0.0
      %1052 = vmatpush1.msra.mxu0 0.0
      %1053 = vmatprep.subr.mxu0 0.0
      %1054 = vmatpush1.msra.mxu0 0.0
      %1055 = vmatprep.subr.mxu0 0.0
      %1056 = vmatpush1.msra.mxu0 0.0
      %1057 = vmatprep.subr.mxu0 0.0
      %1058 = vmatpush1.msra.mxu0 0.0
      %1059 = vmatprep.subr.mxu0 0.0
      %1060 = vmatpush1.msra.mxu0 0.0
      %1061 = vmatprep.subr.mxu0 0.0
      %1062 = vmatpush1.msra.mxu0 0.0
      %1063 = vmatprep.subr.mxu0 0.0
      %1064 = vmatpush1.msra.mxu0 0.0
      %1065 = vmatprep.subr.mxu0 0.0
      %1066 = vmatpush1.msra.mxu0 0.0
      %1067 = vmatprep.subr.mxu0 0.0
      %1068 = vmatpush1.msra.mxu0 0.0
      %1069 = vmatprep.subr.mxu0 0.0
      %1070 = vmatpush1.msra.mxu0 0.0
      %1071 = vmatprep.subr.mxu0 0.0
      %1072 = vmatpush1.msra.mxu0 0.0
      %1073 = vmatprep.subr.mxu0 0.0
      %1074 = vmatpush1.msra.mxu0 0.0
      %1075 = vmatprep.subr.mxu0 0.0
      %1076 = vmatpush1.msra.mxu0 0.0
      %1077 = vmatprep.subr.mxu0 0.0
      %1078 = vmatpush1.msra.mxu0 0.0
      %1079 = vmatprep.subr.mxu0 0.0
      %1080 = vmatpush1.msra.mxu0 0.0
      %1081 = vmatprep.subr.mxu0 0.0
      %1082 = vmatpush1.msra.mxu0 0.0
      %1083 = vmatprep.mubr.f32.mxu0 0.0
      %1084 = vmatmul.mubr.f32.gmra.mrb[0].mxu0 %v957
      %v1085 = vpop.f32.mrb[0].mxu0
      %v1086 = vadd.f32 0.0, %v1085
      %v1087 = vpop.f32.mrb[0].mxu0
      %1088 = vmatprep.mubr.f32.mxu0 0.0
      %1089 = vmatmul.mubr.f32.gmra.mrb[0].mxu0 %v960
      %v1090 = vpop.f32.mrb[0].mxu0
      %v1091 = vadd.f32 0.0, %v1090
      %v1092 = vpop.f32.mrb[0].mxu0
      %1093 = vmatprep.mubr.f32.mxu0 0.0
      %1094 = vmatmul.mubr.f32.gmra.mrb[0].mxu0 %v963
      %v1095 = vpop.f32.mrb[0].mxu0
      %v1096 = vadd.f32 0.0, %v1095
      %v1097 = vpop.f32.mrb[0].mxu0
      %1098 = vmatprep.mubr.f32.mxu0 0.0
      %1099 = vmatmul.mubr.f32.gmra.mrb[0].mxu0 %v966
      %v1100 = vpop.f32.mrb[0].mxu0
      %v1101 = vadd.f32 0.0, %v1100
      %v1102 = vpop.f32.mrb[0].mxu0
      %1103 = vmatprep.mubr.f32.mxu0 0.0
      %1104 = vmatmul.mubr.f32.gmra.mrb[0].mxu0 %v969
      %v1105 = vpop.f32.mrb[0].mxu0
      %v1106 = vadd.f32 0.0, %v1105
      %v1107 = vpop.f32.mrb[0].mxu0
      %1108 = vmatprep.mubr.f32.mxu0 0.0
      %1109 = vmatmul.mubr.f32.gmra.mrb[0].mxu0 %v972
      %v1110 = vpop.f32.mrb[0].mxu0
      %v1111 = vadd.f32 0.0, %v1110
      %v1112 = vpop.f32.mrb[0].mxu0
      %1113 = vmatprep.mubr.f32.mxu0 0.0
      %1114 = vmatmul.mubr.f32.gmra.mrb[0].mxu0 %v975
      %v1115 = vpop.f32.mrb[0].mxu0
      %v1116 = vadd.f32 0.0, %v1115
      %v1117 = vpop.f32.mrb[0].mxu0
      %1118 = vmatprep.mubr.f32.mxu0 0.0
      %1119 = vmatmul.mubr.f32.gmra.mrb[0].mxu0 %v978
      %v1120 = vpop.f32.mrb[0].mxu0
      %v1121 = vadd.f32 0.0, %v1120
      %v1122 = vpop.f32.mrb[0].mxu0
      %1123 = vmatprep.mubr.f32.mxu0 0.0
      %1124 = vmatmul.mubr.f32.gmra.mrb[0].mxu0 %v981
      %v1125 = vpop.f32.mrb[0].mxu0
      %v1126 = vadd.f32 0.0, %v1125
      %v1127 = vpop.f32.mrb[0].mxu0
      %1128 = vmatprep.mubr.f32.mxu0 0.0
      %1129 = vmatmul.mubr.f32.gmra.mrb[0].mxu0 %v984
      %v1130 = vpop.f32.mrb[0].mxu0
      %v1131 = vadd.f32 0.0, %v1130
      %v1132 = vpop.f32.mrb[0].mxu0
      %1133 = vmatprep.mubr.f32.mxu0 0.0
      %1134 = vmatmul.mubr.f32.gmra.mrb[0].mxu0 %v987
      %v1135 = vpop.f32.mrb[0].mxu0
      %v1136 = vadd.f32 0.0, %v1135
      %v1137 = vpop.f32.mrb[0].mxu0
      %1138 = vmatprep.mubr.f32.mxu0 0.0
      %1139 = vmatmul.mubr.f32.gmra.mrb[0].mxu0 %v990
      %v1140 = vpop.f32.mrb[0].mxu0
      %v1141 = vadd.f32 0.0, %v1140
      %v1142 = vpop.f32.mrb[0].mxu0
      %1143 = vmatprep.mubr.f32.mxu0 0.0
      %1144 = vmatmul.mubr.f32.gmra.mrb[0].mxu0 %v993
      %v1145 = vpop.f32.mrb[0].mxu0
      %v1146 = vadd.f32 0.0, %v1145
      %v1147 = vpop.f32.mrb[0].mxu0
      %1148 = vmatprep.mubr.f32.mxu0 0.0
      %1149 = vmatmul.mubr.f32.gmra.mrb[0].mxu0 %v996
      %v1150 = vpop.f32.mrb[0].mxu0
      %v1151 = vadd.f32 0.0, %v1150
      %v1152 = vpop.f32.mrb[0].mxu0
      %1153 = vmatprep.mubr.f32.mxu0 0.0
      %1154 = vmatmul.mubr.f32.gmra.mrb[0].mxu0 %v999
      %v1155 = vpop.f32.mrb[0].mxu0
      %v1156 = vadd.f32 0.0, %v1155
      %v1157 = vpop.f32.mrb[0].mxu0
      %1158 = vmatprep.mubr.f32.mxu0 0.0
      %1159 = vmatmul.mubr.f32.gmra.mrb[0].mxu0 %v1002
      %v1160 = vpop.f32.mrb[0].mxu0
      %v1161 = vadd.f32 0.0, %v1160
      %v1162 = vpop.f32.mrb[0].mxu0
      %1163 = vmatprep.mubr.f32.mxu0 0.0
      %1164 = vmatmul.mubr.f32.gmra.mrb[0].mxu0 %v1005
      %v1165 = vpop.f32.mrb[0].mxu0
      %v1166 = vadd.f32 0.0, %v1165
      %v1167 = vpop.f32.mrb[0].mxu0
      %1168 = vmatprep.mubr.f32.mxu0 0.0
      %1169 = vmatmul.mubr.f32.gmra.mrb[0].mxu0 %v1008
      %v1170 = vpop.f32.mrb[0].mxu0
      %v1171 = vadd.f32 0.0, %v1170
      %v1172 = vpop.f32.mrb[0].mxu0
      %1173 = vmatprep.mubr.f32.mxu0 0.0
      %1174 = vmatmul.mubr.f32.gmra.mrb[0].mxu0 %v1011
      %v1175 = vpop.f32.mrb[0].mxu0
      %v1176 = vadd.f32 0.0, %v1175
      %v1177 = vpop.f32.mrb[0].mxu0
      %1178 = vmatprep.mubr.f32.mxu0 0.0
      %1179 = vmatmul.mubr.f32.gmra.mrb[0].mxu0 %v1014
      %v1180 = vpop.f32.mrb[0].mxu0
      %v1181 = vadd.f32 0.0, %v1180
      %v1182 = vpop.f32.mrb[0].mxu0
      %1183 = vdwg.mxu0
      %v1184 = vadd.f32 %v836, %v1086
      %v1185 = vadd.f32 %v841, %v1091
      %v1186 = vadd.f32 %v846, %v1096
      %v1187 = vadd.f32 %v851, %v1101
      %v1188 = vadd.f32 %v856, %v1106
      %v1189 = vadd.f32 %v861, %v1111
      %v1190 = vadd.f32 %v866, %v1116
      %v1191 = vadd.f32 %v871, %v1121
      %v1192 = vadd.f32 %v876, %v1126
      %v1193 = vadd.f32 %v881, %v1131
      %v1194 = vadd.f32 %v886, %v1136
      %v1195 = vadd.f32 %v891, %v1141
      %v1196 = vadd.f32 %v896, %v1146
      %v1197 = vadd.f32 %v901, %v1151
      %v1198 = vadd.f32 %v906, %v1156
      %v1199 = vadd.f32 %v911, %v1161
      %v1200 = vadd.f32 %v916, %v1166
      %v1201 = vadd.f32 %v921, %v1171
      %v1202 = vadd.f32 %v926, %v1176
      %v1203 = vadd.f32 %v931, %v1181
      %s1204 = scalar_lea.vmem [#allocation2], 24
      %v1205 = vld [vmem:[%s1204] sm:$0xff]
      %v1206 = vld [vmem:[%s1204 + $0x8] sm:$0xff]
      %v1207 = vld [vmem:[%s1204 + $0x18] sm:$0xff]
      %v1208 = vld [vmem:[%s1204 + $0x20] sm:$0xff]
      %v1209 = vld [vmem:[%s1204 + $0x30] sm:$0xff]
      %v1210 = vld [vmem:[%s1204 + $0x38] sm:$0xff]
      %v1211 = vld [vmem:[%s1204 + $0x48] sm:$0xff]
      %v1212 = vld [vmem:[%s1204 + $0x50] sm:$0xff]
      %v1213 = vld [vmem:[%s1204 + $0x60] sm:$0xff]
      %v1214 = vld [vmem:[%s1204 + $0x68] sm:$0xff]
      %v1215 = vld [vmem:[%s1204 + $0x78] sm:$0xff]
      %v1216 = vld [vmem:[%s1204 + $0x80] sm:$0xff]
      %v1217 = vld [vmem:[%s1204 + $0x90] sm:$0xff]
      %v1218 = vld [vmem:[%s1204 + $0x98] sm:$0xff]
      %v1219 = vld [vmem:[%s1204 + $0xa8] sm:$0xff]
      %v1220 = vld [vmem:[%s1204 + $0xb0] sm:$0xff]
      %v1221 = vld [vmem:[%s1204 + $0xc0] sm:$0xff]
      %v1222 = vld [vmem:[%s1204 + $0xc8] sm:$0xff]
      %v1223 = vld [vmem:[%s1204 + $0xd8] sm:$0xff]
      %v1224 = vld [vmem:[%s1204 + $0xe0] sm:$0xff]
      %s1225 = scalar_lea.vmem %s1, 12
      %v1226 = vld [vmem:[%s1225] sm:$0xf]
      %v1228 = vsel %vm476, %v1205, 0
      %v1231 = vsel %vm476, %v1206, 0
      %v1234 = vsel %vm476, %v1207, 0
      %v1237 = vsel %vm476, %v1208, 0
      %v1240 = vsel %vm476, %v1209, 0
      %v1243 = vsel %vm476, %v1210, 0
      %v1246 = vsel %vm476, %v1211, 0
      %v1249 = vsel %vm476, %v1212, 0
      %v1252 = vsel %vm476, %v1213, 0
      %v1255 = vsel %vm476, %v1214, 0
      %v1258 = vsel %vm476, %v1215, 0
      %v1261 = vsel %vm476, %v1216, 0
      %v1264 = vsel %vm476, %v1217, 0
      %v1267 = vsel %vm476, %v1218, 0
      %v1270 = vsel %vm476, %v1219, 0
      %v1273 = vsel %vm476, %v1220, 0
      %v1276 = vsel %vm476, %v1221, 0
      %v1279 = vsel %vm476, %v1222, 0
      %v1282 = vsel %vm476, %v1223, 0
      %v1285 = vsel %vm476, %v1224, 0
      %v1288 = vsel %vm537, %v1226, 0
      %1290 = vmatprep.subr.mxu0 0.0
      %1291 = vmatpush1.msra.mxu0 %v1288
      %1292 = vmatprep.subr.mxu0 0.0
      %1293 = vmatpush1.msra.mxu0 0.0
      %1294 = vmatprep.subr.mxu0 0.0
      %1295 = vmatpush1.msra.mxu0 0.0
      %1296 = vmatprep.subr.mxu0 0.0
      %1297 = vmatpush1.msra.mxu0 0.0
      %1298 = vmatprep.subr.mxu0 0.0
      %1299 = vmatpush1.msra.mxu0 0.0
      %1300 = vmatprep.subr.mxu0 0.0
      %1301 = vmatpush1.msra.mxu0 0.0
      %1302 = vmatprep.subr.mxu0 0.0
      %1303 = vmatpush1.msra.mxu0 0.0
      %1304 = vmatprep.subr.mxu0 0.0
      %1305 = vmatpush1.msra.mxu0 0.0
      %1306 = vmatprep.subr.mxu0 0.0
      %1307 = vmatpush1.msra.mxu0 0.0
      %1308 = vmatprep.subr.mxu0 0.0
      %1309 = vmatpush1.msra.mxu0 0.0
      %1310 = vmatprep.subr.mxu0 0.0
      %1311 = vmatpush1.msra.mxu0 0.0
      %1312 = vmatprep.subr.mxu0 0.0
      %1313 = vmatpush1.msra.mxu0 0.0
      %1314 = vmatprep.subr.mxu0 0.0
      %1315 = vmatpush1.msra.mxu0 0.0
      %1316 = vmatprep.subr.mxu0 0.0
      %1317 = vmatpush1.msra.mxu0 0.0
      %1318 = vmatprep.subr.mxu0 0.0
      %1319 = vmatpush1.msra.mxu0 0.0
      %1320 = vmatprep.subr.mxu0 0.0
      %1321 = vmatpush1.msra.mxu0 0.0
      %1322 = vmatprep.subr.mxu0 0.0
      %1323 = vmatpush1.msra.mxu0 0.0
      %1324 = vmatprep.subr.mxu0 0.0
      %1325 = vmatpush1.msra.mxu0 0.0
      %1326 = vmatprep.subr.mxu0 0.0
      %1327 = vmatpush1.msra.mxu0 0.0
      %1328 = vmatprep.subr.mxu0 0.0
      %1329 = vmatpush1.msra.mxu0 0.0
      %1330 = vmatprep.subr.mxu0 0.0
      %1331 = vmatpush1.msra.mxu0 0.0
      %1332 = vmatprep.subr.mxu0 0.0
      %1333 = vmatpush1.msra.mxu0 0.0
      %1334 = vmatprep.subr.mxu0 0.0
      %1335 = vmatpush1.msra.mxu0 0.0
      %1336 = vmatprep.subr.mxu0 0.0
      %1337 = vmatpush1.msra.mxu0 0.0
      %1338 = vmatprep.subr.mxu0 0.0
      %1339 = vmatpush1.msra.mxu0 0.0
      %1340 = vmatprep.subr.mxu0 0.0
      %1341 = vmatpush1.msra.mxu0 0.0
      %1342 = vmatprep.subr.mxu0 0.0
      %1343 = vmatpush1.msra.mxu0 0.0
      %1344 = vmatprep.subr.mxu0 0.0
      %1345 = vmatpush1.msra.mxu0 0.0
      %1346 = vmatprep.subr.mxu0 0.0
      %1347 = vmatpush1.msra.mxu0 0.0
      %1348 = vmatprep.subr.mxu0 0.0
      %1349 = vmatpush1.msra.mxu0 0.0
      %1350 = vmatprep.subr.mxu0 0.0
      %1351 = vmatpush1.msra.mxu0 0.0
      %1352 = vmatprep.subr.mxu0 0.0
      %1353 = vmatpush1.msra.mxu0 0.0
      %1354 = vmatprep.mubr.f32.mxu0 0.0
      %1355 = vmatmul.mubr.f32.gmra.mrb[0].mxu0 %v1228
      %v1356 = vpop.f32.mrb[0].mxu0
      %v1357 = vadd.f32 0.0, %v1356
      %v1358 = vpop.f32.mrb[0].mxu0
      %1359 = vmatprep.mubr.f32.mxu0 0.0
      %1360 = vmatmul.mubr.f32.gmra.mrb[0].mxu0 %v1231
      %v1361 = vpop.f32.mrb[0].mxu0
      %v1362 = vadd.f32 0.0, %v1361
      %v1363 = vpop.f32.mrb[0].mxu0
      %1364 = vmatprep.mubr.f32.mxu0 0.0
      %1365 = vmatmul.mubr.f32.gmra.mrb[0].mxu0 %v1234
      %v1366 = vpop.f32.mrb[0].mxu0
      %v1367 = vadd.f32 0.0, %v1366
      %v1368 = vpop.f32.mrb[0].mxu0
      %1369 = vmatprep.mubr.f32.mxu0 0.0
      %1370 = vmatmul.mubr.f32.gmra.mrb[0].mxu0 %v1237
      %v1371 = vpop.f32.mrb[0].mxu0
      %v1372 = vadd.f32 0.0, %v1371
      %v1373 = vpop.f32.mrb[0].mxu0
      %1374 = vmatprep.mubr.f32.mxu0 0.0
      %1375 = vmatmul.mubr.f32.gmra.mrb[0].mxu0 %v1240
      %v1376 = vpop.f32.mrb[0].mxu0
      %v1377 = vadd.f32 0.0, %v1376
      %v1378 = vpop.f32.mrb[0].mxu0
      %1379 = vmatprep.mubr.f32.mxu0 0.0
      %1380 = vmatmul.mubr.f32.gmra.mrb[0].mxu0 %v1243
      %v1381 = vpop.f32.mrb[0].mxu0
      %v1382 = vadd.f32 0.0, %v1381
      %v1383 = vpop.f32.mrb[0].mxu0
      %1384 = vmatprep.mubr.f32.mxu0 0.0
      %1385 = vmatmul.mubr.f32.gmra.mrb[0].mxu0 %v1246
      %v1386 = vpop.f32.mrb[0].mxu0
      %v1387 = vadd.f32 0.0, %v1386
      %v1388 = vpop.f32.mrb[0].mxu0
      %1389 = vmatprep.mubr.f32.mxu0 0.0
      %1390 = vmatmul.mubr.f32.gmra.mrb[0].mxu0 %v1249
      %v1391 = vpop.f32.mrb[0].mxu0
      %v1392 = vadd.f32 0.0, %v1391
      %v1393 = vpop.f32.mrb[0].mxu0
      %1394 = vmatprep.mubr.f32.mxu0 0.0
      %1395 = vmatmul.mubr.f32.gmra.mrb[0].mxu0 %v1252
      %v1396 = vpop.f32.mrb[0].mxu0
      %v1397 = vadd.f32 0.0, %v1396
      %v1398 = vpop.f32.mrb[0].mxu0
      %1399 = vmatprep.mubr.f32.mxu0 0.0
      %1400 = vmatmul.mubr.f32.gmra.mrb[0].mxu0 %v1255
      %v1401 = vpop.f32.mrb[0].mxu0
      %v1402 = vadd.f32 0.0, %v1401
      %v1403 = vpop.f32.mrb[0].mxu0
      %1404 = vmatprep.mubr.f32.mxu0 0.0
      %1405 = vmatmul.mubr.f32.gmra.mrb[0].mxu0 %v1258
      %v1406 = vpop.f32.mrb[0].mxu0
      %v1407 = vadd.f32 0.0, %v1406
      %v1408 = vpop.f32.mrb[0].mxu0
      %1409 = vmatprep.mubr.f32.mxu0 0.0
      %1410 = vmatmul.mubr.f32.gmra.mrb[0].mxu0 %v1261
      %v1411 = vpop.f32.mrb[0].mxu0
      %v1412 = vadd.f32 0.0, %v1411
      %v1413 = vpop.f32.mrb[0].mxu0
      %1414 = vmatprep.mubr.f32.mxu0 0.0
      %1415 = vmatmul.mubr.f32.gmra.mrb[0].mxu0 %v1264
      %v1416 = vpop.f32.mrb[0].mxu0
      %v1417 = vadd.f32 0.0, %v1416
      %v1418 = vpop.f32.mrb[0].mxu0
      %1419 = vmatprep.mubr.f32.mxu0 0.0
      %1420 = vmatmul.mubr.f32.gmra.mrb[0].mxu0 %v1267
      %v1421 = vpop.f32.mrb[0].mxu0
      %v1422 = vadd.f32 0.0, %v1421
      %v1423 = vpop.f32.mrb[0].mxu0
      %1424 = vmatprep.mubr.f32.mxu0 0.0
      %1425 = vmatmul.mubr.f32.gmra.mrb[0].mxu0 %v1270
      %v1426 = vpop.f32.mrb[0].mxu0
      %v1427 = vadd.f32 0.0, %v1426
      %v1428 = vpop.f32.mrb[0].mxu0
      %1429 = vmatprep.mubr.f32.mxu0 0.0
      %1430 = vmatmul.mubr.f32.gmra.mrb[0].mxu0 %v1273
      %v1431 = vpop.f32.mrb[0].mxu0
      %v1432 = vadd.f32 0.0, %v1431
      %v1433 = vpop.f32.mrb[0].mxu0
      %1434 = vmatprep.mubr.f32.mxu0 0.0
      %1435 = vmatmul.mubr.f32.gmra.mrb[0].mxu0 %v1276
      %v1436 = vpop.f32.mrb[0].mxu0
      %v1437 = vadd.f32 0.0, %v1436
      %v1438 = vpop.f32.mrb[0].mxu0
      %1439 = vmatprep.mubr.f32.mxu0 0.0
      %1440 = vmatmul.mubr.f32.gmra.mrb[0].mxu0 %v1279
      %v1441 = vpop.f32.mrb[0].mxu0
      %v1442 = vadd.f32 0.0, %v1441
      %v1443 = vpop.f32.mrb[0].mxu0
      %1444 = vmatprep.mubr.f32.mxu0 0.0
      %1445 = vmatmul.mubr.f32.gmra.mrb[0].mxu0 %v1282
      %v1446 = vpop.f32.mrb[0].mxu0
      %v1447 = vadd.f32 0.0, %v1446
      %v1448 = vpop.f32.mrb[0].mxu0
      %1449 = vmatprep.mubr.f32.mxu0 0.0
      %1450 = vmatmul.mubr.f32.gmra.mrb[0].mxu0 %v1285
      %v1451 = vpop.f32.mrb[0].mxu0
      %v1452 = vadd.f32 0.0, %v1451
      %v1453 = vpop.f32.mrb[0].mxu0
      %1454 = vdwg.mxu0
      %v1455 = vadd.f32 %v1184, %v1357
      %v1456 = vadd.f32 %v1185, %v1362
      %v1457 = vadd.f32 %v1186, %v1367
      %v1458 = vadd.f32 %v1187, %v1372
      %v1459 = vadd.f32 %v1188, %v1377
      %v1460 = vadd.f32 %v1189, %v1382
      %v1461 = vadd.f32 %v1190, %v1387
      %v1462 = vadd.f32 %v1191, %v1392
      %v1463 = vadd.f32 %v1192, %v1397
      %v1464 = vadd.f32 %v1193, %v1402
      %v1465 = vadd.f32 %v1194, %v1407
      %v1466 = vadd.f32 %v1195, %v1412
      %v1467 = vadd.f32 %v1196, %v1417
      %v1468 = vadd.f32 %v1197, %v1422
      %v1469 = vadd.f32 %v1198, %v1427
      %v1470 = vadd.f32 %v1199, %v1432
      %v1471 = vadd.f32 %v1200, %v1437
      %v1472 = vadd.f32 %v1201, %v1442
      %v1473 = vadd.f32 %v1202, %v1447
      %v1474 = vadd.f32 %v1203, %v1452
      %v1475 = vld [vmem:[%s1204 + $0x1] sm:$0xff]
      %v1476 = vld [vmem:[%s1204 + $0x9] sm:$0xff]
      %v1477 = vld [vmem:[%s1204 + $0x19] sm:$0xff]
      %v1478 = vld [vmem:[%s1204 + $0x21] sm:$0xff]
      %v1479 = vld [vmem:[%s1204 + $0x31] sm:$0xff]
      %v1480 = vld [vmem:[%s1204 + $0x39] sm:$0xff]
      %v1481 = vld [vmem:[%s1204 + $0x49] sm:$0xff]
      %v1482 = vld [vmem:[%s1204 + $0x51] sm:$0xff]
      %v1483 = vld [vmem:[%s1204 + $0x61] sm:$0xff]
      %v1484 = vld [vmem:[%s1204 + $0x69] sm:$0xff]
      %v1485 = vld [vmem:[%s1204 + $0x79] sm:$0xff]
      %v1486 = vld [vmem:[%s1204 + $0x81] sm:$0xff]
      %v1487 = vld [vmem:[%s1204 + $0x91] sm:$0xff]
      %v1488 = vld [vmem:[%s1204 + $0x99] sm:$0xff]
      %v1489 = vld [vmem:[%s1204 + $0xa9] sm:$0xff]
      %v1490 = vld [vmem:[%s1204 + $0xb1] sm:$0xff]
      %v1491 = vld [vmem:[%s1204 + $0xc1] sm:$0xff]
      %v1492 = vld [vmem:[%s1204 + $0xc9] sm:$0xff]
      %v1493 = vld [vmem:[%s1204 + $0xd9] sm:$0xff]
      %v1494 = vld [vmem:[%s1204 + $0xe1] sm:$0xff]
      %s1495 = scalar_lea.vmem %s1, 16
      %v1496 = vld [vmem:[%s1495] sm:$0xf]
      %v1498 = vsel %vm476, %v1475, 0
      %v1501 = vsel %vm476, %v1476, 0
      %v1504 = vsel %vm476, %v1477, 0
      %v1507 = vsel %vm476, %v1478, 0
      %v1510 = vsel %vm476, %v1479, 0
      %v1513 = vsel %vm476, %v1480, 0
      %v1516 = vsel %vm476, %v1481, 0
      %v1519 = vsel %vm476, %v1482, 0
      %v1522 = vsel %vm476, %v1483, 0
      %v1525 = vsel %vm476, %v1484, 0
      %v1528 = vsel %vm476, %v1485, 0
      %v1531 = vsel %vm476, %v1486, 0
      %v1534 = vsel %vm476, %v1487, 0
      %v1537 = vsel %vm476, %v1488, 0
      %v1540 = vsel %vm476, %v1489, 0
      %v1543 = vsel %vm476, %v1490, 0
      %v1546 = vsel %vm476, %v1491, 0
      %v1549 = vsel %vm476, %v1492, 0
      %v1552 = vsel %vm476, %v1493, 0
      %v1555 = vsel %vm476, %v1494, 0
      %v1558 = vsel %vm537, %v1496, 0
      %1560 = vmatprep.subr.mxu0 0.0
      %1561 = vmatpush1.msra.mxu0 %v1558
      %1562 = vmatprep.subr.mxu0 0.0
      %1563 = vmatpush1.msra.mxu0 0.0
      %1564 = vmatprep.subr.mxu0 0.0
      %1565 = vmatpush1.msra.mxu0 0.0
      %1566 = vmatprep.subr.mxu0 0.0
      %1567 = vmatpush1.msra.mxu0 0.0
      %1568 = vmatprep.subr.mxu0 0.0
      %1569 = vmatpush1.msra.mxu0 0.0
      %1570 = vmatprep.subr.mxu0 0.0
      %1571 = vmatpush1.msra.mxu0 0.0
      %1572 = vmatprep.subr.mxu0 0.0
      %1573 = vmatpush1.msra.mxu0 0.0
      %1574 = vmatprep.subr.mxu0 0.0
      %1575 = vmatpush1.msra.mxu0 0.0
      %1576 = vmatprep.subr.mxu0 0.0
      %1577 = vmatpush1.msra.mxu0 0.0
      %1578 = vmatprep.subr.mxu0 0.0
      %1579 = vmatpush1.msra.mxu0 0.0
      %1580 = vmatprep.subr.mxu0 0.0
      %1581 = vmatpush1.msra.mxu0 0.0
      %1582 = vmatprep.subr.mxu0 0.0
      %1583 = vmatpush1.msra.mxu0 0.0
      %1584 = vmatprep.subr.mxu0 0.0
      %1585 = vmatpush1.msra.mxu0 0.0
      %1586 = vmatprep.subr.mxu0 0.0
      %1587 = vmatpush1.msra.mxu0 0.0
      %1588 = vmatprep.subr.mxu0 0.0
      %1589 = vmatpush1.msra.mxu0 0.0
      %1590 = vmatprep.subr.mxu0 0.0
      %1591 = vmatpush1.msra.mxu0 0.0
      %1592 = vmatprep.subr.mxu0 0.0
      %1593 = vmatpush1.msra.mxu0 0.0
      %1594 = vmatprep.subr.mxu0 0.0
      %1595 = vmatpush1.msra.mxu0 0.0
      %1596 = vmatprep.subr.mxu0 0.0
      %1597 = vmatpush1.msra.mxu0 0.0
      %1598 = vmatprep.subr.mxu0 0.0
      %1599 = vmatpush1.msra.mxu0 0.0
      %1600 = vmatprep.subr.mxu0 0.0
      %1601 = vmatpush1.msra.mxu0 0.0
      %1602 = vmatprep.subr.mxu0 0.0
      %1603 = vmatpush1.msra.mxu0 0.0
      %1604 = vmatprep.subr.mxu0 0.0
      %1605 = vmatpush1.msra.mxu0 0.0
      %1606 = vmatprep.subr.mxu0 0.0
      %1607 = vmatpush1.msra.mxu0 0.0
      %1608 = vmatprep.subr.mxu0 0.0
      %1609 = vmatpush1.msra.mxu0 0.0
      %1610 = vmatprep.subr.mxu0 0.0
      %1611 = vmatpush1.msra.mxu0 0.0
      %1612 = vmatprep.subr.mxu0 0.0
      %1613 = vmatpush1.msra.mxu0 0.0
      %1614 = vmatprep.subr.mxu0 0.0
      %1615 = vmatpush1.msra.mxu0 0.0
      %1616 = vmatprep.subr.mxu0 0.0
      %1617 = vmatpush1.msra.mxu0 0.0
      %1618 = vmatprep.subr.mxu0 0.0
      %1619 = vmatpush1.msra.mxu0 0.0
      %1620 = vmatprep.subr.mxu0 0.0
      %1621 = vmatpush1.msra.mxu0 0.0
      %1622 = vmatprep.subr.mxu0 0.0
      %1623 = vmatpush1.msra.mxu0 0.0
      %1624 = vmatprep.mubr.f32.mxu0 0.0
      %1625 = vmatmul.mubr.f32.gmra.mrb[0].mxu0 %v1498
      %v1626 = vpop.f32.mrb[0].mxu0
      %v1627 = vadd.f32 0.0, %v1626
      %v1628 = vpop.f32.mrb[0].mxu0
      %1629 = vmatprep.mubr.f32.mxu0 0.0
      %1630 = vmatmul.mubr.f32.gmra.mrb[0].mxu0 %v1501
      %v1631 = vpop.f32.mrb[0].mxu0
      %v1632 = vadd.f32 0.0, %v1631
      %v1633 = vpop.f32.mrb[0].mxu0
      %1634 = vmatprep.mubr.f32.mxu0 0.0
      %1635 = vmatmul.mubr.f32.gmra.mrb[0].mxu0 %v1504
      %v1636 = vpop.f32.mrb[0].mxu0
      %v1637 = vadd.f32 0.0, %v1636
      %v1638 = vpop.f32.mrb[0].mxu0
      %1639 = vmatprep.mubr.f32.mxu0 0.0
      %1640 = vmatmul.mubr.f32.gmra.mrb[0].mxu0 %v1507
      %v1641 = vpop.f32.mrb[0].mxu0
      %v1642 = vadd.f32 0.0, %v1641
      %v1643 = vpop.f32.mrb[0].mxu0
      %1644 = vmatprep.mubr.f32.mxu0 0.0
      %1645 = vmatmul.mubr.f32.gmra.mrb[0].mxu0 %v1510
      %v1646 = vpop.f32.mrb[0].mxu0
      %v1647 = vadd.f32 0.0, %v1646
      %v1648 = vpop.f32.mrb[0].mxu0
      %1649 = vmatprep.mubr.f32.mxu0 0.0
      %1650 = vmatmul.mubr.f32.gmra.mrb[0].mxu0 %v1513
      %v1651 = vpop.f32.mrb[0].mxu0
      %v1652 = vadd.f32 0.0, %v1651
      %v1653 = vpop.f32.mrb[0].mxu0
      %1654 = vmatprep.mubr.f32.mxu0 0.0
      %1655 = vmatmul.mubr.f32.gmra.mrb[0].mxu0 %v1516
      %v1656 = vpop.f32.mrb[0].mxu0
      %v1657 = vadd.f32 0.0, %v1656
      %v1658 = vpop.f32.mrb[0].mxu0
      %1659 = vmatprep.mubr.f32.mxu0 0.0
      %1660 = vmatmul.mubr.f32.gmra.mrb[0].mxu0 %v1519
      %v1661 = vpop.f32.mrb[0].mxu0
      %v1662 = vadd.f32 0.0, %v1661
      %v1663 = vpop.f32.mrb[0].mxu0
      %1664 = vmatprep.mubr.f32.mxu0 0.0
      %1665 = vmatmul.mubr.f32.gmra.mrb[0].mxu0 %v1522
      %v1666 = vpop.f32.mrb[0].mxu0
      %v1667 = vadd.f32 0.0, %v1666
      %v1668 = vpop.f32.mrb[0].mxu0
      %1669 = vmatprep.mubr.f32.mxu0 0.0
      %1670 = vmatmul.mubr.f32.gmra.mrb[0].mxu0 %v1525
      %v1671 = vpop.f32.mrb[0].mxu0
      %v1672 = vadd.f32 0.0, %v1671
      %v1673 = vpop.f32.mrb[0].mxu0
      %1674 = vmatprep.mubr.f32.mxu0 0.0
      %1675 = vmatmul.mubr.f32.gmra.mrb[0].mxu0 %v1528
      %v1676 = vpop.f32.mrb[0].mxu0
      %v1677 = vadd.f32 0.0, %v1676
      %v1678 = vpop.f32.mrb[0].mxu0
      %1679 = vmatprep.mubr.f32.mxu0 0.0
      %1680 = vmatmul.mubr.f32.gmra.mrb[0].mxu0 %v1531
      %v1681 = vpop.f32.mrb[0].mxu0
      %v1682 = vadd.f32 0.0, %v1681
      %v1683 = vpop.f32.mrb[0].mxu0
      %1684 = vmatprep.mubr.f32.mxu0 0.0
      %1685 = vmatmul.mubr.f32.gmra.mrb[0].mxu0 %v1534
      %v1686 = vpop.f32.mrb[0].mxu0
      %v1687 = vadd.f32 0.0, %v1686
      %v1688 = vpop.f32.mrb[0].mxu0
      %1689 = vmatprep.mubr.f32.mxu0 0.0
      %1690 = vmatmul.mubr.f32.gmra.mrb[0].mxu0 %v1537
      %v1691 = vpop.f32.mrb[0].mxu0
      %v1692 = vadd.f32 0.0, %v1691
      %v1693 = vpop.f32.mrb[0].mxu0
      %1694 = vmatprep.mubr.f32.mxu0 0.0
      %1695 = vmatmul.mubr.f32.gmra.mrb[0].mxu0 %v1540
      %v1696 = vpop.f32.mrb[0].mxu0
      %v1697 = vadd.f32 0.0, %v1696
      %v1698 = vpop.f32.mrb[0].mxu0
      %1699 = vmatprep.mubr.f32.mxu0 0.0
      %1700 = vmatmul.mubr.f32.gmra.mrb[0].mxu0 %v1543
      %v1701 = vpop.f32.mrb[0].mxu0
      %v1702 = vadd.f32 0.0, %v1701
      %v1703 = vpop.f32.mrb[0].mxu0
      %1704 = vmatprep.mubr.f32.mxu0 0.0
      %1705 = vmatmul.mubr.f32.gmra.mrb[0].mxu0 %v1546
      %v1706 = vpop.f32.mrb[0].mxu0
      %v1707 = vadd.f32 0.0, %v1706
      %v1708 = vpop.f32.mrb[0].mxu0
      %1709 = vmatprep.mubr.f32.mxu0 0.0
      %1710 = vmatmul.mubr.f32.gmra.mrb[0].mxu0 %v1549
      %v1711 = vpop.f32.mrb[0].mxu0
      %v1712 = vadd.f32 0.0, %v1711
      %v1713 = vpop.f32.mrb[0].mxu0
      %1714 = vmatprep.mubr.f32.mxu0 0.0
      %1715 = vmatmul.mubr.f32.gmra.mrb[0].mxu0 %v1552
      %v1716 = vpop.f32.mrb[0].mxu0
      %v1717 = vadd.f32 0.0, %v1716
      %v1718 = vpop.f32.mrb[0].mxu0
      %1719 = vmatprep.mubr.f32.mxu0 0.0
      %1720 = vmatmul.mubr.f32.gmra.mrb[0].mxu0 %v1555
      %v1721 = vpop.f32.mrb[0].mxu0
      %v1722 = vadd.f32 0.0, %v1721
      %v1723 = vpop.f32.mrb[0].mxu0
      %1724 = vdwg.mxu0
      %v1725 = vadd.f32 %v1455, %v1627
      %v1726 = vadd.f32 %v1456, %v1632
      %v1727 = vadd.f32 %v1457, %v1637
      %v1728 = vadd.f32 %v1458, %v1642
      %v1729 = vadd.f32 %v1459, %v1647
      %v1730 = vadd.f32 %v1460, %v1652
      %v1731 = vadd.f32 %v1461, %v1657
      %v1732 = vadd.f32 %v1462, %v1662
      %v1733 = vadd.f32 %v1463, %v1667
      %v1734 = vadd.f32 %v1464, %v1672
      %v1735 = vadd.f32 %v1465, %v1677
      %v1736 = vadd.f32 %v1466, %v1682
      %v1737 = vadd.f32 %v1467, %v1687
      %v1738 = vadd.f32 %v1468, %v1692
      %v1739 = vadd.f32 %v1469, %v1697
      %v1740 = vadd.f32 %v1470, %v1702
      %v1741 = vadd.f32 %v1471, %v1707
      %v1742 = vadd.f32 %v1472, %v1712
      %v1743 = vadd.f32 %v1473, %v1717
      %v1744 = vadd.f32 %v1474, %v1722
      %v1745 = vld [vmem:[%s1204 + $0x2] sm:$0xff]
      %v1746 = vld [vmem:[%s1204 + $0xa] sm:$0xff]
      %v1747 = vld [vmem:[%s1204 + $0x1a] sm:$0xff]
      %v1748 = vld [vmem:[%s1204 + $0x22] sm:$0xff]
      %v1749 = vld [vmem:[%s1204 + $0x32] sm:$0xff]
      %v1750 = vld [vmem:[%s1204 + $0x3a] sm:$0xff]
      %v1751 = vld [vmem:[%s1204 + $0x4a] sm:$0xff]
      %v1752 = vld [vmem:[%s1204 + $0x52] sm:$0xff]
      %v1753 = vld [vmem:[%s1204 + $0x62] sm:$0xff]
      %v1754 = vld [vmem:[%s1204 + $0x6a] sm:$0xff]
      %v1755 = vld [vmem:[%s1204 + $0x7a] sm:$0xff]
      %v1756 = vld [vmem:[%s1204 + $0x82] sm:$0xff]
      %v1757 = vld [vmem:[%s1204 + $0x92] sm:$0xff]
      %v1758 = vld [vmem:[%s1204 + $0x9a] sm:$0xff]
      %v1759 = vld [vmem:[%s1204 + $0xaa] sm:$0xff]
      %v1760 = vld [vmem:[%s1204 + $0xb2] sm:$0xff]
      %v1761 = vld [vmem:[%s1204 + $0xc2] sm:$0xff]
      %v1762 = vld [vmem:[%s1204 + $0xca] sm:$0xff]
      %v1763 = vld [vmem:[%s1204 + $0xda] sm:$0xff]
      %v1764 = vld [vmem:[%s1204 + $0xe2] sm:$0xff]
      %s1765 = scalar_lea.vmem %s1, 20
      %v1766 = vld [vmem:[%s1765] sm:$0xf]
      %v1768 = vsel %vm476, %v1745, 0
      %v1771 = vsel %vm476, %v1746, 0
      %v1774 = vsel %vm476, %v1747, 0
      %v1777 = vsel %vm476, %v1748, 0
      %v1780 = vsel %vm476, %v1749, 0
      %v1783 = vsel %vm476, %v1750, 0
      %v1786 = vsel %vm476, %v1751, 0
      %v1789 = vsel %vm476, %v1752, 0
      %v1792 = vsel %vm476, %v1753, 0
      %v1795 = vsel %vm476, %v1754, 0
      %v1798 = vsel %vm476, %v1755, 0
      %v1801 = vsel %vm476, %v1756, 0
      %v1804 = vsel %vm476, %v1757, 0
      %v1807 = vsel %vm476, %v1758, 0
      %v1810 = vsel %vm476, %v1759, 0
      %v1813 = vsel %vm476, %v1760, 0
      %v1816 = vsel %vm476, %v1761, 0
      %v1819 = vsel %vm476, %v1762, 0
      %v1822 = vsel %vm476, %v1763, 0
      %v1825 = vsel %vm476, %v1764, 0
      %v1828 = vsel %vm537, %v1766, 0
      %1830 = vmatprep.subr.mxu0 0.0
      %1831 = vmatpush1.msra.mxu0 %v1828
      %1832 = vmatprep.subr.mxu0 0.0
      %1833 = vmatpush1.msra.mxu0 0.0
      %1834 = vmatprep.subr.mxu0 0.0
      %1835 = vmatpush1.msra.mxu0 0.0
      %1836 = vmatprep.subr.mxu0 0.0
      %1837 = vmatpush1.msra.mxu0 0.0
      %1838 = vmatprep.subr.mxu0 0.0
      %1839 = vmatpush1.msra.mxu0 0.0
      %1840 = vmatprep.subr.mxu0 0.0
      %1841 = vmatpush1.msra.mxu0 0.0
      %1842 = vmatprep.subr.mxu0 0.0
      %1843 = vmatpush1.msra.mxu0 0.0
      %1844 = vmatprep.subr.mxu0 0.0
      %1845 = vmatpush1.msra.mxu0 0.0
      %1846 = vmatprep.subr.mxu0 0.0
      %1847 = vmatpush1.msra.mxu0 0.0
      %1848 = vmatprep.subr.mxu0 0.0
      %1849 = vmatpush1.msra.mxu0 0.0
      %1850 = vmatprep.subr.mxu0 0.0
      %1851 = vmatpush1.msra.mxu0 0.0
      %1852 = vmatprep.subr.mxu0 0.0
      %1853 = vmatpush1.msra.mxu0 0.0
      %1854 = vmatprep.subr.mxu0 0.0
      %1855 = vmatpush1.msra.mxu0 0.0
      %1856 = vmatprep.subr.mxu0 0.0
      %1857 = vmatpush1.msra.mxu0 0.0
      %1858 = vmatprep.subr.mxu0 0.0
      %1859 = vmatpush1.msra.mxu0 0.0
      %1860 = vmatprep.subr.mxu0 0.0
      %1861 = vmatpush1.msra.mxu0 0.0
      %1862 = vmatprep.subr.mxu0 0.0
      %1863 = vmatpush1.msra.mxu0 0.0
      %1864 = vmatprep.subr.mxu0 0.0
      %1865 = vmatpush1.msra.mxu0 0.0
      %1866 = vmatprep.subr.mxu0 0.0
      %1867 = vmatpush1.msra.mxu0 0.0
      %1868 = vmatprep.subr.mxu0 0.0
      %1869 = vmatpush1.msra.mxu0 0.0
      %1870 = vmatprep.subr.mxu0 0.0
      %1871 = vmatpush1.msra.mxu0 0.0
      %1872 = vmatprep.subr.mxu0 0.0
      %1873 = vmatpush1.msra.mxu0 0.0
      %1874 = vmatprep.subr.mxu0 0.0
      %1875 = vmatpush1.msra.mxu0 0.0
      %1876 = vmatprep.subr.mxu0 0.0
      %1877 = vmatpush1.msra.mxu0 0.0
      %1878 = vmatprep.subr.mxu0 0.0
      %1879 = vmatpush1.msra.mxu0 0.0
      %1880 = vmatprep.subr.mxu0 0.0
      %1881 = vmatpush1.msra.mxu0 0.0
      %1882 = vmatprep.subr.mxu0 0.0
      %1883 = vmatpush1.msra.mxu0 0.0
      %1884 = vmatprep.subr.mxu0 0.0
      %1885 = vmatpush1.msra.mxu0 0.0
      %1886 = vmatprep.subr.mxu0 0.0
      %1887 = vmatpush1.msra.mxu0 0.0
      %1888 = vmatprep.subr.mxu0 0.0
      %1889 = vmatpush1.msra.mxu0 0.0
      %1890 = vmatprep.subr.mxu0 0.0
      %1891 = vmatpush1.msra.mxu0 0.0
      %1892 = vmatprep.subr.mxu0 0.0
      %1893 = vmatpush1.msra.mxu0 0.0
      %1894 = vmatprep.mubr.f32.mxu0 0.0
      %1895 = vmatmul.mubr.f32.gmra.mrb[0].mxu0 %v1768
      %v1896 = vpop.f32.mrb[0].mxu0
      %v1897 = vadd.f32 0.0, %v1896
      %v1898 = vpop.f32.mrb[0].mxu0
      %1899 = vmatprep.mubr.f32.mxu0 0.0
      %1900 = vmatmul.mubr.f32.gmra.mrb[0].mxu0 %v1771
      %v1901 = vpop.f32.mrb[0].mxu0
      %v1902 = vadd.f32 0.0, %v1901
      %v1903 = vpop.f32.mrb[0].mxu0
      %1904 = vmatprep.mubr.f32.mxu0 0.0
      %1905 = vmatmul.mubr.f32.gmra.mrb[0].mxu0 %v1774
      %v1906 = vpop.f32.mrb[0].mxu0
      %v1907 = vadd.f32 0.0, %v1906
      %v1908 = vpop.f32.mrb[0].mxu0
      %1909 = vmatprep.mubr.f32.mxu0 0.0
      %1910 = vmatmul.mubr.f32.gmra.mrb[0].mxu0 %v1777
      %v1911 = vpop.f32.mrb[0].mxu0
      %v1912 = vadd.f32 0.0, %v1911
      %v1913 = vpop.f32.mrb[0].mxu0
      %1914 = vmatprep.mubr.f32.mxu0 0.0
      %1915 = vmatmul.mubr.f32.gmra.mrb[0].mxu0 %v1780
      %v1916 = vpop.f32.mrb[0].mxu0
      %v1917 = vadd.f32 0.0, %v1916
      %v1918 = vpop.f32.mrb[0].mxu0
      %1919 = vmatprep.mubr.f32.mxu0 0.0
      %1920 = vmatmul.mubr.f32.gmra.mrb[0].mxu0 %v1783
      %v1921 = vpop.f32.mrb[0].mxu0
      %v1922 = vadd.f32 0.0, %v1921
      %v1923 = vpop.f32.mrb[0].mxu0
      %1924 = vmatprep.mubr.f32.mxu0 0.0
      %1925 = vmatmul.mubr.f32.gmra.mrb[0].mxu0 %v1786
      %v1926 = vpop.f32.mrb[0].mxu0
      %v1927 = vadd.f32 0.0, %v1926
      %v1928 = vpop.f32.mrb[0].mxu0
      %1929 = vmatprep.mubr.f32.mxu0 0.0
      %1930 = vmatmul.mubr.f32.gmra.mrb[0].mxu0 %v1789
      %v1931 = vpop.f32.mrb[0].mxu0
      %v1932 = vadd.f32 0.0, %v1931
      %v1933 = vpop.f32.mrb[0].mxu0
      %1934 = vmatprep.mubr.f32.mxu0 0.0
      %1935 = vmatmul.mubr.f32.gmra.mrb[0].mxu0 %v1792
      %v1936 = vpop.f32.mrb[0].mxu0
      %v1937 = vadd.f32 0.0, %v1936
      %v1938 = vpop.f32.mrb[0].mxu0
      %1939 = vmatprep.mubr.f32.mxu0 0.0
      %1940 = vmatmul.mubr.f32.gmra.mrb[0].mxu0 %v1795
      %v1941 = vpop.f32.mrb[0].mxu0
      %v1942 = vadd.f32 0.0, %v1941
      %v1943 = vpop.f32.mrb[0].mxu0
      %1944 = vmatprep.mubr.f32.mxu0 0.0
      %1945 = vmatmul.mubr.f32.gmra.mrb[0].mxu0 %v1798
      %v1946 = vpop.f32.mrb[0].mxu0
      %v1947 = vadd.f32 0.0, %v1946
      %v1948 = vpop.f32.mrb[0].mxu0
      %1949 = vmatprep.mubr.f32.mxu0 0.0
      %1950 = vmatmul.mubr.f32.gmra.mrb[0].mxu0 %v1801
      %v1951 = vpop.f32.mrb[0].mxu0
      %v1952 = vadd.f32 0.0, %v1951
      %v1953 = vpop.f32.mrb[0].mxu0
      %1954 = vmatprep.mubr.f32.mxu0 0.0
      %1955 = vmatmul.mubr.f32.gmra.mrb[0].mxu0 %v1804
      %v1956 = vpop.f32.mrb[0].mxu0
      %v1957 = vadd.f32 0.0, %v1956
      %v1958 = vpop.f32.mrb[0].mxu0
      %1959 = vmatprep.mubr.f32.mxu0 0.0
      %1960 = vmatmul.mubr.f32.gmra.mrb[0].mxu0 %v1807
      %v1961 = vpop.f32.mrb[0].mxu0
      %v1962 = vadd.f32 0.0, %v1961
      %v1963 = vpop.f32.mrb[0].mxu0
      %1964 = vmatprep.mubr.f32.mxu0 0.0
      %1965 = vmatmul.mubr.f32.gmra.mrb[0].mxu0 %v1810
      %v1966 = vpop.f32.mrb[0].mxu0
      %v1967 = vadd.f32 0.0, %v1966
      %v1968 = vpop.f32.mrb[0].mxu0
      %1969 = vmatprep.mubr.f32.mxu0 0.0
      %1970 = vmatmul.mubr.f32.gmra.mrb[0].mxu0 %v1813
      %v1971 = vpop.f32.mrb[0].mxu0
      %v1972 = vadd.f32 0.0, %v1971
      %v1973 = vpop.f32.mrb[0].mxu0
      %1974 = vmatprep.mubr.f32.mxu0 0.0
      %1975 = vmatmul.mubr.f32.gmra.mrb[0].mxu0 %v1816
      %v1976 = vpop.f32.mrb[0].mxu0
      %v1977 = vadd.f32 0.0, %v1976
      %v1978 = vpop.f32.mrb[0].mxu0
      %1979 = vmatprep.mubr.f32.mxu0 0.0
      %1980 = vmatmul.mubr.f32.gmra.mrb[0].mxu0 %v1819
      %v1981 = vpop.f32.mrb[0].mxu0
      %v1982 = vadd.f32 0.0, %v1981
      %v1983 = vpop.f32.mrb[0].mxu0
      %1984 = vmatprep.mubr.f32.mxu0 0.0
      %1985 = vmatmul.mubr.f32.gmra.mrb[0].mxu0 %v1822
      %v1986 = vpop.f32.mrb[0].mxu0
      %v1987 = vadd.f32 0.0, %v1986
      %v1988 = vpop.f32.mrb[0].mxu0
      %1989 = vmatprep.mubr.f32.mxu0 0.0
      %1990 = vmatmul.mubr.f32.gmra.mrb[0].mxu0 %v1825
      %v1991 = vpop.f32.mrb[0].mxu0
      %v1992 = vadd.f32 0.0, %v1991
      %v1993 = vpop.f32.mrb[0].mxu0
      %1994 = vdwg.mxu0
      %v1995 = vadd.f32 %v1725, %v1897
      %v1996 = vadd.f32 %v1726, %v1902
      %v1997 = vadd.f32 %v1727, %v1907
      %v1998 = vadd.f32 %v1728, %v1912
      %v1999 = vadd.f32 %v1729, %v1917
      %v2000 = vadd.f32 %v1730, %v1922
      %v2001 = vadd.f32 %v1731, %v1927
      %v2002 = vadd.f32 %v1732, %v1932
      %v2003 = vadd.f32 %v1733, %v1937
      %v2004 = vadd.f32 %v1734, %v1942
      %v2005 = vadd.f32 %v1735, %v1947
      %v2006 = vadd.f32 %v1736, %v1952
      %v2007 = vadd.f32 %v1737, %v1957
      %v2008 = vadd.f32 %v1738, %v1962
      %v2009 = vadd.f32 %v1739, %v1967
      %v2010 = vadd.f32 %v1740, %v1972
      %v2011 = vadd.f32 %v1741, %v1977
      %v2012 = vadd.f32 %v1742, %v1982
      %v2013 = vadd.f32 %v1743, %v1987
      %v2014 = vadd.f32 %v1744, %v1992
      %s2015 = scalar_lea.vmem [#allocation2], 48
      %v2016 = vld [vmem:[%s2015] sm:$0xff]
      %v2017 = vld [vmem:[%s2015 + $0x8] sm:$0xff]
      %v2018 = vld [vmem:[%s2015 + $0x18] sm:$0xff]
      %v2019 = vld [vmem:[%s2015 + $0x20] sm:$0xff]
      %v2020 = vld [vmem:[%s2015 + $0x30] sm:$0xff]
      %v2021 = vld [vmem:[%s2015 + $0x38] sm:$0xff]
      %v2022 = vld [vmem:[%s2015 + $0x48] sm:$0xff]
      %v2023 = vld [vmem:[%s2015 + $0x50] sm:$0xff]
      %v2024 = vld [vmem:[%s2015 + $0x60] sm:$0xff]
      %v2025 = vld [vmem:[%s2015 + $0x68] sm:$0xff]
      %v2026 = vld [vmem:[%s2015 + $0x78] sm:$0xff]
      %v2027 = vld [vmem:[%s2015 + $0x80] sm:$0xff]
      %v2028 = vld [vmem:[%s2015 + $0x90] sm:$0xff]
      %v2029 = vld [vmem:[%s2015 + $0x98] sm:$0xff]
      %v2030 = vld [vmem:[%s2015 + $0xa8] sm:$0xff]
      %v2031 = vld [vmem:[%s2015 + $0xb0] sm:$0xff]
      %v2032 = vld [vmem:[%s2015 + $0xc0] sm:$0xff]
      %v2033 = vld [vmem:[%s2015 + $0xc8] sm:$0xff]
      %v2034 = vld [vmem:[%s2015 + $0xd8] sm:$0xff]
      %v2035 = vld [vmem:[%s2015 + $0xe0] sm:$0xff]
      %s2036 = scalar_lea.vmem %s1, 24
      %v2037 = vld [vmem:[%s2036] sm:$0xf]
      %v2039 = vsel %vm476, %v2016, 0
      %v2042 = vsel %vm476, %v2017, 0
      %v2045 = vsel %vm476, %v2018, 0
      %v2048 = vsel %vm476, %v2019, 0
      %v2051 = vsel %vm476, %v2020, 0
      %v2054 = vsel %vm476, %v2021, 0
      %v2057 = vsel %vm476, %v2022, 0
      %v2060 = vsel %vm476, %v2023, 0
      %v2063 = vsel %vm476, %v2024, 0
      %v2066 = vsel %vm476, %v2025, 0
      %v2069 = vsel %vm476, %v2026, 0
      %v2072 = vsel %vm476, %v2027, 0
      %v2075 = vsel %vm476, %v2028, 0
      %v2078 = vsel %vm476, %v2029, 0
      %v2081 = vsel %vm476, %v2030, 0
      %v2084 = vsel %vm476, %v2031, 0
      %v2087 = vsel %vm476, %v2032, 0
      %v2090 = vsel %vm476, %v2033, 0
      %v2093 = vsel %vm476, %v2034, 0
      %v2096 = vsel %vm476, %v2035, 0
      %v2099 = vsel %vm537, %v2037, 0
      %2101 = vmatprep.subr.mxu0 0.0
      %2102 = vmatpush1.msra.mxu0 %v2099
      %2103 = vmatprep.subr.mxu0 0.0
      %2104 = vmatpush1.msra.mxu0 0.0
      %2105 = vmatprep.subr.mxu0 0.0
      %2106 = vmatpush1.msra.mxu0 0.0
      %2107 = vmatprep.subr.mxu0 0.0
      %2108 = vmatpush1.msra.mxu0 0.0
      %2109 = vmatprep.subr.mxu0 0.0
      %2110 = vmatpush1.msra.mxu0 0.0
      %2111 = vmatprep.subr.mxu0 0.0
      %2112 = vmatpush1.msra.mxu0 0.0
      %2113 = vmatprep.subr.mxu0 0.0
      %2114 = vmatpush1.msra.mxu0 0.0
      %2115 = vmatprep.subr.mxu0 0.0
      %2116 = vmatpush1.msra.mxu0 0.0
      %2117 = vmatprep.subr.mxu0 0.0
      %2118 = vmatpush1.msra.mxu0 0.0
      %2119 = vmatprep.subr.mxu0 0.0
      %2120 = vmatpush1.msra.mxu0 0.0
      %2121 = vmatprep.subr.mxu0 0.0
      %2122 = vmatpush1.msra.mxu0 0.0
      %2123 = vmatprep.subr.mxu0 0.0
      %2124 = vmatpush1.msra.mxu0 0.0
      %2125 = vmatprep.subr.mxu0 0.0
      %2126 = vmatpush1.msra.mxu0 0.0
      %2127 = vmatprep.subr.mxu0 0.0
      %2128 = vmatpush1.msra.mxu0 0.0
      %2129 = vmatprep.subr.mxu0 0.0
      %2130 = vmatpush1.msra.mxu0 0.0
      %2131 = vmatprep.subr.mxu0 0.0
      %2132 = vmatpush1.msra.mxu0 0.0
      %2133 = vmatprep.subr.mxu0 0.0
      %2134 = vmatpush1.msra.mxu0 0.0
      %2135 = vmatprep.subr.mxu0 0.0
      %2136 = vmatpush1.msra.mxu0 0.0
      %2137 = vmatprep.subr.mxu0 0.0
      %2138 = vmatpush1.msra.mxu0 0.0
      %2139 = vmatprep.subr.mxu0 0.0
      %2140 = vmatpush1.msra.mxu0 0.0
      %2141 = vmatprep.subr.mxu0 0.0
      %2142 = vmatpush1.msra.mxu0 0.0
      %2143 = vmatprep.subr.mxu0 0.0
      %2144 = vmatpush1.msra.mxu0 0.0
      %2145 = vmatprep.subr.mxu0 0.0
      %2146 = vmatpush1.msra.mxu0 0.0
      %2147 = vmatprep.subr.mxu0 0.0
      %2148 = vmatpush1.msra.mxu0 0.0
      %2149 = vmatprep.subr.mxu0 0.0
      %2150 = vmatpush1.msra.mxu0 0.0
      %2151 = vmatprep.subr.mxu0 0.0
      %2152 = vmatpush1.msra.mxu0 0.0
      %2153 = vmatprep.subr.mxu0 0.0
      %2154 = vmatpush1.msra.mxu0 0.0
      %2155 = vmatprep.subr.mxu0 0.0
      %2156 = vmatpush1.msra.mxu0 0.0
      %2157 = vmatprep.subr.mxu0 0.0
      %2158 = vmatpush1.msra.mxu0 0.0
      %2159 = vmatprep.subr.mxu0 0.0
      %2160 = vmatpush1.msra.mxu0 0.0
      %2161 = vmatprep.subr.mxu0 0.0
      %2162 = vmatpush1.msra.mxu0 0.0
      %2163 = vmatprep.subr.mxu0 0.0
      %2164 = vmatpush1.msra.mxu0 0.0
      %2165 = vmatprep.mubr.f32.mxu0 0.0
      %2166 = vmatmul.mubr.f32.gmra.mrb[0].mxu0 %v2039
      %v2167 = vpop.f32.mrb[0].mxu0
      %v2168 = vadd.f32 0.0, %v2167
      %v2169 = vpop.f32.mrb[0].mxu0
      %2170 = vmatprep.mubr.f32.mxu0 0.0
      %2171 = vmatmul.mubr.f32.gmra.mrb[0].mxu0 %v2042
      %v2172 = vpop.f32.mrb[0].mxu0
      %v2173 = vadd.f32 0.0, %v2172
      %v2174 = vpop.f32.mrb[0].mxu0
      %2175 = vmatprep.mubr.f32.mxu0 0.0
      %2176 = vmatmul.mubr.f32.gmra.mrb[0].mxu0 %v2045
      %v2177 = vpop.f32.mrb[0].mxu0
      %v2178 = vadd.f32 0.0, %v2177
      %v2179 = vpop.f32.mrb[0].mxu0
      %2180 = vmatprep.mubr.f32.mxu0 0.0
      %2181 = vmatmul.mubr.f32.gmra.mrb[0].mxu0 %v2048
      %v2182 = vpop.f32.mrb[0].mxu0
      %v2183 = vadd.f32 0.0, %v2182
      %v2184 = vpop.f32.mrb[0].mxu0
      %2185 = vmatprep.mubr.f32.mxu0 0.0
      %2186 = vmatmul.mubr.f32.gmra.mrb[0].mxu0 %v2051
      %v2187 = vpop.f32.mrb[0].mxu0
      %v2188 = vadd.f32 0.0, %v2187
      %v2189 = vpop.f32.mrb[0].mxu0
      %2190 = vmatprep.mubr.f32.mxu0 0.0
      %2191 = vmatmul.mubr.f32.gmra.mrb[0].mxu0 %v2054
      %v2192 = vpop.f32.mrb[0].mxu0
      %v2193 = vadd.f32 0.0, %v2192
      %v2194 = vpop.f32.mrb[0].mxu0
      %2195 = vmatprep.mubr.f32.mxu0 0.0
      %2196 = vmatmul.mubr.f32.gmra.mrb[0].mxu0 %v2057
      %v2197 = vpop.f32.mrb[0].mxu0
      %v2198 = vadd.f32 0.0, %v2197
      %v2199 = vpop.f32.mrb[0].mxu0
      %2200 = vmatprep.mubr.f32.mxu0 0.0
      %2201 = vmatmul.mubr.f32.gmra.mrb[0].mxu0 %v2060
      %v2202 = vpop.f32.mrb[0].mxu0
      %v2203 = vadd.f32 0.0, %v2202
      %v2204 = vpop.f32.mrb[0].mxu0
      %2205 = vmatprep.mubr.f32.mxu0 0.0
      %2206 = vmatmul.mubr.f32.gmra.mrb[0].mxu0 %v2063
      %v2207 = vpop.f32.mrb[0].mxu0
      %v2208 = vadd.f32 0.0, %v2207
      %v2209 = vpop.f32.mrb[0].mxu0
      %2210 = vmatprep.mubr.f32.mxu0 0.0
      %2211 = vmatmul.mubr.f32.gmra.mrb[0].mxu0 %v2066
      %v2212 = vpop.f32.mrb[0].mxu0
      %v2213 = vadd.f32 0.0, %v2212
      %v2214 = vpop.f32.mrb[0].mxu0
      %2215 = vmatprep.mubr.f32.mxu0 0.0
      %2216 = vmatmul.mubr.f32.gmra.mrb[0].mxu0 %v2069
      %v2217 = vpop.f32.mrb[0].mxu0
      %v2218 = vadd.f32 0.0, %v2217
      %v2219 = vpop.f32.mrb[0].mxu0
      %2220 = vmatprep.mubr.f32.mxu0 0.0
      %2221 = vmatmul.mubr.f32.gmra.mrb[0].mxu0 %v2072
      %v2222 = vpop.f32.mrb[0].mxu0
      %v2223 = vadd.f32 0.0, %v2222
      %v2224 = vpop.f32.mrb[0].mxu0
      %2225 = vmatprep.mubr.f32.mxu0 0.0
      %2226 = vmatmul.mubr.f32.gmra.mrb[0].mxu0 %v2075
      %v2227 = vpop.f32.mrb[0].mxu0
      %v2228 = vadd.f32 0.0, %v2227
      %v2229 = vpop.f32.mrb[0].mxu0
      %2230 = vmatprep.mubr.f32.mxu0 0.0
      %2231 = vmatmul.mubr.f32.gmra.mrb[0].mxu0 %v2078
      %v2232 = vpop.f32.mrb[0].mxu0
      %v2233 = vadd.f32 0.0, %v2232
      %v2234 = vpop.f32.mrb[0].mxu0
      %2235 = vmatprep.mubr.f32.mxu0 0.0
      %2236 = vmatmul.mubr.f32.gmra.mrb[0].mxu0 %v2081
      %v2237 = vpop.f32.mrb[0].mxu0
      %v2238 = vadd.f32 0.0, %v2237
      %v2239 = vpop.f32.mrb[0].mxu0
      %2240 = vmatprep.mubr.f32.mxu0 0.0
      %2241 = vmatmul.mubr.f32.gmra.mrb[0].mxu0 %v2084
      %v2242 = vpop.f32.mrb[0].mxu0
      %v2243 = vadd.f32 0.0, %v2242
      %v2244 = vpop.f32.mrb[0].mxu0
      %2245 = vmatprep.mubr.f32.mxu0 0.0
      %2246 = vmatmul.mubr.f32.gmra.mrb[0].mxu0 %v2087
      %v2247 = vpop.f32.mrb[0].mxu0
      %v2248 = vadd.f32 0.0, %v2247
      %v2249 = vpop.f32.mrb[0].mxu0
      %2250 = vmatprep.mubr.f32.mxu0 0.0
      %2251 = vmatmul.mubr.f32.gmra.mrb[0].mxu0 %v2090
      %v2252 = vpop.f32.mrb[0].mxu0
      %v2253 = vadd.f32 0.0, %v2252
      %v2254 = vpop.f32.mrb[0].mxu0
      %2255 = vmatprep.mubr.f32.mxu0 0.0
      %2256 = vmatmul.mubr.f32.gmra.mrb[0].mxu0 %v2093
      %v2257 = vpop.f32.mrb[0].mxu0
      %v2258 = vadd.f32 0.0, %v2257
      %v2259 = vpop.f32.mrb[0].mxu0
      %2260 = vmatprep.mubr.f32.mxu0 0.0
      %2261 = vmatmul.mubr.f32.gmra.mrb[0].mxu0 %v2096
      %v2262 = vpop.f32.mrb[0].mxu0
      %v2263 = vadd.f32 0.0, %v2262
      %v2264 = vpop.f32.mrb[0].mxu0
      %2265 = vdwg.mxu0
      %v2266 = vadd.f32 %v1995, %v2168
      %v2267 = vadd.f32 %v1996, %v2173
      %v2268 = vadd.f32 %v1997, %v2178
      %v2269 = vadd.f32 %v1998, %v2183
      %v2270 = vadd.f32 %v1999, %v2188
      %v2271 = vadd.f32 %v2000, %v2193
      %v2272 = vadd.f32 %v2001, %v2198
      %v2273 = vadd.f32 %v2002, %v2203
      %v2274 = vadd.f32 %v2003, %v2208
      %v2275 = vadd.f32 %v2004, %v2213
      %v2276 = vadd.f32 %v2005, %v2218
      %v2277 = vadd.f32 %v2006, %v2223
      %v2278 = vadd.f32 %v2007, %v2228
      %v2279 = vadd.f32 %v2008, %v2233
      %v2280 = vadd.f32 %v2009, %v2238
      %v2281 = vadd.f32 %v2010, %v2243
      %v2282 = vadd.f32 %v2011, %v2248
      %v2283 = vadd.f32 %v2012, %v2253
      %v2284 = vadd.f32 %v2013, %v2258
      %v2285 = vadd.f32 %v2014, %v2263
      %v2286 = vld [vmem:[%s2015 + $0x1] sm:$0xff]
      %v2287 = vld [vmem:[%s2015 + $0x9] sm:$0xff]
      %v2288 = vld [vmem:[%s2015 + $0x19] sm:$0xff]
      %v2289 = vld [vmem:[%s2015 + $0x21] sm:$0xff]
      %v2290 = vld [vmem:[%s2015 + $0x31] sm:$0xff]
      %v2291 = vld [vmem:[%s2015 + $0x39] sm:$0xff]
      %v2292 = vld [vmem:[%s2015 + $0x49] sm:$0xff]
      %v2293 = vld [vmem:[%s2015 + $0x51] sm:$0xff]
      %v2294 = vld [vmem:[%s2015 + $0x61] sm:$0xff]
      %v2295 = vld [vmem:[%s2015 + $0x69] sm:$0xff]
      %v2296 = vld [vmem:[%s2015 + $0x79] sm:$0xff]
      %v2297 = vld [vmem:[%s2015 + $0x81] sm:$0xff]
      %v2298 = vld [vmem:[%s2015 + $0x91] sm:$0xff]
      %v2299 = vld [vmem:[%s2015 + $0x99] sm:$0xff]
      %v2300 = vld [vmem:[%s2015 + $0xa9] sm:$0xff]
      %v2301 = vld [vmem:[%s2015 + $0xb1] sm:$0xff]
      %v2302 = vld [vmem:[%s2015 + $0xc1] sm:$0xff]
      %v2303 = vld [vmem:[%s2015 + $0xc9] sm:$0xff]
      %v2304 = vld [vmem:[%s2015 + $0xd9] sm:$0xff]
      %v2305 = vld [vmem:[%s2015 + $0xe1] sm:$0xff]
      %s2306 = scalar_lea.vmem %s1, 28
      %v2307 = vld [vmem:[%s2306] sm:$0xf]
      %v2309 = vsel %vm476, %v2286, 0
      %v2312 = vsel %vm476, %v2287, 0
      %v2315 = vsel %vm476, %v2288, 0
      %v2318 = vsel %vm476, %v2289, 0
      %v2321 = vsel %vm476, %v2290, 0
      %v2324 = vsel %vm476, %v2291, 0
      %v2327 = vsel %vm476, %v2292, 0
      %v2330 = vsel %vm476, %v2293, 0
      %v2333 = vsel %vm476, %v2294, 0
      %v2336 = vsel %vm476, %v2295, 0
      %v2339 = vsel %vm476, %v2296, 0
      %v2342 = vsel %vm476, %v2297, 0
      %v2345 = vsel %vm476, %v2298, 0
      %v2348 = vsel %vm476, %v2299, 0
      %v2351 = vsel %vm476, %v2300, 0
      %v2354 = vsel %vm476, %v2301, 0
      %v2357 = vsel %vm476, %v2302, 0
      %v2360 = vsel %vm476, %v2303, 0
      %v2363 = vsel %vm476, %v2304, 0
      %v2366 = vsel %vm476, %v2305, 0
      %v2369 = vsel %vm537, %v2307, 0
      %2371 = vmatprep.subr.mxu0 0.0
      %2372 = vmatpush1.msra.mxu0 %v2369
      %2373 = vmatprep.subr.mxu0 0.0
      %2374 = vmatpush1.msra.mxu0 0.0
      %2375 = vmatprep.subr.mxu0 0.0
      %2376 = vmatpush1.msra.mxu0 0.0
      %2377 = vmatprep.subr.mxu0 0.0
      %2378 = vmatpush1.msra.mxu0 0.0
      %2379 = vmatprep.subr.mxu0 0.0
      %2380 = vmatpush1.msra.mxu0 0.0
      %2381 = vmatprep.subr.mxu0 0.0
      %2382 = vmatpush1.msra.mxu0 0.0
      %2383 = vmatprep.subr.mxu0 0.0
      %2384 = vmatpush1.msra.mxu0 0.0
      %2385 = vmatprep.subr.mxu0 0.0
      %2386 = vmatpush1.msra.mxu0 0.0
      %2387 = vmatprep.subr.mxu0 0.0
      %2388 = vmatpush1.msra.mxu0 0.0
      %2389 = vmatprep.subr.mxu0 0.0
      %2390 = vmatpush1.msra.mxu0 0.0
      %2391 = vmatprep.subr.mxu0 0.0
      %2392 = vmatpush1.msra.mxu0 0.0
      %2393 = vmatprep.subr.mxu0 0.0
      %2394 = vmatpush1.msra.mxu0 0.0
      %2395 = vmatprep.subr.mxu0 0.0
      %2396 = vmatpush1.msra.mxu0 0.0
      %2397 = vmatprep.subr.mxu0 0.0
      %2398 = vmatpush1.msra.mxu0 0.0
      %2399 = vmatprep.subr.mxu0 0.0
      %2400 = vmatpush1.msra.mxu0 0.0
      %2401 = vmatprep.subr.mxu0 0.0
      %2402 = vmatpush1.msra.mxu0 0.0
      %2403 = vmatprep.subr.mxu0 0.0
      %2404 = vmatpush1.msra.mxu0 0.0
      %2405 = vmatprep.subr.mxu0 0.0
      %2406 = vmatpush1.msra.mxu0 0.0
      %2407 = vmatprep.subr.mxu0 0.0
      %2408 = vmatpush1.msra.mxu0 0.0
      %2409 = vmatprep.subr.mxu0 0.0
      %2410 = vmatpush1.msra.mxu0 0.0
      %2411 = vmatprep.subr.mxu0 0.0
      %2412 = vmatpush1.msra.mxu0 0.0
      %2413 = vmatprep.subr.mxu0 0.0
      %2414 = vmatpush1.msra.mxu0 0.0
      %2415 = vmatprep.subr.mxu0 0.0
      %2416 = vmatpush1.msra.mxu0 0.0
      %2417 = vmatprep.subr.mxu0 0.0
      %2418 = vmatpush1.msra.mxu0 0.0
      %2419 = vmatprep.subr.mxu0 0.0
      %2420 = vmatpush1.msra.mxu0 0.0
      %2421 = vmatprep.subr.mxu0 0.0
      %2422 = vmatpush1.msra.mxu0 0.0
      %2423 = vmatprep.subr.mxu0 0.0
      %2424 = vmatpush1.msra.mxu0 0.0
      %2425 = vmatprep.subr.mxu0 0.0
      %2426 = vmatpush1.msra.mxu0 0.0
      %2427 = vmatprep.subr.mxu0 0.0
      %2428 = vmatpush1.msra.mxu0 0.0
      %2429 = vmatprep.subr.mxu0 0.0
      %2430 = vmatpush1.msra.mxu0 0.0
      %2431 = vmatprep.subr.mxu0 0.0
      %2432 = vmatpush1.msra.mxu0 0.0
      %2433 = vmatprep.subr.mxu0 0.0
      %2434 = vmatpush1.msra.mxu0 0.0
      %2435 = vmatprep.mubr.f32.mxu0 0.0
      %2436 = vmatmul.mubr.f32.gmra.mrb[0].mxu0 %v2309
      %v2437 = vpop.f32.mrb[0].mxu0
      %v2438 = vadd.f32 0.0, %v2437
      %v2439 = vpop.f32.mrb[0].mxu0
      %2440 = vmatprep.mubr.f32.mxu0 0.0
      %2441 = vmatmul.mubr.f32.gmra.mrb[0].mxu0 %v2312
      %v2442 = vpop.f32.mrb[0].mxu0
      %v2443 = vadd.f32 0.0, %v2442
      %v2444 = vpop.f32.mrb[0].mxu0
      %2445 = vmatprep.mubr.f32.mxu0 0.0
      %2446 = vmatmul.mubr.f32.gmra.mrb[0].mxu0 %v2315
      %v2447 = vpop.f32.mrb[0].mxu0
      %v2448 = vadd.f32 0.0, %v2447
      %v2449 = vpop.f32.mrb[0].mxu0
      %2450 = vmatprep.mubr.f32.mxu0 0.0
      %2451 = vmatmul.mubr.f32.gmra.mrb[0].mxu0 %v2318
      %v2452 = vpop.f32.mrb[0].mxu0
      %v2453 = vadd.f32 0.0, %v2452
      %v2454 = vpop.f32.mrb[0].mxu0
      %2455 = vmatprep.mubr.f32.mxu0 0.0
      %2456 = vmatmul.mubr.f32.gmra.mrb[0].mxu0 %v2321
      %v2457 = vpop.f32.mrb[0].mxu0
      %v2458 = vadd.f32 0.0, %v2457
      %v2459 = vpop.f32.mrb[0].mxu0
      %2460 = vmatprep.mubr.f32.mxu0 0.0
      %2461 = vmatmul.mubr.f32.gmra.mrb[0].mxu0 %v2324
      %v2462 = vpop.f32.mrb[0].mxu0
      %v2463 = vadd.f32 0.0, %v2462
      %v2464 = vpop.f32.mrb[0].mxu0
      %2465 = vmatprep.mubr.f32.mxu0 0.0
      %2466 = vmatmul.mubr.f32.gmra.mrb[0].mxu0 %v2327
      %v2467 = vpop.f32.mrb[0].mxu0
      %v2468 = vadd.f32 0.0, %v2467
      %v2469 = vpop.f32.mrb[0].mxu0
      %2470 = vmatprep.mubr.f32.mxu0 0.0
      %2471 = vmatmul.mubr.f32.gmra.mrb[0].mxu0 %v2330
      %v2472 = vpop.f32.mrb[0].mxu0
      %v2473 = vadd.f32 0.0, %v2472
      %v2474 = vpop.f32.mrb[0].mxu0
      %2475 = vmatprep.mubr.f32.mxu0 0.0
      %2476 = vmatmul.mubr.f32.gmra.mrb[0].mxu0 %v2333
      %v2477 = vpop.f32.mrb[0].mxu0
      %v2478 = vadd.f32 0.0, %v2477
      %v2479 = vpop.f32.mrb[0].mxu0
      %2480 = vmatprep.mubr.f32.mxu0 0.0
      %2481 = vmatmul.mubr.f32.gmra.mrb[0].mxu0 %v2336
      %v2482 = vpop.f32.mrb[0].mxu0
      %v2483 = vadd.f32 0.0, %v2482
      %v2484 = vpop.f32.mrb[0].mxu0
      %2485 = vmatprep.mubr.f32.mxu0 0.0
      %2486 = vmatmul.mubr.f32.gmra.mrb[0].mxu0 %v2339
      %v2487 = vpop.f32.mrb[0].mxu0
      %v2488 = vadd.f32 0.0, %v2487
      %v2489 = vpop.f32.mrb[0].mxu0
      %2490 = vmatprep.mubr.f32.mxu0 0.0
      %2491 = vmatmul.mubr.f32.gmra.mrb[0].mxu0 %v2342
      %v2492 = vpop.f32.mrb[0].mxu0
      %v2493 = vadd.f32 0.0, %v2492
      %v2494 = vpop.f32.mrb[0].mxu0
      %2495 = vmatprep.mubr.f32.mxu0 0.0
      %2496 = vmatmul.mubr.f32.gmra.mrb[0].mxu0 %v2345
      %v2497 = vpop.f32.mrb[0].mxu0
      %v2498 = vadd.f32 0.0, %v2497
      %v2499 = vpop.f32.mrb[0].mxu0
      %2500 = vmatprep.mubr.f32.mxu0 0.0
      %2501 = vmatmul.mubr.f32.gmra.mrb[0].mxu0 %v2348
      %v2502 = vpop.f32.mrb[0].mxu0
      %v2503 = vadd.f32 0.0, %v2502
      %v2504 = vpop.f32.mrb[0].mxu0
      %2505 = vmatprep.mubr.f32.mxu0 0.0
      %2506 = vmatmul.mubr.f32.gmra.mrb[0].mxu0 %v2351
      %v2507 = vpop.f32.mrb[0].mxu0
      %v2508 = vadd.f32 0.0, %v2507
      %v2509 = vpop.f32.mrb[0].mxu0
      %2510 = vmatprep.mubr.f32.mxu0 0.0
      %2511 = vmatmul.mubr.f32.gmra.mrb[0].mxu0 %v2354
      %v2512 = vpop.f32.mrb[0].mxu0
      %v2513 = vadd.f32 0.0, %v2512
      %v2514 = vpop.f32.mrb[0].mxu0
      %2515 = vmatprep.mubr.f32.mxu0 0.0
      %2516 = vmatmul.mubr.f32.gmra.mrb[0].mxu0 %v2357
      %v2517 = vpop.f32.mrb[0].mxu0
      %v2518 = vadd.f32 0.0, %v2517
      %v2519 = vpop.f32.mrb[0].mxu0
      %2520 = vmatprep.mubr.f32.mxu0 0.0
      %2521 = vmatmul.mubr.f32.gmra.mrb[0].mxu0 %v2360
      %v2522 = vpop.f32.mrb[0].mxu0
      %v2523 = vadd.f32 0.0, %v2522
      %v2524 = vpop.f32.mrb[0].mxu0
      %2525 = vmatprep.mubr.f32.mxu0 0.0
      %2526 = vmatmul.mubr.f32.gmra.mrb[0].mxu0 %v2363
      %v2527 = vpop.f32.mrb[0].mxu0
      %v2528 = vadd.f32 0.0, %v2527
      %v2529 = vpop.f32.mrb[0].mxu0
      %2530 = vmatprep.mubr.f32.mxu0 0.0
      %2531 = vmatmul.mubr.f32.gmra.mrb[0].mxu0 %v2366
      %v2532 = vpop.f32.mrb[0].mxu0
      %v2533 = vadd.f32 0.0, %v2532
      %v2534 = vpop.f32.mrb[0].mxu0
      %2535 = vdwg.mxu0
      %v2536 = vadd.f32 %v2266, %v2438
      %v2537 = vadd.f32 %v2267, %v2443
      %v2538 = vadd.f32 %v2268, %v2448
      %v2539 = vadd.f32 %v2269, %v2453
      %v2540 = vadd.f32 %v2270, %v2458
      %v2541 = vadd.f32 %v2271, %v2463
      %v2542 = vadd.f32 %v2272, %v2468
      %v2543 = vadd.f32 %v2273, %v2473
      %v2544 = vadd.f32 %v2274, %v2478
      %v2545 = vadd.f32 %v2275, %v2483
      %v2546 = vadd.f32 %v2276, %v2488
      %v2547 = vadd.f32 %v2277, %v2493
      %v2548 = vadd.f32 %v2278, %v2498
      %v2549 = vadd.f32 %v2279, %v2503
      %v2550 = vadd.f32 %v2280, %v2508
      %v2551 = vadd.f32 %v2281, %v2513
      %v2552 = vadd.f32 %v2282, %v2518
      %v2553 = vadd.f32 %v2283, %v2523
      %v2554 = vadd.f32 %v2284, %v2528
      %v2555 = vadd.f32 %v2285, %v2533
      %v2556 = vld [vmem:[%s2015 + $0x2] sm:$0xff]
      %v2557 = vld [vmem:[%s2015 + $0xa] sm:$0xff]
      %v2558 = vld [vmem:[%s2015 + $0x1a] sm:$0xff]
      %v2559 = vld [vmem:[%s2015 + $0x22] sm:$0xff]
      %v2560 = vld [vmem:[%s2015 + $0x32] sm:$0xff]
      %v2561 = vld [vmem:[%s2015 + $0x3a] sm:$0xff]
      %v2562 = vld [vmem:[%s2015 + $0x4a] sm:$0xff]
      %v2563 = vld [vmem:[%s2015 + $0x52] sm:$0xff]
      %v2564 = vld [vmem:[%s2015 + $0x62] sm:$0xff]
      %v2565 = vld [vmem:[%s2015 + $0x6a] sm:$0xff]
      %v2566 = vld [vmem:[%s2015 + $0x7a] sm:$0xff]
      %v2567 = vld [vmem:[%s2015 + $0x82] sm:$0xff]
      %v2568 = vld [vmem:[%s2015 + $0x92] sm:$0xff]
      %v2569 = vld [vmem:[%s2015 + $0x9a] sm:$0xff]
      %v2570 = vld [vmem:[%s2015 + $0xaa] sm:$0xff]
      %v2571 = vld [vmem:[%s2015 + $0xb2] sm:$0xff]
      %v2572 = vld [vmem:[%s2015 + $0xc2] sm:$0xff]
      %v2573 = vld [vmem:[%s2015 + $0xca] sm:$0xff]
      %v2574 = vld [vmem:[%s2015 + $0xda] sm:$0xff]
      %v2575 = vld [vmem:[%s2015 + $0xe2] sm:$0xff]
      %s2576 = scalar_lea.vmem %s1, 32
      %v2577 = vld [vmem:[%s2576] sm:$0xf]
      %v2579 = vsel %vm476, %v2556, 0
      %v2582 = vsel %vm476, %v2557, 0
      %v2585 = vsel %vm476, %v2558, 0
      %v2588 = vsel %vm476, %v2559, 0
      %v2591 = vsel %vm476, %v2560, 0
      %v2594 = vsel %vm476, %v2561, 0
      %v2597 = vsel %vm476, %v2562, 0
      %v2600 = vsel %vm476, %v2563, 0
      %v2603 = vsel %vm476, %v2564, 0
      %v2606 = vsel %vm476, %v2565, 0
      %v2609 = vsel %vm476, %v2566, 0
      %v2612 = vsel %vm476, %v2567, 0
      %v2615 = vsel %vm476, %v2568, 0
      %v2618 = vsel %vm476, %v2569, 0
      %v2621 = vsel %vm476, %v2570, 0
      %v2624 = vsel %vm476, %v2571, 0
      %v2627 = vsel %vm476, %v2572, 0
      %v2630 = vsel %vm476, %v2573, 0
      %v2633 = vsel %vm476, %v2574, 0
      %v2636 = vsel %vm476, %v2575, 0
      %v2639 = vsel %vm537, %v2577, 0
      %2641 = vmatprep.subr.mxu0 0.0
      %2642 = vmatpush1.msra.mxu0 %v2639
      %2643 = vmatprep.subr.mxu0 0.0
      %2644 = vmatpush1.msra.mxu0 0.0
      %2645 = vmatprep.subr.mxu0 0.0
      %2646 = vmatpush1.msra.mxu0 0.0
      %2647 = vmatprep.subr.mxu0 0.0
      %2648 = vmatpush1.msra.mxu0 0.0
      %2649 = vmatprep.subr.mxu0 0.0
      %2650 = vmatpush1.msra.mxu0 0.0
      %2651 = vmatprep.subr.mxu0 0.0
      %2652 = vmatpush1.msra.mxu0 0.0
      %2653 = vmatprep.subr.mxu0 0.0
      %2654 = vmatpush1.msra.mxu0 0.0
      %2655 = vmatprep.subr.mxu0 0.0
      %2656 = vmatpush1.msra.mxu0 0.0
      %2657 = vmatprep.subr.mxu0 0.0
      %2658 = vmatpush1.msra.mxu0 0.0
      %2659 = vmatprep.subr.mxu0 0.0
      %2660 = vmatpush1.msra.mxu0 0.0
      %2661 = vmatprep.subr.mxu0 0.0
      %2662 = vmatpush1.msra.mxu0 0.0
      %2663 = vmatprep.subr.mxu0 0.0
      %2664 = vmatpush1.msra.mxu0 0.0
      %2665 = vmatprep.subr.mxu0 0.0
      %2666 = vmatpush1.msra.mxu0 0.0
      %2667 = vmatprep.subr.mxu0 0.0
      %2668 = vmatpush1.msra.mxu0 0.0
      %2669 = vmatprep.subr.mxu0 0.0
      %2670 = vmatpush1.msra.mxu0 0.0
      %2671 = vmatprep.subr.mxu0 0.0
      %2672 = vmatpush1.msra.mxu0 0.0
      %2673 = vmatprep.subr.mxu0 0.0
      %2674 = vmatpush1.msra.mxu0 0.0
      %2675 = vmatprep.subr.mxu0 0.0
      %2676 = vmatpush1.msra.mxu0 0.0
      %2677 = vmatprep.subr.mxu0 0.0
      %2678 = vmatpush1.msra.mxu0 0.0
      %2679 = vmatprep.subr.mxu0 0.0
      %2680 = vmatpush1.msra.mxu0 0.0
      %2681 = vmatprep.subr.mxu0 0.0
      %2682 = vmatpush1.msra.mxu0 0.0
      %2683 = vmatprep.subr.mxu0 0.0
      %2684 = vmatpush1.msra.mxu0 0.0
      %2685 = vmatprep.subr.mxu0 0.0
      %2686 = vmatpush1.msra.mxu0 0.0
      %2687 = vmatprep.subr.mxu0 0.0
      %2688 = vmatpush1.msra.mxu0 0.0
      %2689 = vmatprep.subr.mxu0 0.0
      %2690 = vmatpush1.msra.mxu0 0.0
      %2691 = vmatprep.subr.mxu0 0.0
      %2692 = vmatpush1.msra.mxu0 0.0
      %2693 = vmatprep.subr.mxu0 0.0
      %2694 = vmatpush1.msra.mxu0 0.0
      %2695 = vmatprep.subr.mxu0 0.0
      %2696 = vmatpush1.msra.mxu0 0.0
      %2697 = vmatprep.subr.mxu0 0.0
      %2698 = vmatpush1.msra.mxu0 0.0
      %2699 = vmatprep.subr.mxu0 0.0
      %2700 = vmatpush1.msra.mxu0 0.0
      %2701 = vmatprep.subr.mxu0 0.0
      %2702 = vmatpush1.msra.mxu0 0.0
      %2703 = vmatprep.subr.mxu0 0.0
      %2704 = vmatpush1.msra.mxu0 0.0
      %2705 = vmatprep.mubr.f32.mxu0 0.0
      %2706 = vmatmul.mubr.f32.gmra.mrb[0].mxu0 %v2579
      %v2707 = vpop.f32.mrb[0].mxu0
      %v2708 = vadd.f32 0.0, %v2707
      %v2709 = vpop.f32.mrb[0].mxu0
      %2710 = vmatprep.mubr.f32.mxu0 0.0
      %2711 = vmatmul.mubr.f32.gmra.mrb[0].mxu0 %v2582
      %v2712 = vpop.f32.mrb[0].mxu0
      %v2713 = vadd.f32 0.0, %v2712
      %v2714 = vpop.f32.mrb[0].mxu0
      %2715 = vmatprep.mubr.f32.mxu0 0.0
      %2716 = vmatmul.mubr.f32.gmra.mrb[0].mxu0 %v2585
      %v2717 = vpop.f32.mrb[0].mxu0
      %v2718 = vadd.f32 0.0, %v2717
      %v2719 = vpop.f32.mrb[0].mxu0
      %2720 = vmatprep.mubr.f32.mxu0 0.0
      %2721 = vmatmul.mubr.f32.gmra.mrb[0].mxu0 %v2588
      %v2722 = vpop.f32.mrb[0].mxu0
      %v2723 = vadd.f32 0.0, %v2722
      %v2724 = vpop.f32.mrb[0].mxu0
      %2725 = vmatprep.mubr.f32.mxu0 0.0
      %2726 = vmatmul.mubr.f32.gmra.mrb[0].mxu0 %v2591
      %v2727 = vpop.f32.mrb[0].mxu0
      %v2728 = vadd.f32 0.0, %v2727
      %v2729 = vpop.f32.mrb[0].mxu0
      %2730 = vmatprep.mubr.f32.mxu0 0.0
      %2731 = vmatmul.mubr.f32.gmra.mrb[0].mxu0 %v2594
      %v2732 = vpop.f32.mrb[0].mxu0
      %v2733 = vadd.f32 0.0, %v2732
      %v2734 = vpop.f32.mrb[0].mxu0
      %2735 = vmatprep.mubr.f32.mxu0 0.0
      %2736 = vmatmul.mubr.f32.gmra.mrb[0].mxu0 %v2597
      %v2737 = vpop.f32.mrb[0].mxu0
      %v2738 = vadd.f32 0.0, %v2737
      %v2739 = vpop.f32.mrb[0].mxu0
      %2740 = vmatprep.mubr.f32.mxu0 0.0
      %2741 = vmatmul.mubr.f32.gmra.mrb[0].mxu0 %v2600
      %v2742 = vpop.f32.mrb[0].mxu0
      %v2743 = vadd.f32 0.0, %v2742
      %v2744 = vpop.f32.mrb[0].mxu0
      %2745 = vmatprep.mubr.f32.mxu0 0.0
      %2746 = vmatmul.mubr.f32.gmra.mrb[0].mxu0 %v2603
      %v2747 = vpop.f32.mrb[0].mxu0
      %v2748 = vadd.f32 0.0, %v2747
      %v2749 = vpop.f32.mrb[0].mxu0
      %2750 = vmatprep.mubr.f32.mxu0 0.0
      %2751 = vmatmul.mubr.f32.gmra.mrb[0].mxu0 %v2606
      %v2752 = vpop.f32.mrb[0].mxu0
      %v2753 = vadd.f32 0.0, %v2752
      %v2754 = vpop.f32.mrb[0].mxu0
      %2755 = vmatprep.mubr.f32.mxu0 0.0
      %2756 = vmatmul.mubr.f32.gmra.mrb[0].mxu0 %v2609
      %v2757 = vpop.f32.mrb[0].mxu0
      %v2758 = vadd.f32 0.0, %v2757
      %v2759 = vpop.f32.mrb[0].mxu0
      %2760 = vmatprep.mubr.f32.mxu0 0.0
      %2761 = vmatmul.mubr.f32.gmra.mrb[0].mxu0 %v2612
      %v2762 = vpop.f32.mrb[0].mxu0
      %v2763 = vadd.f32 0.0, %v2762
      %v2764 = vpop.f32.mrb[0].mxu0
      %2765 = vmatprep.mubr.f32.mxu0 0.0
      %2766 = vmatmul.mubr.f32.gmra.mrb[0].mxu0 %v2615
      %v2767 = vpop.f32.mrb[0].mxu0
      %v2768 = vadd.f32 0.0, %v2767
      %v2769 = vpop.f32.mrb[0].mxu0
      %2770 = vmatprep.mubr.f32.mxu0 0.0
      %2771 = vmatmul.mubr.f32.gmra.mrb[0].mxu0 %v2618
      %v2772 = vpop.f32.mrb[0].mxu0
      %v2773 = vadd.f32 0.0, %v2772
      %v2774 = vpop.f32.mrb[0].mxu0
      %2775 = vmatprep.mubr.f32.mxu0 0.0
      %2776 = vmatmul.mubr.f32.gmra.mrb[0].mxu0 %v2621
      %v2777 = vpop.f32.mrb[0].mxu0
      %v2778 = vadd.f32 0.0, %v2777
      %v2779 = vpop.f32.mrb[0].mxu0
      %2780 = vmatprep.mubr.f32.mxu0 0.0
      %2781 = vmatmul.mubr.f32.gmra.mrb[0].mxu0 %v2624
      %v2782 = vpop.f32.mrb[0].mxu0
      %v2783 = vadd.f32 0.0, %v2782
      %v2784 = vpop.f32.mrb[0].mxu0
      %2785 = vmatprep.mubr.f32.mxu0 0.0
      %2786 = vmatmul.mubr.f32.gmra.mrb[0].mxu0 %v2627
      %v2787 = vpop.f32.mrb[0].mxu0
      %v2788 = vadd.f32 0.0, %v2787
      %v2789 = vpop.f32.mrb[0].mxu0
      %2790 = vmatprep.mubr.f32.mxu0 0.0
      %2791 = vmatmul.mubr.f32.gmra.mrb[0].mxu0 %v2630
      %v2792 = vpop.f32.mrb[0].mxu0
      %v2793 = vadd.f32 0.0, %v2792
      %v2794 = vpop.f32.mrb[0].mxu0
      %2795 = vmatprep.mubr.f32.mxu0 0.0
      %2796 = vmatmul.mubr.f32.gmra.mrb[0].mxu0 %v2633
      %v2797 = vpop.f32.mrb[0].mxu0
      %v2798 = vadd.f32 0.0, %v2797
      %v2799 = vpop.f32.mrb[0].mxu0
      %2800 = vmatprep.mubr.f32.mxu0 0.0
      %2801 = vmatmul.mubr.f32.gmra.mrb[0].mxu0 %v2636
      %v2802 = vpop.f32.mrb[0].mxu0
      %v2803 = vadd.f32 0.0, %v2802
      %v2804 = vpop.f32.mrb[0].mxu0
      %2805 = vdwg.mxu0
      %v2806 = vadd.f32 %v2536, %v2708
      %v2807 = vadd.f32 %v2537, %v2713
      %v2808 = vadd.f32 %v2538, %v2718
      %v2809 = vadd.f32 %v2539, %v2723
      %v2810 = vadd.f32 %v2540, %v2728
      %v2811 = vadd.f32 %v2541, %v2733
      %v2812 = vadd.f32 %v2542, %v2738
      %v2813 = vadd.f32 %v2543, %v2743
      %v2814 = vadd.f32 %v2544, %v2748
      %v2815 = vadd.f32 %v2545, %v2753
      %v2816 = vadd.f32 %v2546, %v2758
      %v2817 = vadd.f32 %v2547, %v2763
      %v2818 = vadd.f32 %v2548, %v2768
      %v2819 = vadd.f32 %v2549, %v2773
      %v2820 = vadd.f32 %v2550, %v2778
      %v2821 = vadd.f32 %v2551, %v2783
      %v2822 = vadd.f32 %v2552, %v2788
      %v2823 = vadd.f32 %v2553, %v2793
      %v2824 = vadd.f32 %v2554, %v2798
      %v2825 = vadd.f32 %v2555, %v2803
      %v2826 = vld [vmem:[%s2] sm:$0x1]
      %v2828 = vlaneseq
      %v2829 = vshrl.u32 %v2828, 7
      %v2830 = vsub.s32 0, %v2829
      %v2831 = vrot.slane %v2826, %v2830
      %v2833 = vmul.f32 %v2806, %v2831
      %v2834 = vmul.f32 %v2807, %v2831
      %v2835 = vmul.f32 %v2808, %v2831
      %v2836 = vmul.f32 %v2809, %v2831
      %v2837 = vmul.f32 %v2810, %v2831
      %v2838 = vmul.f32 %v2811, %v2831
      %v2839 = vmul.f32 %v2812, %v2831
      %v2840 = vmul.f32 %v2813, %v2831
      %v2841 = vmul.f32 %v2814, %v2831
      %v2842 = vmul.f32 %v2815, %v2831
      %v2843 = vmul.f32 %v2816, %v2831
      %v2844 = vmul.f32 %v2817, %v2831
      %v2845 = vmul.f32 %v2818, %v2831
      %v2846 = vmul.f32 %v2819, %v2831
      %v2847 = vmul.f32 %v2820, %v2831
      %v2848 = vmul.f32 %v2821, %v2831
      %v2849 = vmul.f32 %v2822, %v2831
      %v2850 = vmul.f32 %v2823, %v2831
      %v2851 = vmul.f32 %v2824, %v2831
      %v2852 = vmul.f32 %v2825, %v2831
      %v2853 = vld [vmem:[%s3] sm:$0x1]
      %v2855 = vlaneseq
      %v2856 = vshrl.u32 %v2855, 7
      %v2857 = vsub.s32 0, %v2856
      %v2858 = vrot.slane %v2853, %v2857
      %v2860 = vadd.f32 %v2833, %v2858
      %v2861 = vadd.f32 %v2834, %v2858
      %v2862 = vadd.f32 %v2835, %v2858
      %v2863 = vadd.f32 %v2836, %v2858
      %v2864 = vadd.f32 %v2837, %v2858
      %v2865 = vadd.f32 %v2838, %v2858
      %v2866 = vadd.f32 %v2839, %v2858
      %v2867 = vadd.f32 %v2840, %v2858
      %v2868 = vadd.f32 %v2841, %v2858
      %v2869 = vadd.f32 %v2842, %v2858
      %v2870 = vadd.f32 %v2843, %v2858
      %v2871 = vadd.f32 %v2844, %v2858
      %v2872 = vadd.f32 %v2845, %v2858
      %v2873 = vadd.f32 %v2846, %v2858
      %v2874 = vadd.f32 %v2847, %v2858
      %v2875 = vadd.f32 %v2848, %v2858
      %v2876 = vadd.f32 %v2849, %v2858
      %v2877 = vadd.f32 %v2850, %v2858
      %v2878 = vadd.f32 %v2851, %v2858
      %v2879 = vadd.f32 %v2852, %v2858
      %v2880 = vmax.f32 %v2860, 0.0
      %v2881 = vmax.f32 %v2861, 0.0
      %v2882 = vmax.f32 %v2862, 0.0
      %v2883 = vmax.f32 %v2863, 0.0
      %v2884 = vmax.f32 %v2864, 0.0
      %v2885 = vmax.f32 %v2865, 0.0
      %v2886 = vmax.f32 %v2866, 0.0
      %v2887 = vmax.f32 %v2867, 0.0
      %v2888 = vmax.f32 %v2868, 0.0
      %v2889 = vmax.f32 %v2869, 0.0
      %v2890 = vmax.f32 %v2870, 0.0
      %v2891 = vmax.f32 %v2871, 0.0
      %v2892 = vmax.f32 %v2872, 0.0
      %v2893 = vmax.f32 %v2873, 0.0
      %v2894 = vmax.f32 %v2874, 0.0
      %v2895 = vmax.f32 %v2875, 0.0
      %v2896 = vmax.f32 %v2876, 0.0
      %v2897 = vmax.f32 %v2877, 0.0
      %v2898 = vmax.f32 %v2878, 0.0
      %v2899 = vmax.f32 %v2879, 0.0
      %vm2900 = vcmask 57344
      %2901 = vst.msk [vmem:[#allocation3] sm:$0x1] %vm2900, 0.0
      %2902 = vst.msk [vmem:[#allocation3 + $0x18] sm:$0x1] %vm2900, 0.0
      %2903 = vst.msk [vmem:[#allocation3 + $0x30] sm:$0x1] %vm2900, 0.0
      %2904 = vst.msk [vmem:[#allocation3 + $0x48] sm:$0x1] %vm2900, 0.0
      %2905 = vst.msk [vmem:[#allocation3 + $0x60] sm:$0x1] %vm2900, 0.0
      %2906 = vst.msk [vmem:[#allocation3 + $0x78] sm:$0x1] %vm2900, 0.0
      %2907 = vst.msk [vmem:[#allocation3 + $0x90] sm:$0x1] %vm2900, 0.0
      %2908 = vst.msk [vmem:[#allocation3 + $0xa8] sm:$0x1] %vm2900, 0.0
      %2909 = vst.msk [vmem:[#allocation3 + $0xc0] sm:$0x1] %vm2900, 0.0
      %2910 = vst.msk [vmem:[#allocation3 + $0xd8] sm:$0x1] %vm2900, 0.0
      %2911 = vst.msk [vmem:[#allocation3 + $0x11] sm:$0x1] %vm2900, 0.0
      %2912 = vst.msk [vmem:[#allocation3 + $0x29] sm:$0x1] %vm2900, 0.0
      %2913 = vst.msk [vmem:[#allocation3 + $0x41] sm:$0x1] %vm2900, 0.0
      %2914 = vst.msk [vmem:[#allocation3 + $0x59] sm:$0x1] %vm2900, 0.0
      %2915 = vst.msk [vmem:[#allocation3 + $0x71] sm:$0x1] %vm2900, 0.0
      %2916 = vst.msk [vmem:[#allocation3 + $0x89] sm:$0x1] %vm2900, 0.0
      %2917 = vst.msk [vmem:[#allocation3 + $0xa1] sm:$0x1] %vm2900, 0.0
      %2918 = vst.msk [vmem:[#allocation3 + $0xb9] sm:$0x1] %vm2900, 0.0
      %2919 = vst.msk [vmem:[#allocation3 + $0xd1] sm:$0x1] %vm2900, 0.0
      %2920 = vst.msk [vmem:[#allocation3 + $0xe9] sm:$0x1] %vm2900, 0.0
      %vm2921 = vcmask 64512
      %2922 = vst.msk [vmem:[#allocation3 + $0x1] sm:$0xff] %vm2921, %v2880
      %2923 = vst.msk [vmem:[#allocation3 + $0x9] sm:$0xff] %vm2921, %v2881
      %2924 = vst.msk [vmem:[#allocation3 + $0x19] sm:$0xff] %vm2921, %v2882
      %2925 = vst.msk [vmem:[#allocation3 + $0x21] sm:$0xff] %vm2921, %v2883
      %2926 = vst.msk [vmem:[#allocation3 + $0x31] sm:$0xff] %vm2921, %v2884
      %2927 = vst.msk [vmem:[#allocation3 + $0x39] sm:$0xff] %vm2921, %v2885
      %2928 = vst.msk [vmem:[#allocation3 + $0x49] sm:$0xff] %vm2921, %v2886
      %2929 = vst.msk [vmem:[#allocation3 + $0x51] sm:$0xff] %vm2921, %v2887
      %2930 = vst.msk [vmem:[#allocation3 + $0x61] sm:$0xff] %vm2921, %v2888
      %2931 = vst.msk [vmem:[#allocation3 + $0x69] sm:$0xff] %vm2921, %v2889
      %2932 = vst.msk [vmem:[#allocation3 + $0x79] sm:$0xff] %vm2921, %v2890
      %2933 = vst.msk [vmem:[#allocation3 + $0x81] sm:$0xff] %vm2921, %v2891
      %2934 = vst.msk [vmem:[#allocation3 + $0x91] sm:$0xff] %vm2921, %v2892
      %2935 = vst.msk [vmem:[#allocation3 + $0x99] sm:$0xff] %vm2921, %v2893
      %2936 = vst.msk [vmem:[#allocation3 + $0xa9] sm:$0xff] %vm2921, %v2894
      %2937 = vst.msk [vmem:[#allocation3 + $0xb1] sm:$0xff] %vm2921, %v2895
      %2938 = vst.msk [vmem:[#allocation3 + $0xc1] sm:$0xff] %vm2921, %v2896
      %2939 = vst.msk [vmem:[#allocation3 + $0xc9] sm:$0xff] %vm2921, %v2897
      %2940 = vst.msk [vmem:[#allocation3 + $0xd9] sm:$0xff] %vm2921, %v2898
      %2941 = vst.msk [vmem:[#allocation3 + $0xe1] sm:$0xff] %vm2921, %v2899
      // Predicated region
      $region57: #{tpu_custom_call.1} parent=47 // pred_check
        %p2942 = pneg %p329
      $region58: #{tpu_custom_call.1} parent=47 // pred_check_branch
        %2944 = sbr.rel (%p2942) target = $region60
      $region59: #{tpu_custom_call.1} parent=47 // pred_region
        %2945 = vst.msk [vmem:[#allocation3] sm:$0xff] %vm2921, 0.0
        %2946 = vst.msk [vmem:[#allocation3 + $0x8] sm:$0xff] %vm2921, 0.0
        %vm2947 = vcmask 58368
        %2948 = vst.msk [vmem:[#allocation3 + $0x10] sm:$0x3] %vm2947, 0.0
      $region60: #{tpu_custom_call.1} parent=47 // pred_fallthru
        _
      // Predicated region
      $region61: #{tpu_custom_call.1} parent=47 // pred_check
        %p2949 = pneg %p379
      $region62: #{tpu_custom_call.1} parent=47 // pred_check_branch
        %2951 = sbr.rel (%p2949) target = $region64
      $region63: #{tpu_custom_call.1} parent=47 // pred_region
        %s2952 = scalar_lea.vmem [#allocation3], 216
        %2953 = vst.msk [vmem:[%s2952] sm:$0xff] %vm2921, 0.0
        %2954 = vst.msk [vmem:[%s2952 + $0x8] sm:$0xff] %vm2921, 0.0
        %vm2955 = vcmask 58368
        %2956 = vst.msk [vmem:[%s2952 + $0x10] sm:$0x3] %vm2955, 0.0
      $region64: #{tpu_custom_call.1} parent=47 // pred_fallthru
        _
      %v2957 = vld [vmem:[#allocation3] sm:$0xff]
      %v2958 = vld [vmem:[#allocation3 + $0x8] sm:$0xff]
      %v2959 = vld [vmem:[#allocation3 + $0x18] sm:$0xff]
      %v2960 = vld [vmem:[#allocation3 + $0x20] sm:$0xff]
      %v2961 = vld [vmem:[#allocation3 + $0x30] sm:$0xff]
      %v2962 = vld [vmem:[#allocation3 + $0x38] sm:$0xff]
      %v2963 = vld [vmem:[#allocation3 + $0x48] sm:$0xff]
      %v2964 = vld [vmem:[#allocation3 + $0x50] sm:$0xff]
      %v2965 = vld [vmem:[#allocation3 + $0x60] sm:$0xff]
      %v2966 = vld [vmem:[#allocation3 + $0x68] sm:$0xff]
      %v2967 = vld [vmem:[#allocation3 + $0x78] sm:$0xff]
      %v2968 = vld [vmem:[#allocation3 + $0x80] sm:$0xff]
      %v2969 = vld [vmem:[#allocation3 + $0x90] sm:$0xff]
      %v2970 = vld [vmem:[#allocation3 + $0x98] sm:$0xff]
      %v2971 = vld [vmem:[#allocation3 + $0xa8] sm:$0xff]
      %v2972 = vld [vmem:[#allocation3 + $0xb0] sm:$0xff]
      %v2973 = vld [vmem:[%s4] sm:$0xff]
      %v2974 = vld [vmem:[#allocation3 + $0x1] sm:$0xff]
      %v2975 = vld [vmem:[#allocation3 + $0x9] sm:$0xff]
      %v2976 = vld [vmem:[#allocation3 + $0x19] sm:$0xff]
      %v2977 = vld [vmem:[#allocation3 + $0x21] sm:$0xff]
      %v2978 = vld [vmem:[#allocation3 + $0x31] sm:$0xff]
      %v2979 = vld [vmem:[#allocation3 + $0x39] sm:$0xff]
      %v2980 = vld [vmem:[#allocation3 + $0x49] sm:$0xff]
      %v2981 = vld [vmem:[#allocation3 + $0x51] sm:$0xff]
      %v2982 = vld [vmem:[#allocation3 + $0x61] sm:$0xff]
      %v2983 = vld [vmem:[#allocation3 + $0x69] sm:$0xff]
      %v2984 = vld [vmem:[#allocation3 + $0x79] sm:$0xff]
      %v2985 = vld [vmem:[#allocation3 + $0x81] sm:$0xff]
      %v2986 = vld [vmem:[#allocation3 + $0x91] sm:$0xff]
      %v2987 = vld [vmem:[#allocation3 + $0x99] sm:$0xff]
      %v2988 = vld [vmem:[#allocation3 + $0xa9] sm:$0xff]
      %v2989 = vld [vmem:[#allocation3 + $0xb1] sm:$0xff]
      %s2990 = scalar_lea.vmem %s4, 8
      %v2991 = vld [vmem:[%s2990] sm:$0xff]
      %v2993 = vsel %vm2921, %v2974, 0
      %v2996 = vsel %vm2921, %v2975, 0
      %v2999 = vsel %vm2921, %v2976, 0
      %v3002 = vsel %vm2921, %v2977, 0
      %v3005 = vsel %vm2921, %v2978, 0
      %v3008 = vsel %vm2921, %v2979, 0
      %v3011 = vsel %vm2921, %v2980, 0
      %v3014 = vsel %vm2921, %v2981, 0
      %v3017 = vsel %vm2921, %v2982, 0
      %v3020 = vsel %vm2921, %v2983, 0
      %v3023 = vsel %vm2921, %v2984, 0
      %v3026 = vsel %vm2921, %v2985, 0
      %v3029 = vsel %vm2921, %v2986, 0
      %v3032 = vsel %vm2921, %v2987, 0
      %v3035 = vsel %vm2921, %v2988, 0
      %v3038 = vsel %vm2921, %v2989, 0
      %3040 = vmatprep.subr.mxu0 0.0
      %3041 = vmatpush1.msra.mxu0 %v2991
      %3042 = vmatprep.subr.mxu0 0.0
      %3043 = vmatpush1.msra.mxu0 0.0
      %3044 = vmatprep.subr.mxu0 0.0
      %3045 = vmatpush1.msra.mxu0 0.0
      %3046 = vmatprep.subr.mxu0 0.0
      %3047 = vmatpush1.msra.mxu0 0.0
      %3048 = vmatprep.subr.mxu0 0.0
      %3049 = vmatpush1.msra.mxu0 0.0
      %3050 = vmatprep.subr.mxu0 0.0
      %3051 = vmatpush1.msra.mxu0 0.0
      %3052 = vmatprep.subr.mxu0 0.0
      %3053 = vmatpush1.msra.mxu0 0.0
      %3054 = vmatprep.subr.mxu0 0.0
      %3055 = vmatpush1.msra.mxu0 0.0
      %3056 = vmatprep.subr.mxu0 0.0
      %3057 = vmatpush1.msra.mxu0 0.0
      %3058 = vmatprep.subr.mxu0 0.0
      %3059 = vmatpush1.msra.mxu0 0.0
      %3060 = vmatprep.subr.mxu0 0.0
      %3061 = vmatpush1.msra.mxu0 0.0
      %3062 = vmatprep.subr.mxu0 0.0
      %3063 = vmatpush1.msra.mxu0 0.0
      %3064 = vmatprep.subr.mxu0 0.0
      %3065 = vmatpush1.msra.mxu0 0.0
      %3066 = vmatprep.subr.mxu0 0.0
      %3067 = vmatpush1.msra.mxu0 0.0
      %3068 = vmatprep.subr.mxu0 0.0
      %3069 = vmatpush1.msra.mxu0 0.0
      %3070 = vmatprep.subr.mxu0 0.0
      %3071 = vmatpush1.msra.mxu0 0.0
      %3072 = vmatprep.subr.mxu0 0.0
      %3073 = vmatpush1.msra.mxu0 0.0
      %3074 = vmatprep.subr.mxu0 0.0
      %3075 = vmatpush1.msra.mxu0 0.0
      %3076 = vmatprep.subr.mxu0 0.0
      %3077 = vmatpush1.msra.mxu0 0.0
      %3078 = vmatprep.subr.mxu0 0.0
      %3079 = vmatpush1.msra.mxu0 0.0
      %3080 = vmatprep.subr.mxu0 0.0
      %3081 = vmatpush1.msra.mxu0 0.0
      %3082 = vmatprep.subr.mxu0 0.0
      %3083 = vmatpush1.msra.mxu0 0.0
      %3084 = vmatprep.subr.mxu0 0.0
      %3085 = vmatpush1.msra.mxu0 0.0
      %3086 = vmatprep.subr.mxu0 0.0
      %3087 = vmatpush1.msra.mxu0 0.0
      %3088 = vmatprep.subr.mxu0 0.0
      %3089 = vmatpush1.msra.mxu0 0.0
      %3090 = vmatprep.subr.mxu0 0.0
      %3091 = vmatpush1.msra.mxu0 0.0
      %3092 = vmatprep.subr.mxu0 0.0
      %3093 = vmatpush1.msra.mxu0 0.0
      %3094 = vmatprep.subr.mxu0 0.0
      %3095 = vmatpush1.msra.mxu0 0.0
      %3096 = vmatprep.subr.mxu0 0.0
      %3097 = vmatpush1.msra.mxu0 0.0
      %3098 = vmatprep.subr.mxu0 0.0
      %3099 = vmatpush1.msra.mxu0 0.0
      %3100 = vmatprep.subr.mxu0 0.0
      %3101 = vmatpush1.msra.mxu0 0.0
      %3102 = vmatprep.subr.mxu0 0.0
      %3103 = vmatpush1.msra.mxu0 0.0
      %3104 = vmatprep.mubr.f32.mxu0 0.0
      %3105 = vmatmul.mubr.f32.gmra.mrb[0].mxu0 %v2993
      %v3106 = vpop.f32.mrb[0].mxu0
      %v3107 = vadd.f32 0.0, %v3106
      %v3108 = vpop.f32.mrb[0].mxu0
      %3109 = vmatprep.mubr.f32.mxu0 0.0
      %3110 = vmatmul.mubr.f32.gmra.mrb[0].mxu0 %v2996
      %v3111 = vpop.f32.mrb[0].mxu0
      %v3112 = vadd.f32 0.0, %v3111
      %v3113 = vpop.f32.mrb[0].mxu0
      %3114 = vmatprep.mubr.f32.mxu0 0.0
      %3115 = vmatmul.mubr.f32.gmra.mrb[0].mxu0 %v2999
      %v3116 = vpop.f32.mrb[0].mxu0
      %v3117 = vadd.f32 0.0, %v3116
      %v3118 = vpop.f32.mrb[0].mxu0
      %3119 = vmatprep.mubr.f32.mxu0 0.0
      %3120 = vmatmul.mubr.f32.gmra.mrb[0].mxu0 %v3002
      %v3121 = vpop.f32.mrb[0].mxu0
      %v3122 = vadd.f32 0.0, %v3121
      %v3123 = vpop.f32.mrb[0].mxu0
      %3124 = vmatprep.mubr.f32.mxu0 0.0
      %3125 = vmatmul.mubr.f32.gmra.mrb[0].mxu0 %v3005
      %v3126 = vpop.f32.mrb[0].mxu0
      %v3127 = vadd.f32 0.0, %v3126
      %v3128 = vpop.f32.mrb[0].mxu0
      %3129 = vmatprep.mubr.f32.mxu0 0.0
      %3130 = vmatmul.mubr.f32.gmra.mrb[0].mxu0 %v3008
      %v3131 = vpop.f32.mrb[0].mxu0
      %v3132 = vadd.f32 0.0, %v3131
      %v3133 = vpop.f32.mrb[0].mxu0
      %3134 = vmatprep.mubr.f32.mxu0 0.0
      %3135 = vmatmul.mubr.f32.gmra.mrb[0].mxu0 %v3011
      %v3136 = vpop.f32.mrb[0].mxu0
      %v3137 = vadd.f32 0.0, %v3136
      %v3138 = vpop.f32.mrb[0].mxu0
      %3139 = vmatprep.mubr.f32.mxu0 0.0
      %3140 = vmatmul.mubr.f32.gmra.mrb[0].mxu0 %v3014
      %v3141 = vpop.f32.mrb[0].mxu0
      %v3142 = vadd.f32 0.0, %v3141
      %v3143 = vpop.f32.mrb[0].mxu0
      %3144 = vmatprep.mubr.f32.mxu0 0.0
      %3145 = vmatmul.mubr.f32.gmra.mrb[0].mxu0 %v3017
      %v3146 = vpop.f32.mrb[0].mxu0
      %v3147 = vadd.f32 0.0, %v3146
      %v3148 = vpop.f32.mrb[0].mxu0
      %3149 = vmatprep.mubr.f32.mxu0 0.0
      %3150 = vmatmul.mubr.f32.gmra.mrb[0].mxu0 %v3020
      %v3151 = vpop.f32.mrb[0].mxu0
      %v3152 = vadd.f32 0.0, %v3151
      %v3153 = vpop.f32.mrb[0].mxu0
      %3154 = vmatprep.mubr.f32.mxu0 0.0
      %3155 = vmatmul.mubr.f32.gmra.mrb[0].mxu0 %v3023
      %v3156 = vpop.f32.mrb[0].mxu0
      %v3157 = vadd.f32 0.0, %v3156
      %v3158 = vpop.f32.mrb[0].mxu0
      %3159 = vmatprep.mubr.f32.mxu0 0.0
      %3160 = vmatmul.mubr.f32.gmra.mrb[0].mxu0 %v3026
      %v3161 = vpop.f32.mrb[0].mxu0
      %v3162 = vadd.f32 0.0, %v3161
      %v3163 = vpop.f32.mrb[0].mxu0
      %3164 = vmatprep.mubr.f32.mxu0 0.0
      %3165 = vmatmul.mubr.f32.gmra.mrb[0].mxu0 %v3029
      %v3166 = vpop.f32.mrb[0].mxu0
      %v3167 = vadd.f32 0.0, %v3166
      %v3168 = vpop.f32.mrb[0].mxu0
      %3169 = vmatprep.mubr.f32.mxu0 0.0
      %3170 = vmatmul.mubr.f32.gmra.mrb[0].mxu0 %v3032
      %v3171 = vpop.f32.mrb[0].mxu0
      %v3172 = vadd.f32 0.0, %v3171
      %v3173 = vpop.f32.mrb[0].mxu0
      %3174 = vmatprep.mubr.f32.mxu0 0.0
      %3175 = vmatmul.mubr.f32.gmra.mrb[0].mxu0 %v3035
      %v3176 = vpop.f32.mrb[0].mxu0
      %v3177 = vadd.f32 0.0, %v3176
      %v3178 = vpop.f32.mrb[0].mxu0
      %3179 = vmatprep.mubr.f32.mxu0 0.0
      %3180 = vmatmul.mubr.f32.gmra.mrb[0].mxu0 %v3038
      %v3181 = vpop.f32.mrb[0].mxu0
      %v3182 = vadd.f32 0.0, %v3181
      %v3183 = vpop.f32.mrb[0].mxu0
      %3184 = vdwg.mxu0
      %v3186 = vsel %vm2921, %v2957, 0
      %v3189 = vsel %vm2921, %v2958, 0
      %v3192 = vsel %vm2921, %v2959, 0
      %v3195 = vsel %vm2921, %v2960, 0
      %v3198 = vsel %vm2921, %v2961, 0
      %v3201 = vsel %vm2921, %v2962, 0
      %v3204 = vsel %vm2921, %v2963, 0
      %v3207 = vsel %vm2921, %v2964, 0
      %v3210 = vsel %vm2921, %v2965, 0
      %v3213 = vsel %vm2921, %v2966, 0
      %v3216 = vsel %vm2921, %v2967, 0
      %v3219 = vsel %vm2921, %v2968, 0
      %v3222 = vsel %vm2921, %v2969, 0
      %v3225 = vsel %vm2921, %v2970, 0
      %v3228 = vsel %vm2921, %v2971, 0
      %v3231 = vsel %vm2921, %v2972, 0
      %3233 = vmatprep.subr.mxu0 0.0
      %3234 = vmatpush1.msra.mxu0 %v2973
      %3235 = vmatprep.subr.mxu0 0.0
      %3236 = vmatpush1.msra.mxu0 0.0
      %3237 = vmatprep.subr.mxu0 0.0
      %3238 = vmatpush1.msra.mxu0 0.0
      %3239 = vmatprep.subr.mxu0 0.0
      %3240 = vmatpush1.msra.mxu0 0.0
      %3241 = vmatprep.subr.mxu0 0.0
      %3242 = vmatpush1.msra.mxu0 0.0
      %3243 = vmatprep.subr.mxu0 0.0
      %3244 = vmatpush1.msra.mxu0 0.0
      %3245 = vmatprep.subr.mxu0 0.0
      %3246 = vmatpush1.msra.mxu0 0.0
      %3247 = vmatprep.subr.mxu0 0.0
      %3248 = vmatpush1.msra.mxu0 0.0
      %3249 = vmatprep.subr.mxu0 0.0
      %3250 = vmatpush1.msra.mxu0 0.0
      %3251 = vmatprep.subr.mxu0 0.0
      %3252 = vmatpush1.msra.mxu0 0.0
      %3253 = vmatprep.subr.mxu0 0.0
      %3254 = vmatpush1.msra.mxu0 0.0
      %3255 = vmatprep.subr.mxu0 0.0
      %3256 = vmatpush1.msra.mxu0 0.0
      %3257 = vmatprep.subr.mxu0 0.0
      %3258 = vmatpush1.msra.mxu0 0.0
      %3259 = vmatprep.subr.mxu0 0.0
      %3260 = vmatpush1.msra.mxu0 0.0
      %3261 = vmatprep.subr.mxu0 0.0
      %3262 = vmatpush1.msra.mxu0 0.0
      %3263 = vmatprep.subr.mxu0 0.0
      %3264 = vmatpush1.msra.mxu0 0.0
      %3265 = vmatprep.subr.mxu0 0.0
      %3266 = vmatpush1.msra.mxu0 0.0
      %3267 = vmatprep.subr.mxu0 0.0
      %3268 = vmatpush1.msra.mxu0 0.0
      %3269 = vmatprep.subr.mxu0 0.0
      %3270 = vmatpush1.msra.mxu0 0.0
      %3271 = vmatprep.subr.mxu0 0.0
      %3272 = vmatpush1.msra.mxu0 0.0
      %3273 = vmatprep.subr.mxu0 0.0
      %3274 = vmatpush1.msra.mxu0 0.0
      %3275 = vmatprep.subr.mxu0 0.0
      %3276 = vmatpush1.msra.mxu0 0.0
      %3277 = vmatprep.subr.mxu0 0.0
      %3278 = vmatpush1.msra.mxu0 0.0
      %3279 = vmatprep.subr.mxu0 0.0
      %3280 = vmatpush1.msra.mxu0 0.0
      %3281 = vmatprep.subr.mxu0 0.0
      %3282 = vmatpush1.msra.mxu0 0.0
      %3283 = vmatprep.subr.mxu0 0.0
      %3284 = vmatpush1.msra.mxu0 0.0
      %3285 = vmatprep.subr.mxu0 0.0
      %3286 = vmatpush1.msra.mxu0 0.0
      %3287 = vmatprep.subr.mxu0 0.0
      %3288 = vmatpush1.msra.mxu0 0.0
      %3289 = vmatprep.subr.mxu0 0.0
      %3290 = vmatpush1.msra.mxu0 0.0
      %3291 = vmatprep.subr.mxu0 0.0
      %3292 = vmatpush1.msra.mxu0 0.0
      %3293 = vmatprep.subr.mxu0 0.0
      %3294 = vmatpush1.msra.mxu0 0.0
      %3295 = vmatprep.subr.mxu0 0.0
      %3296 = vmatpush1.msra.mxu0 0.0
      %3297 = vmatprep.mubr.f32.mxu0 0.0
      %3298 = vmatmul.mubr.f32.gmra.mrb[0].mxu0 %v3186
      %v3299 = vpop.f32.mrb[0].mxu0
      %v3300 = vadd.f32 %v3107, %v3299
      %v3301 = vpop.f32.mrb[0].mxu0
      %3302 = vmatprep.mubr.f32.mxu0 0.0
      %3303 = vmatmul.mubr.f32.gmra.mrb[0].mxu0 %v3189
      %v3304 = vpop.f32.mrb[0].mxu0
      %v3305 = vadd.f32 %v3112, %v3304
      %v3306 = vpop.f32.mrb[0].mxu0
      %3307 = vmatprep.mubr.f32.mxu0 0.0
      %3308 = vmatmul.mubr.f32.gmra.mrb[0].mxu0 %v3192
      %v3309 = vpop.f32.mrb[0].mxu0
      %v3310 = vadd.f32 %v3117, %v3309
      %v3311 = vpop.f32.mrb[0].mxu0
      %3312 = vmatprep.mubr.f32.mxu0 0.0
      %3313 = vmatmul.mubr.f32.gmra.mrb[0].mxu0 %v3195
      %v3314 = vpop.f32.mrb[0].mxu0
      %v3315 = vadd.f32 %v3122, %v3314
      %v3316 = vpop.f32.mrb[0].mxu0
      %3317 = vmatprep.mubr.f32.mxu0 0.0
      %3318 = vmatmul.mubr.f32.gmra.mrb[0].mxu0 %v3198
      %v3319 = vpop.f32.mrb[0].mxu0
      %v3320 = vadd.f32 %v3127, %v3319
      %v3321 = vpop.f32.mrb[0].mxu0
      %3322 = vmatprep.mubr.f32.mxu0 0.0
      %3323 = vmatmul.mubr.f32.gmra.mrb[0].mxu0 %v3201
      %v3324 = vpop.f32.mrb[0].mxu0
      %v3325 = vadd.f32 %v3132, %v3324
      %v3326 = vpop.f32.mrb[0].mxu0
      %3327 = vmatprep.mubr.f32.mxu0 0.0
      %3328 = vmatmul.mubr.f32.gmra.mrb[0].mxu0 %v3204
      %v3329 = vpop.f32.mrb[0].mxu0
      %v3330 = vadd.f32 %v3137, %v3329
      %v3331 = vpop.f32.mrb[0].mxu0
      %3332 = vmatprep.mubr.f32.mxu0 0.0
      %3333 = vmatmul.mubr.f32.gmra.mrb[0].mxu0 %v3207
      %v3334 = vpop.f32.mrb[0].mxu0
      %v3335 = vadd.f32 %v3142, %v3334
      %v3336 = vpop.f32.mrb[0].mxu0
      %3337 = vmatprep.mubr.f32.mxu0 0.0
      %3338 = vmatmul.mubr.f32.gmra.mrb[0].mxu0 %v3210
      %v3339 = vpop.f32.mrb[0].mxu0
      %v3340 = vadd.f32 %v3147, %v3339
      %v3341 = vpop.f32.mrb[0].mxu0
      %3342 = vmatprep.mubr.f32.mxu0 0.0
      %3343 = vmatmul.mubr.f32.gmra.mrb[0].mxu0 %v3213
      %v3344 = vpop.f32.mrb[0].mxu0
      %v3345 = vadd.f32 %v3152, %v3344
      %v3346 = vpop.f32.mrb[0].mxu0
      %3347 = vmatprep.mubr.f32.mxu0 0.0
      %3348 = vmatmul.mubr.f32.gmra.mrb[0].mxu0 %v3216
      %v3349 = vpop.f32.mrb[0].mxu0
      %v3350 = vadd.f32 %v3157, %v3349
      %v3351 = vpop.f32.mrb[0].mxu0
      %3352 = vmatprep.mubr.f32.mxu0 0.0
      %3353 = vmatmul.mubr.f32.gmra.mrb[0].mxu0 %v3219
      %v3354 = vpop.f32.mrb[0].mxu0
      %v3355 = vadd.f32 %v3162, %v3354
      %v3356 = vpop.f32.mrb[0].mxu0
      %3357 = vmatprep.mubr.f32.mxu0 0.0
      %3358 = vmatmul.mubr.f32.gmra.mrb[0].mxu0 %v3222
      %v3359 = vpop.f32.mrb[0].mxu0
      %v3360 = vadd.f32 %v3167, %v3359
      %v3361 = vpop.f32.mrb[0].mxu0
      %3362 = vmatprep.mubr.f32.mxu0 0.0
      %3363 = vmatmul.mubr.f32.gmra.mrb[0].mxu0 %v3225
      %v3364 = vpop.f32.mrb[0].mxu0
      %v3365 = vadd.f32 %v3172, %v3364
      %v3366 = vpop.f32.mrb[0].mxu0
      %3367 = vmatprep.mubr.f32.mxu0 0.0
      %3368 = vmatmul.mubr.f32.gmra.mrb[0].mxu0 %v3228
      %v3369 = vpop.f32.mrb[0].mxu0
      %v3370 = vadd.f32 %v3177, %v3369
      %v3371 = vpop.f32.mrb[0].mxu0
      %3372 = vmatprep.mubr.f32.mxu0 0.0
      %3373 = vmatmul.mubr.f32.gmra.mrb[0].mxu0 %v3231
      %v3374 = vpop.f32.mrb[0].mxu0
      %v3375 = vadd.f32 %v3182, %v3374
      %v3376 = vpop.f32.mrb[0].mxu0
      %3377 = vdwg.mxu0
      %v3378 = vld [vmem:[#allocation3 + $0x2] sm:$0xff]
      %v3379 = vld [vmem:[#allocation3 + $0xa] sm:$0xff]
      %v3380 = vld [vmem:[#allocation3 + $0x1a] sm:$0xff]
      %v3381 = vld [vmem:[#allocation3 + $0x22] sm:$0xff]
      %v3382 = vld [vmem:[#allocation3 + $0x32] sm:$0xff]
      %v3383 = vld [vmem:[#allocation3 + $0x3a] sm:$0xff]
      %v3384 = vld [vmem:[#allocation3 + $0x4a] sm:$0xff]
      %v3385 = vld [vmem:[#allocation3 + $0x52] sm:$0xff]
      %v3386 = vld [vmem:[#allocation3 + $0x62] sm:$0xff]
      %v3387 = vld [vmem:[#allocation3 + $0x6a] sm:$0xff]
      %v3388 = vld [vmem:[#allocation3 + $0x7a] sm:$0xff]
      %v3389 = vld [vmem:[#allocation3 + $0x82] sm:$0xff]
      %v3390 = vld [vmem:[#allocation3 + $0x92] sm:$0xff]
      %v3391 = vld [vmem:[#allocation3 + $0x9a] sm:$0xff]
      %v3392 = vld [vmem:[#allocation3 + $0xaa] sm:$0xff]
      %v3393 = vld [vmem:[#allocation3 + $0xb2] sm:$0xff]
      %s3394 = scalar_lea.vmem %s4, 16
      %v3395 = vld [vmem:[%s3394] sm:$0xff]
      %v3397 = vsel %vm2921, %v3378, 0
      %v3400 = vsel %vm2921, %v3379, 0
      %v3403 = vsel %vm2921, %v3380, 0
      %v3406 = vsel %vm2921, %v3381, 0
      %v3409 = vsel %vm2921, %v3382, 0
      %v3412 = vsel %vm2921, %v3383, 0
      %v3415 = vsel %vm2921, %v3384, 0
      %v3418 = vsel %vm2921, %v3385, 0
      %v3421 = vsel %vm2921, %v3386, 0
      %v3424 = vsel %vm2921, %v3387, 0
      %v3427 = vsel %vm2921, %v3388, 0
      %v3430 = vsel %vm2921, %v3389, 0
      %v3433 = vsel %vm2921, %v3390, 0
      %v3436 = vsel %vm2921, %v3391, 0
      %v3439 = vsel %vm2921, %v3392, 0
      %v3442 = vsel %vm2921, %v3393, 0
      %3444 = vmatprep.subr.mxu0 0.0
      %3445 = vmatpush1.msra.mxu0 %v3395
      %3446 = vmatprep.subr.mxu0 0.0
      %3447 = vmatpush1.msra.mxu0 0.0
      %3448 = vmatprep.subr.mxu0 0.0
      %3449 = vmatpush1.msra.mxu0 0.0
      %3450 = vmatprep.subr.mxu0 0.0
      %3451 = vmatpush1.msra.mxu0 0.0
      %3452 = vmatprep.subr.mxu0 0.0
      %3453 = vmatpush1.msra.mxu0 0.0
      %3454 = vmatprep.subr.mxu0 0.0
      %3455 = vmatpush1.msra.mxu0 0.0
      %3456 = vmatprep.subr.mxu0 0.0
      %3457 = vmatpush1.msra.mxu0 0.0
      %3458 = vmatprep.subr.mxu0 0.0
      %3459 = vmatpush1.msra.mxu0 0.0
      %3460 = vmatprep.subr.mxu0 0.0
      %3461 = vmatpush1.msra.mxu0 0.0
      %3462 = vmatprep.subr.mxu0 0.0
      %3463 = vmatpush1.msra.mxu0 0.0
      %3464 = vmatprep.subr.mxu0 0.0
      %3465 = vmatpush1.msra.mxu0 0.0
      %3466 = vmatprep.subr.mxu0 0.0
      %3467 = vmatpush1.msra.mxu0 0.0
      %3468 = vmatprep.subr.mxu0 0.0
      %3469 = vmatpush1.msra.mxu0 0.0
      %3470 = vmatprep.subr.mxu0 0.0
      %3471 = vmatpush1.msra.mxu0 0.0
      %3472 = vmatprep.subr.mxu0 0.0
      %3473 = vmatpush1.msra.mxu0 0.0
      %3474 = vmatprep.subr.mxu0 0.0
      %3475 = vmatpush1.msra.mxu0 0.0
      %3476 = vmatprep.subr.mxu0 0.0
      %3477 = vmatpush1.msra.mxu0 0.0
      %3478 = vmatprep.subr.mxu0 0.0
      %3479 = vmatpush1.msra.mxu0 0.0
      %3480 = vmatprep.subr.mxu0 0.0
      %3481 = vmatpush1.msra.mxu0 0.0
      %3482 = vmatprep.subr.mxu0 0.0
      %3483 = vmatpush1.msra.mxu0 0.0
      %3484 = vmatprep.subr.mxu0 0.0
      %3485 = vmatpush1.msra.mxu0 0.0
      %3486 = vmatprep.subr.mxu0 0.0
      %3487 = vmatpush1.msra.mxu0 0.0
      %3488 = vmatprep.subr.mxu0 0.0
      %3489 = vmatpush1.msra.mxu0 0.0
      %3490 = vmatprep.subr.mxu0 0.0
      %3491 = vmatpush1.msra.mxu0 0.0
      %3492 = vmatprep.subr.mxu0 0.0
      %3493 = vmatpush1.msra.mxu0 0.0
      %3494 = vmatprep.subr.mxu0 0.0
      %3495 = vmatpush1.msra.mxu0 0.0
      %3496 = vmatprep.subr.mxu0 0.0
      %3497 = vmatpush1.msra.mxu0 0.0
      %3498 = vmatprep.subr.mxu0 0.0
      %3499 = vmatpush1.msra.mxu0 0.0
      %3500 = vmatprep.subr.mxu0 0.0
      %3501 = vmatpush1.msra.mxu0 0.0
      %3502 = vmatprep.subr.mxu0 0.0
      %3503 = vmatpush1.msra.mxu0 0.0
      %3504 = vmatprep.subr.mxu0 0.0
      %3505 = vmatpush1.msra.mxu0 0.0
      %3506 = vmatprep.subr.mxu0 0.0
      %3507 = vmatpush1.msra.mxu0 0.0
      %3508 = vmatprep.mubr.f32.mxu0 0.0
      %3509 = vmatmul.mubr.f32.gmra.mrb[0].mxu0 %v3397
      %v3510 = vpop.f32.mrb[0].mxu0
      %v3511 = vadd.f32 0.0, %v3510
      %v3512 = vpop.f32.mrb[0].mxu0
      %3513 = vmatprep.mubr.f32.mxu0 0.0
      %3514 = vmatmul.mubr.f32.gmra.mrb[0].mxu0 %v3400
      %v3515 = vpop.f32.mrb[0].mxu0
      %v3516 = vadd.f32 0.0, %v3515
      %v3517 = vpop.f32.mrb[0].mxu0
      %3518 = vmatprep.mubr.f32.mxu0 0.0
      %3519 = vmatmul.mubr.f32.gmra.mrb[0].mxu0 %v3403
      %v3520 = vpop.f32.mrb[0].mxu0
      %v3521 = vadd.f32 0.0, %v3520
      %v3522 = vpop.f32.mrb[0].mxu0
      %3523 = vmatprep.mubr.f32.mxu0 0.0
      %3524 = vmatmul.mubr.f32.gmra.mrb[0].mxu0 %v3406
      %v3525 = vpop.f32.mrb[0].mxu0
      %v3526 = vadd.f32 0.0, %v3525
      %v3527 = vpop.f32.mrb[0].mxu0
      %3528 = vmatprep.mubr.f32.mxu0 0.0
      %3529 = vmatmul.mubr.f32.gmra.mrb[0].mxu0 %v3409
      %v3530 = vpop.f32.mrb[0].mxu0
      %v3531 = vadd.f32 0.0, %v3530
      %v3532 = vpop.f32.mrb[0].mxu0
      %3533 = vmatprep.mubr.f32.mxu0 0.0
      %3534 = vmatmul.mubr.f32.gmra.mrb[0].mxu0 %v3412
      %v3535 = vpop.f32.mrb[0].mxu0
      %v3536 = vadd.f32 0.0, %v3535
      %v3537 = vpop.f32.mrb[0].mxu0
      %3538 = vmatprep.mubr.f32.mxu0 0.0
      %3539 = vmatmul.mubr.f32.gmra.mrb[0].mxu0 %v3415
      %v3540 = vpop.f32.mrb[0].mxu0
      %v3541 = vadd.f32 0.0, %v3540
      %v3542 = vpop.f32.mrb[0].mxu0
      %3543 = vmatprep.mubr.f32.mxu0 0.0
      %3544 = vmatmul.mubr.f32.gmra.mrb[0].mxu0 %v3418
      %v3545 = vpop.f32.mrb[0].mxu0
      %v3546 = vadd.f32 0.0, %v3545
      %v3547 = vpop.f32.mrb[0].mxu0
      %3548 = vmatprep.mubr.f32.mxu0 0.0
      %3549 = vmatmul.mubr.f32.gmra.mrb[0].mxu0 %v3421
      %v3550 = vpop.f32.mrb[0].mxu0
      %v3551 = vadd.f32 0.0, %v3550
      %v3552 = vpop.f32.mrb[0].mxu0
      %3553 = vmatprep.mubr.f32.mxu0 0.0
      %3554 = vmatmul.mubr.f32.gmra.mrb[0].mxu0 %v3424
      %v3555 = vpop.f32.mrb[0].mxu0
      %v3556 = vadd.f32 0.0, %v3555
      %v3557 = vpop.f32.mrb[0].mxu0
      %3558 = vmatprep.mubr.f32.mxu0 0.0
      %3559 = vmatmul.mubr.f32.gmra.mrb[0].mxu0 %v3427
      %v3560 = vpop.f32.mrb[0].mxu0
      %v3561 = vadd.f32 0.0, %v3560
      %v3562 = vpop.f32.mrb[0].mxu0
      %3563 = vmatprep.mubr.f32.mxu0 0.0
      %3564 = vmatmul.mubr.f32.gmra.mrb[0].mxu0 %v3430
      %v3565 = vpop.f32.mrb[0].mxu0
      %v3566 = vadd.f32 0.0, %v3565
      %v3567 = vpop.f32.mrb[0].mxu0
      %3568 = vmatprep.mubr.f32.mxu0 0.0
      %3569 = vmatmul.mubr.f32.gmra.mrb[0].mxu0 %v3433
      %v3570 = vpop.f32.mrb[0].mxu0
      %v3571 = vadd.f32 0.0, %v3570
      %v3572 = vpop.f32.mrb[0].mxu0
      %3573 = vmatprep.mubr.f32.mxu0 0.0
      %3574 = vmatmul.mubr.f32.gmra.mrb[0].mxu0 %v3436
      %v3575 = vpop.f32.mrb[0].mxu0
      %v3576 = vadd.f32 0.0, %v3575
      %v3577 = vpop.f32.mrb[0].mxu0
      %3578 = vmatprep.mubr.f32.mxu0 0.0
      %3579 = vmatmul.mubr.f32.gmra.mrb[0].mxu0 %v3439
      %v3580 = vpop.f32.mrb[0].mxu0
      %v3581 = vadd.f32 0.0, %v3580
      %v3582 = vpop.f32.mrb[0].mxu0
      %3583 = vmatprep.mubr.f32.mxu0 0.0
      %3584 = vmatmul.mubr.f32.gmra.mrb[0].mxu0 %v3442
      %v3585 = vpop.f32.mrb[0].mxu0
      %v3586 = vadd.f32 0.0, %v3585
      %v3587 = vpop.f32.mrb[0].mxu0
      %3588 = vdwg.mxu0
      %v3589 = vadd.f32 %v3300, %v3511
      %v3590 = vadd.f32 %v3305, %v3516
      %v3591 = vadd.f32 %v3310, %v3521
      %v3592 = vadd.f32 %v3315, %v3526
      %v3593 = vadd.f32 %v3320, %v3531
      %v3594 = vadd.f32 %v3325, %v3536
      %v3595 = vadd.f32 %v3330, %v3541
      %v3596 = vadd.f32 %v3335, %v3546
      %v3597 = vadd.f32 %v3340, %v3551
      %v3598 = vadd.f32 %v3345, %v3556
      %v3599 = vadd.f32 %v3350, %v3561
      %v3600 = vadd.f32 %v3355, %v3566
      %v3601 = vadd.f32 %v3360, %v3571
      %v3602 = vadd.f32 %v3365, %v3576
      %v3603 = vadd.f32 %v3370, %v3581
      %v3604 = vadd.f32 %v3375, %v3586
      %s3605 = scalar_lea.vmem [#allocation3], 24
      %v3606 = vld [vmem:[%s3605] sm:$0xff]
      %v3607 = vld [vmem:[%s3605 + $0x8] sm:$0xff]
      %v3608 = vld [vmem:[%s3605 + $0x18] sm:$0xff]
      %v3609 = vld [vmem:[%s3605 + $0x20] sm:$0xff]
      %v3610 = vld [vmem:[%s3605 + $0x30] sm:$0xff]
      %v3611 = vld [vmem:[%s3605 + $0x38] sm:$0xff]
      %v3612 = vld [vmem:[%s3605 + $0x48] sm:$0xff]
      %v3613 = vld [vmem:[%s3605 + $0x50] sm:$0xff]
      %v3614 = vld [vmem:[%s3605 + $0x60] sm:$0xff]
      %v3615 = vld [vmem:[%s3605 + $0x68] sm:$0xff]
      %v3616 = vld [vmem:[%s3605 + $0x78] sm:$0xff]
      %v3617 = vld [vmem:[%s3605 + $0x80] sm:$0xff]
      %v3618 = vld [vmem:[%s3605 + $0x90] sm:$0xff]
      %v3619 = vld [vmem:[%s3605 + $0x98] sm:$0xff]
      %v3620 = vld [vmem:[%s3605 + $0xa8] sm:$0xff]
      %v3621 = vld [vmem:[%s3605 + $0xb0] sm:$0xff]
      %s3622 = scalar_lea.vmem %s4, 24
      %v3623 = vld [vmem:[%s3622] sm:$0xff]
      %v3625 = vsel %vm2921, %v3606, 0
      %v3628 = vsel %vm2921, %v3607, 0
      %v3631 = vsel %vm2921, %v3608, 0
      %v3634 = vsel %vm2921, %v3609, 0
      %v3637 = vsel %vm2921, %v3610, 0
      %v3640 = vsel %vm2921, %v3611, 0
      %v3643 = vsel %vm2921, %v3612, 0
      %v3646 = vsel %vm2921, %v3613, 0
      %v3649 = vsel %vm2921, %v3614, 0
      %v3652 = vsel %vm2921, %v3615, 0
      %v3655 = vsel %vm2921, %v3616, 0
      %v3658 = vsel %vm2921, %v3617, 0
      %v3661 = vsel %vm2921, %v3618, 0
      %v3664 = vsel %vm2921, %v3619, 0
      %v3667 = vsel %vm2921, %v3620, 0
      %v3670 = vsel %vm2921, %v3621, 0
      %3672 = vmatprep.subr.mxu0 0.0
      %3673 = vmatpush1.msra.mxu0 %v3623
      %3674 = vmatprep.subr.mxu0 0.0
      %3675 = vmatpush1.msra.mxu0 0.0
      %3676 = vmatprep.subr.mxu0 0.0
      %3677 = vmatpush1.msra.mxu0 0.0
      %3678 = vmatprep.subr.mxu0 0.0
      %3679 = vmatpush1.msra.mxu0 0.0
      %3680 = vmatprep.subr.mxu0 0.0
      %3681 = vmatpush1.msra.mxu0 0.0
      %3682 = vmatprep.subr.mxu0 0.0
      %3683 = vmatpush1.msra.mxu0 0.0
      %3684 = vmatprep.subr.mxu0 0.0
      %3685 = vmatpush1.msra.mxu0 0.0
      %3686 = vmatprep.subr.mxu0 0.0
      %3687 = vmatpush1.msra.mxu0 0.0
      %3688 = vmatprep.subr.mxu0 0.0
      %3689 = vmatpush1.msra.mxu0 0.0
      %3690 = vmatprep.subr.mxu0 0.0
      %3691 = vmatpush1.msra.mxu0 0.0
      %3692 = vmatprep.subr.mxu0 0.0
      %3693 = vmatpush1.msra.mxu0 0.0
      %3694 = vmatprep.subr.mxu0 0.0
      %3695 = vmatpush1.msra.mxu0 0.0
      %3696 = vmatprep.subr.mxu0 0.0
      %3697 = vmatpush1.msra.mxu0 0.0
      %3698 = vmatprep.subr.mxu0 0.0
      %3699 = vmatpush1.msra.mxu0 0.0
      %3700 = vmatprep.subr.mxu0 0.0
      %3701 = vmatpush1.msra.mxu0 0.0
      %3702 = vmatprep.subr.mxu0 0.0
      %3703 = vmatpush1.msra.mxu0 0.0
      %3704 = vmatprep.subr.mxu0 0.0
      %3705 = vmatpush1.msra.mxu0 0.0
      %3706 = vmatprep.subr.mxu0 0.0
      %3707 = vmatpush1.msra.mxu0 0.0
      %3708 = vmatprep.subr.mxu0 0.0
      %3709 = vmatpush1.msra.mxu0 0.0
      %3710 = vmatprep.subr.mxu0 0.0
      %3711 = vmatpush1.msra.mxu0 0.0
      %3712 = vmatprep.subr.mxu0 0.0
      %3713 = vmatpush1.msra.mxu0 0.0
      %3714 = vmatprep.subr.mxu0 0.0
      %3715 = vmatpush1.msra.mxu0 0.0
      %3716 = vmatprep.subr.mxu0 0.0
      %3717 = vmatpush1.msra.mxu0 0.0
      %3718 = vmatprep.subr.mxu0 0.0
      %3719 = vmatpush1.msra.mxu0 0.0
      %3720 = vmatprep.subr.mxu0 0.0
      %3721 = vmatpush1.msra.mxu0 0.0
      %3722 = vmatprep.subr.mxu0 0.0
      %3723 = vmatpush1.msra.mxu0 0.0
      %3724 = vmatprep.subr.mxu0 0.0
      %3725 = vmatpush1.msra.mxu0 0.0
      %3726 = vmatprep.subr.mxu0 0.0
      %3727 = vmatpush1.msra.mxu0 0.0
      %3728 = vmatprep.subr.mxu0 0.0
      %3729 = vmatpush1.msra.mxu0 0.0
      %3730 = vmatprep.subr.mxu0 0.0
      %3731 = vmatpush1.msra.mxu0 0.0
      %3732 = vmatprep.subr.mxu0 0.0
      %3733 = vmatpush1.msra.mxu0 0.0
      %3734 = vmatprep.subr.mxu0 0.0
      %3735 = vmatpush1.msra.mxu0 0.0
      %3736 = vmatprep.mubr.f32.mxu0 0.0
      %3737 = vmatmul.mubr.f32.gmra.mrb[0].mxu0 %v3625
      %v3738 = vpop.f32.mrb[0].mxu0
      %v3739 = vadd.f32 0.0, %v3738
      %v3740 = vpop.f32.mrb[0].mxu0
      %3741 = vmatprep.mubr.f32.mxu0 0.0
      %3742 = vmatmul.mubr.f32.gmra.mrb[0].mxu0 %v3628
      %v3743 = vpop.f32.mrb[0].mxu0
      %v3744 = vadd.f32 0.0, %v3743
      %v3745 = vpop.f32.mrb[0].mxu0
      %3746 = vmatprep.mubr.f32.mxu0 0.0
      %3747 = vmatmul.mubr.f32.gmra.mrb[0].mxu0 %v3631
      %v3748 = vpop.f32.mrb[0].mxu0
      %v3749 = vadd.f32 0.0, %v3748
      %v3750 = vpop.f32.mrb[0].mxu0
      %3751 = vmatprep.mubr.f32.mxu0 0.0
      %3752 = vmatmul.mubr.f32.gmra.mrb[0].mxu0 %v3634
      %v3753 = vpop.f32.mrb[0].mxu0
      %v3754 = vadd.f32 0.0, %v3753
      %v3755 = vpop.f32.mrb[0].mxu0
      %3756 = vmatprep.mubr.f32.mxu0 0.0
      %3757 = vmatmul.mubr.f32.gmra.mrb[0].mxu0 %v3637
      %v3758 = vpop.f32.mrb[0].mxu0
      %v3759 = vadd.f32 0.0, %v3758
      %v3760 = vpop.f32.mrb[0].mxu0
      %3761 = vmatprep.mubr.f32.mxu0 0.0
      %3762 = vmatmul.mubr.f32.gmra.mrb[0].mxu0 %v3640
      %v3763 = vpop.f32.mrb[0].mxu0
      %v3764 = vadd.f32 0.0, %v3763
      %v3765 = vpop.f32.mrb[0].mxu0
      %3766 = vmatprep.mubr.f32.mxu0 0.0
      %3767 = vmatmul.mubr.f32.gmra.mrb[0].mxu0 %v3643
      %v3768 = vpop.f32.mrb[0].mxu0
      %v3769 = vadd.f32 0.0, %v3768
      %v3770 = vpop.f32.mrb[0].mxu0
      %3771 = vmatprep.mubr.f32.mxu0 0.0
      %3772 = vmatmul.mubr.f32.gmra.mrb[0].mxu0 %v3646
      %v3773 = vpop.f32.mrb[0].mxu0
      %v3774 = vadd.f32 0.0, %v3773
      %v3775 = vpop.f32.mrb[0].mxu0
      %3776 = vmatprep.mubr.f32.mxu0 0.0
      %3777 = vmatmul.mubr.f32.gmra.mrb[0].mxu0 %v3649
      %v3778 = vpop.f32.mrb[0].mxu0
      %v3779 = vadd.f32 0.0, %v3778
      %v3780 = vpop.f32.mrb[0].mxu0
      %3781 = vmatprep.mubr.f32.mxu0 0.0
      %3782 = vmatmul.mubr.f32.gmra.mrb[0].mxu0 %v3652
      %v3783 = vpop.f32.mrb[0].mxu0
      %v3784 = vadd.f32 0.0, %v3783
      %v3785 = vpop.f32.mrb[0].mxu0
      %3786 = vmatprep.mubr.f32.mxu0 0.0
      %3787 = vmatmul.mubr.f32.gmra.mrb[0].mxu0 %v3655
      %v3788 = vpop.f32.mrb[0].mxu0
      %v3789 = vadd.f32 0.0, %v3788
      %v3790 = vpop.f32.mrb[0].mxu0
      %3791 = vmatprep.mubr.f32.mxu0 0.0
      %3792 = vmatmul.mubr.f32.gmra.mrb[0].mxu0 %v3658
      %v3793 = vpop.f32.mrb[0].mxu0
      %v3794 = vadd.f32 0.0, %v3793
      %v3795 = vpop.f32.mrb[0].mxu0
      %3796 = vmatprep.mubr.f32.mxu0 0.0
      %3797 = vmatmul.mubr.f32.gmra.mrb[0].mxu0 %v3661
      %v3798 = vpop.f32.mrb[0].mxu0
      %v3799 = vadd.f32 0.0, %v3798
      %v3800 = vpop.f32.mrb[0].mxu0
      %3801 = vmatprep.mubr.f32.mxu0 0.0
      %3802 = vmatmul.mubr.f32.gmra.mrb[0].mxu0 %v3664
      %v3803 = vpop.f32.mrb[0].mxu0
      %v3804 = vadd.f32 0.0, %v3803
      %v3805 = vpop.f32.mrb[0].mxu0
      %3806 = vmatprep.mubr.f32.mxu0 0.0
      %3807 = vmatmul.mubr.f32.gmra.mrb[0].mxu0 %v3667
      %v3808 = vpop.f32.mrb[0].mxu0
      %v3809 = vadd.f32 0.0, %v3808
      %v3810 = vpop.f32.mrb[0].mxu0
      %3811 = vmatprep.mubr.f32.mxu0 0.0
      %3812 = vmatmul.mubr.f32.gmra.mrb[0].mxu0 %v3670
      %v3813 = vpop.f32.mrb[0].mxu0
      %v3814 = vadd.f32 0.0, %v3813
      %v3815 = vpop.f32.mrb[0].mxu0
      %3816 = vdwg.mxu0
      %v3817 = vadd.f32 %v3589, %v3739
      %v3818 = vadd.f32 %v3590, %v3744
      %v3819 = vadd.f32 %v3591, %v3749
      %v3820 = vadd.f32 %v3592, %v3754
      %v3821 = vadd.f32 %v3593, %v3759
      %v3822 = vadd.f32 %v3594, %v3764
      %v3823 = vadd.f32 %v3595, %v3769
      %v3824 = vadd.f32 %v3596, %v3774
      %v3825 = vadd.f32 %v3597, %v3779
      %v3826 = vadd.f32 %v3598, %v3784
      %v3827 = vadd.f32 %v3599, %v3789
      %v3828 = vadd.f32 %v3600, %v3794
      %v3829 = vadd.f32 %v3601, %v3799
      %v3830 = vadd.f32 %v3602, %v3804
      %v3831 = vadd.f32 %v3603, %v3809
      %v3832 = vadd.f32 %v3604, %v3814
      %v3833 = vld [vmem:[%s3605 + $0x1] sm:$0xff]
      %v3834 = vld [vmem:[%s3605 + $0x9] sm:$0xff]
      %v3835 = vld [vmem:[%s3605 + $0x19] sm:$0xff]
      %v3836 = vld [vmem:[%s3605 + $0x21] sm:$0xff]
      %v3837 = vld [vmem:[%s3605 + $0x31] sm:$0xff]
      %v3838 = vld [vmem:[%s3605 + $0x39] sm:$0xff]
      %v3839 = vld [vmem:[%s3605 + $0x49] sm:$0xff]
      %v3840 = vld [vmem:[%s3605 + $0x51] sm:$0xff]
      %v3841 = vld [vmem:[%s3605 + $0x61] sm:$0xff]
      %v3842 = vld [vmem:[%s3605 + $0x69] sm:$0xff]
      %v3843 = vld [vmem:[%s3605 + $0x79] sm:$0xff]
      %v3844 = vld [vmem:[%s3605 + $0x81] sm:$0xff]
      %v3845 = vld [vmem:[%s3605 + $0x91] sm:$0xff]
      %v3846 = vld [vmem:[%s3605 + $0x99] sm:$0xff]
      %v3847 = vld [vmem:[%s3605 + $0xa9] sm:$0xff]
      %v3848 = vld [vmem:[%s3605 + $0xb1] sm:$0xff]
      %s3849 = scalar_lea.vmem %s4, 32
      %v3850 = vld [vmem:[%s3849] sm:$0xff]
      %v3852 = vsel %vm2921, %v3833, 0
      %v3855 = vsel %vm2921, %v3834, 0
      %v3858 = vsel %vm2921, %v3835, 0
      %v3861 = vsel %vm2921, %v3836, 0
      %v3864 = vsel %vm2921, %v3837, 0
      %v3867 = vsel %vm2921, %v3838, 0
      %v3870 = vsel %vm2921, %v3839, 0
      %v3873 = vsel %vm2921, %v3840, 0
      %v3876 = vsel %vm2921, %v3841, 0
      %v3879 = vsel %vm2921, %v3842, 0
      %v3882 = vsel %vm2921, %v3843, 0
      %v3885 = vsel %vm2921, %v3844, 0
      %v3888 = vsel %vm2921, %v3845, 0
      %v3891 = vsel %vm2921, %v3846, 0
      %v3894 = vsel %vm2921, %v3847, 0
      %v3897 = vsel %vm2921, %v3848, 0
      %3899 = vmatprep.subr.mxu0 0.0
      %3900 = vmatpush1.msra.mxu0 %v3850
      %3901 = vmatprep.subr.mxu0 0.0
      %3902 = vmatpush1.msra.mxu0 0.0
      %3903 = vmatprep.subr.mxu0 0.0
      %3904 = vmatpush1.msra.mxu0 0.0
      %3905 = vmatprep.subr.mxu0 0.0
      %3906 = vmatpush1.msra.mxu0 0.0
      %3907 = vmatprep.subr.mxu0 0.0
      %3908 = vmatpush1.msra.mxu0 0.0
      %3909 = vmatprep.subr.mxu0 0.0
      %3910 = vmatpush1.msra.mxu0 0.0
      %3911 = vmatprep.subr.mxu0 0.0
      %3912 = vmatpush1.msra.mxu0 0.0
      %3913 = vmatprep.subr.mxu0 0.0
      %3914 = vmatpush1.msra.mxu0 0.0
      %3915 = vmatprep.subr.mxu0 0.0
      %3916 = vmatpush1.msra.mxu0 0.0
      %3917 = vmatprep.subr.mxu0 0.0
      %3918 = vmatpush1.msra.mxu0 0.0
      %3919 = vmatprep.subr.mxu0 0.0
      %3920 = vmatpush1.msra.mxu0 0.0
      %3921 = vmatprep.subr.mxu0 0.0
      %3922 = vmatpush1.msra.mxu0 0.0
      %3923 = vmatprep.subr.mxu0 0.0
      %3924 = vmatpush1.msra.mxu0 0.0
      %3925 = vmatprep.subr.mxu0 0.0
      %3926 = vmatpush1.msra.mxu0 0.0
      %3927 = vmatprep.subr.mxu0 0.0
      %3928 = vmatpush1.msra.mxu0 0.0
      %3929 = vmatprep.subr.mxu0 0.0
      %3930 = vmatpush1.msra.mxu0 0.0
      %3931 = vmatprep.subr.mxu0 0.0
      %3932 = vmatpush1.msra.mxu0 0.0
      %3933 = vmatprep.subr.mxu0 0.0
      %3934 = vmatpush1.msra.mxu0 0.0
      %3935 = vmatprep.subr.mxu0 0.0
      %3936 = vmatpush1.msra.mxu0 0.0
      %3937 = vmatprep.subr.mxu0 0.0
      %3938 = vmatpush1.msra.mxu0 0.0
      %3939 = vmatprep.subr.mxu0 0.0
      %3940 = vmatpush1.msra.mxu0 0.0
      %3941 = vmatprep.subr.mxu0 0.0
      %3942 = vmatpush1.msra.mxu0 0.0
      %3943 = vmatprep.subr.mxu0 0.0
      %3944 = vmatpush1.msra.mxu0 0.0
      %3945 = vmatprep.subr.mxu0 0.0
      %3946 = vmatpush1.msra.mxu0 0.0
      %3947 = vmatprep.subr.mxu0 0.0
      %3948 = vmatpush1.msra.mxu0 0.0
      %3949 = vmatprep.subr.mxu0 0.0
      %3950 = vmatpush1.msra.mxu0 0.0
      %3951 = vmatprep.subr.mxu0 0.0
      %3952 = vmatpush1.msra.mxu0 0.0
      %3953 = vmatprep.subr.mxu0 0.0
      %3954 = vmatpush1.msra.mxu0 0.0
      %3955 = vmatprep.subr.mxu0 0.0
      %3956 = vmatpush1.msra.mxu0 0.0
      %3957 = vmatprep.subr.mxu0 0.0
      %3958 = vmatpush1.msra.mxu0 0.0
      %3959 = vmatprep.subr.mxu0 0.0
      %3960 = vmatpush1.msra.mxu0 0.0
      %3961 = vmatprep.subr.mxu0 0.0
      %3962 = vmatpush1.msra.mxu0 0.0
      %3963 = vmatprep.mubr.f32.mxu0 0.0
      %3964 = vmatmul.mubr.f32.gmra.mrb[0].mxu0 %v3852
      %v3965 = vpop.f32.mrb[0].mxu0
      %v3966 = vadd.f32 0.0, %v3965
      %v3967 = vpop.f32.mrb[0].mxu0
      %3968 = vmatprep.mubr.f32.mxu0 0.0
      %3969 = vmatmul.mubr.f32.gmra.mrb[0].mxu0 %v3855
      %v3970 = vpop.f32.mrb[0].mxu0
      %v3971 = vadd.f32 0.0, %v3970
      %v3972 = vpop.f32.mrb[0].mxu0
      %3973 = vmatprep.mubr.f32.mxu0 0.0
      %3974 = vmatmul.mubr.f32.gmra.mrb[0].mxu0 %v3858
      %v3975 = vpop.f32.mrb[0].mxu0
      %v3976 = vadd.f32 0.0, %v3975
      %v3977 = vpop.f32.mrb[0].mxu0
      %3978 = vmatprep.mubr.f32.mxu0 0.0
      %3979 = vmatmul.mubr.f32.gmra.mrb[0].mxu0 %v3861
      %v3980 = vpop.f32.mrb[0].mxu0
      %v3981 = vadd.f32 0.0, %v3980
      %v3982 = vpop.f32.mrb[0].mxu0
      %3983 = vmatprep.mubr.f32.mxu0 0.0
      %3984 = vmatmul.mubr.f32.gmra.mrb[0].mxu0 %v3864
      %v3985 = vpop.f32.mrb[0].mxu0
      %v3986 = vadd.f32 0.0, %v3985
      %v3987 = vpop.f32.mrb[0].mxu0
      %3988 = vmatprep.mubr.f32.mxu0 0.0
      %3989 = vmatmul.mubr.f32.gmra.mrb[0].mxu0 %v3867
      %v3990 = vpop.f32.mrb[0].mxu0
      %v3991 = vadd.f32 0.0, %v3990
      %v3992 = vpop.f32.mrb[0].mxu0
      %3993 = vmatprep.mubr.f32.mxu0 0.0
      %3994 = vmatmul.mubr.f32.gmra.mrb[0].mxu0 %v3870
      %v3995 = vpop.f32.mrb[0].mxu0
      %v3996 = vadd.f32 0.0, %v3995
      %v3997 = vpop.f32.mrb[0].mxu0
      %3998 = vmatprep.mubr.f32.mxu0 0.0
      %3999 = vmatmul.mubr.f32.gmra.mrb[0].mxu0 %v3873
      %v4000 = vpop.f32.mrb[0].mxu0
      %v4001 = vadd.f32 0.0, %v4000
      %v4002 = vpop.f32.mrb[0].mxu0
      %4003 = vmatprep.mubr.f32.mxu0 0.0
      %4004 = vmatmul.mubr.f32.gmra.mrb[0].mxu0 %v3876
      %v4005 = vpop.f32.mrb[0].mxu0
      %v4006 = vadd.f32 0.0, %v4005
      %v4007 = vpop.f32.mrb[0].mxu0
      %4008 = vmatprep.mubr.f32.mxu0 0.0
      %4009 = vmatmul.mubr.f32.gmra.mrb[0].mxu0 %v3879
      %v4010 = vpop.f32.mrb[0].mxu0
      %v4011 = vadd.f32 0.0, %v4010
      %v4012 = vpop.f32.mrb[0].mxu0
      %4013 = vmatprep.mubr.f32.mxu0 0.0
      %4014 = vmatmul.mubr.f32.gmra.mrb[0].mxu0 %v3882
      %v4015 = vpop.f32.mrb[0].mxu0
      %v4016 = vadd.f32 0.0, %v4015
      %v4017 = vpop.f32.mrb[0].mxu0
      %4018 = vmatprep.mubr.f32.mxu0 0.0
      %4019 = vmatmul.mubr.f32.gmra.mrb[0].mxu0 %v3885
      %v4020 = vpop.f32.mrb[0].mxu0
      %v4021 = vadd.f32 0.0, %v4020
      %v4022 = vpop.f32.mrb[0].mxu0
      %4023 = vmatprep.mubr.f32.mxu0 0.0
      %4024 = vmatmul.mubr.f32.gmra.mrb[0].mxu0 %v3888
      %v4025 = vpop.f32.mrb[0].mxu0
      %v4026 = vadd.f32 0.0, %v4025
      %v4027 = vpop.f32.mrb[0].mxu0
      %4028 = vmatprep.mubr.f32.mxu0 0.0
      %4029 = vmatmul.mubr.f32.gmra.mrb[0].mxu0 %v3891
      %v4030 = vpop.f32.mrb[0].mxu0
      %v4031 = vadd.f32 0.0, %v4030
      %v4032 = vpop.f32.mrb[0].mxu0
      %4033 = vmatprep.mubr.f32.mxu0 0.0
      %4034 = vmatmul.mubr.f32.gmra.mrb[0].mxu0 %v3894
      %v4035 = vpop.f32.mrb[0].mxu0
      %v4036 = vadd.f32 0.0, %v4035
      %v4037 = vpop.f32.mrb[0].mxu0
      %4038 = vmatprep.mubr.f32.mxu0 0.0
      %4039 = vmatmul.mubr.f32.gmra.mrb[0].mxu0 %v3897
      %v4040 = vpop.f32.mrb[0].mxu0
      %v4041 = vadd.f32 0.0, %v4040
      %v4042 = vpop.f32.mrb[0].mxu0
      %4043 = vdwg.mxu0
      %v4044 = vadd.f32 %v3817, %v3966
      %v4045 = vadd.f32 %v3818, %v3971
      %v4046 = vadd.f32 %v3819, %v3976
      %v4047 = vadd.f32 %v3820, %v3981
      %v4048 = vadd.f32 %v3821, %v3986
      %v4049 = vadd.f32 %v3822, %v3991
      %v4050 = vadd.f32 %v3823, %v3996
      %v4051 = vadd.f32 %v3824, %v4001
      %v4052 = vadd.f32 %v3825, %v4006
      %v4053 = vadd.f32 %v3826, %v4011
      %v4054 = vadd.f32 %v3827, %v4016
      %v4055 = vadd.f32 %v3828, %v4021
      %v4056 = vadd.f32 %v3829, %v4026
      %v4057 = vadd.f32 %v3830, %v4031
      %v4058 = vadd.f32 %v3831, %v4036
      %v4059 = vadd.f32 %v3832, %v4041
      %v4060 = vld [vmem:[%s3605 + $0x2] sm:$0xff]
      %v4061 = vld [vmem:[%s3605 + $0xa] sm:$0xff]
      %v4062 = vld [vmem:[%s3605 + $0x1a] sm:$0xff]
      %v4063 = vld [vmem:[%s3605 + $0x22] sm:$0xff]
      %v4064 = vld [vmem:[%s3605 + $0x32] sm:$0xff]
      %v4065 = vld [vmem:[%s3605 + $0x3a] sm:$0xff]
      %v4066 = vld [vmem:[%s3605 + $0x4a] sm:$0xff]
      %v4067 = vld [vmem:[%s3605 + $0x52] sm:$0xff]
      %v4068 = vld [vmem:[%s3605 + $0x62] sm:$0xff]
      %v4069 = vld [vmem:[%s3605 + $0x6a] sm:$0xff]
      %v4070 = vld [vmem:[%s3605 + $0x7a] sm:$0xff]
      %v4071 = vld [vmem:[%s3605 + $0x82] sm:$0xff]
      %v4072 = vld [vmem:[%s3605 + $0x92] sm:$0xff]
      %v4073 = vld [vmem:[%s3605 + $0x9a] sm:$0xff]
      %v4074 = vld [vmem:[%s3605 + $0xaa] sm:$0xff]
      %v4075 = vld [vmem:[%s3605 + $0xb2] sm:$0xff]
      %s4076 = scalar_lea.vmem %s4, 40
      %v4077 = vld [vmem:[%s4076] sm:$0xff]
      %v4079 = vsel %vm2921, %v4060, 0
      %v4082 = vsel %vm2921, %v4061, 0
      %v4085 = vsel %vm2921, %v4062, 0
      %v4088 = vsel %vm2921, %v4063, 0
      %v4091 = vsel %vm2921, %v4064, 0
      %v4094 = vsel %vm2921, %v4065, 0
      %v4097 = vsel %vm2921, %v4066, 0
      %v4100 = vsel %vm2921, %v4067, 0
      %v4103 = vsel %vm2921, %v4068, 0
      %v4106 = vsel %vm2921, %v4069, 0
      %v4109 = vsel %vm2921, %v4070, 0
      %v4112 = vsel %vm2921, %v4071, 0
      %v4115 = vsel %vm2921, %v4072, 0
      %v4118 = vsel %vm2921, %v4073, 0
      %v4121 = vsel %vm2921, %v4074, 0
      %v4124 = vsel %vm2921, %v4075, 0
      %4126 = vmatprep.subr.mxu0 0.0
      %4127 = vmatpush1.msra.mxu0 %v4077
      %4128 = vmatprep.subr.mxu0 0.0
      %4129 = vmatpush1.msra.mxu0 0.0
      %4130 = vmatprep.subr.mxu0 0.0
      %4131 = vmatpush1.msra.mxu0 0.0
      %4132 = vmatprep.subr.mxu0 0.0
      %4133 = vmatpush1.msra.mxu0 0.0
      %4134 = vmatprep.subr.mxu0 0.0
      %4135 = vmatpush1.msra.mxu0 0.0
      %4136 = vmatprep.subr.mxu0 0.0
      %4137 = vmatpush1.msra.mxu0 0.0
      %4138 = vmatprep.subr.mxu0 0.0
      %4139 = vmatpush1.msra.mxu0 0.0
      %4140 = vmatprep.subr.mxu0 0.0
      %4141 = vmatpush1.msra.mxu0 0.0
      %4142 = vmatprep.subr.mxu0 0.0
      %4143 = vmatpush1.msra.mxu0 0.0
      %4144 = vmatprep.subr.mxu0 0.0
      %4145 = vmatpush1.msra.mxu0 0.0
      %4146 = vmatprep.subr.mxu0 0.0
      %4147 = vmatpush1.msra.mxu0 0.0
      %4148 = vmatprep.subr.mxu0 0.0
      %4149 = vmatpush1.msra.mxu0 0.0
      %4150 = vmatprep.subr.mxu0 0.0
      %4151 = vmatpush1.msra.mxu0 0.0
      %4152 = vmatprep.subr.mxu0 0.0
      %4153 = vmatpush1.msra.mxu0 0.0
      %4154 = vmatprep.subr.mxu0 0.0
      %4155 = vmatpush1.msra.mxu0 0.0
      %4156 = vmatprep.subr.mxu0 0.0
      %4157 = vmatpush1.msra.mxu0 0.0
      %4158 = vmatprep.subr.mxu0 0.0
      %4159 = vmatpush1.msra.mxu0 0.0
      %4160 = vmatprep.subr.mxu0 0.0
      %4161 = vmatpush1.msra.mxu0 0.0
      %4162 = vmatprep.subr.mxu0 0.0
      %4163 = vmatpush1.msra.mxu0 0.0
      %4164 = vmatprep.subr.mxu0 0.0
      %4165 = vmatpush1.msra.mxu0 0.0
      %4166 = vmatprep.subr.mxu0 0.0
      %4167 = vmatpush1.msra.mxu0 0.0
      %4168 = vmatprep.subr.mxu0 0.0
      %4169 = vmatpush1.msra.mxu0 0.0
      %4170 = vmatprep.subr.mxu0 0.0
      %4171 = vmatpush1.msra.mxu0 0.0
      %4172 = vmatprep.subr.mxu0 0.0
      %4173 = vmatpush1.msra.mxu0 0.0
      %4174 = vmatprep.subr.mxu0 0.0
      %4175 = vmatpush1.msra.mxu0 0.0
      %4176 = vmatprep.subr.mxu0 0.0
      %4177 = vmatpush1.msra.mxu0 0.0
      %4178 = vmatprep.subr.mxu0 0.0
      %4179 = vmatpush1.msra.mxu0 0.0
      %4180 = vmatprep.subr.mxu0 0.0
      %4181 = vmatpush1.msra.mxu0 0.0
      %4182 = vmatprep.subr.mxu0 0.0
      %4183 = vmatpush1.msra.mxu0 0.0
      %4184 = vmatprep.subr.mxu0 0.0
      %4185 = vmatpush1.msra.mxu0 0.0
      %4186 = vmatprep.subr.mxu0 0.0
      %4187 = vmatpush1.msra.mxu0 0.0
      %4188 = vmatprep.subr.mxu0 0.0
      %4189 = vmatpush1.msra.mxu0 0.0
      %4190 = vmatprep.mubr.f32.mxu0 0.0
      %4191 = vmatmul.mubr.f32.gmra.mrb[0].mxu0 %v4079
      %v4192 = vpop.f32.mrb[0].mxu0
      %v4193 = vadd.f32 0.0, %v4192
      %v4194 = vpop.f32.mrb[0].mxu0
      %4195 = vmatprep.mubr.f32.mxu0 0.0
      %4196 = vmatmul.mubr.f32.gmra.mrb[0].mxu0 %v4082
      %v4197 = vpop.f32.mrb[0].mxu0
      %v4198 = vadd.f32 0.0, %v4197
      %v4199 = vpop.f32.mrb[0].mxu0
      %4200 = vmatprep.mubr.f32.mxu0 0.0
      %4201 = vmatmul.mubr.f32.gmra.mrb[0].mxu0 %v4085
      %v4202 = vpop.f32.mrb[0].mxu0
      %v4203 = vadd.f32 0.0, %v4202
      %v4204 = vpop.f32.mrb[0].mxu0
      %4205 = vmatprep.mubr.f32.mxu0 0.0
      %4206 = vmatmul.mubr.f32.gmra.mrb[0].mxu0 %v4088
      %v4207 = vpop.f32.mrb[0].mxu0
      %v4208 = vadd.f32 0.0, %v4207
      %v4209 = vpop.f32.mrb[0].mxu0
      %4210 = vmatprep.mubr.f32.mxu0 0.0
      %4211 = vmatmul.mubr.f32.gmra.mrb[0].mxu0 %v4091
      %v4212 = vpop.f32.mrb[0].mxu0
      %v4213 = vadd.f32 0.0, %v4212
      %v4214 = vpop.f32.mrb[0].mxu0
      %4215 = vmatprep.mubr.f32.mxu0 0.0
      %4216 = vmatmul.mubr.f32.gmra.mrb[0].mxu0 %v4094
      %v4217 = vpop.f32.mrb[0].mxu0
      %v4218 = vadd.f32 0.0, %v4217
      %v4219 = vpop.f32.mrb[0].mxu0
      %4220 = vmatprep.mubr.f32.mxu0 0.0
      %4221 = vmatmul.mubr.f32.gmra.mrb[0].mxu0 %v4097
      %v4222 = vpop.f32.mrb[0].mxu0
      %v4223 = vadd.f32 0.0, %v4222
      %v4224 = vpop.f32.mrb[0].mxu0
      %4225 = vmatprep.mubr.f32.mxu0 0.0
      %4226 = vmatmul.mubr.f32.gmra.mrb[0].mxu0 %v4100
      %v4227 = vpop.f32.mrb[0].mxu0
      %v4228 = vadd.f32 0.0, %v4227
      %v4229 = vpop.f32.mrb[0].mxu0
      %4230 = vmatprep.mubr.f32.mxu0 0.0
      %4231 = vmatmul.mubr.f32.gmra.mrb[0].mxu0 %v4103
      %v4232 = vpop.f32.mrb[0].mxu0
      %v4233 = vadd.f32 0.0, %v4232
      %v4234 = vpop.f32.mrb[0].mxu0
      %4235 = vmatprep.mubr.f32.mxu0 0.0
      %4236 = vmatmul.mubr.f32.gmra.mrb[0].mxu0 %v4106
      %v4237 = vpop.f32.mrb[0].mxu0
      %v4238 = vadd.f32 0.0, %v4237
      %v4239 = vpop.f32.mrb[0].mxu0
      %4240 = vmatprep.mubr.f32.mxu0 0.0
      %4241 = vmatmul.mubr.f32.gmra.mrb[0].mxu0 %v4109
      %v4242 = vpop.f32.mrb[0].mxu0
      %v4243 = vadd.f32 0.0, %v4242
      %v4244 = vpop.f32.mrb[0].mxu0
      %4245 = vmatprep.mubr.f32.mxu0 0.0
      %4246 = vmatmul.mubr.f32.gmra.mrb[0].mxu0 %v4112
      %v4247 = vpop.f32.mrb[0].mxu0
      %v4248 = vadd.f32 0.0, %v4247
      %v4249 = vpop.f32.mrb[0].mxu0
      %4250 = vmatprep.mubr.f32.mxu0 0.0
      %4251 = vmatmul.mubr.f32.gmra.mrb[0].mxu0 %v4115
      %v4252 = vpop.f32.mrb[0].mxu0
      %v4253 = vadd.f32 0.0, %v4252
      %v4254 = vpop.f32.mrb[0].mxu0
      %4255 = vmatprep.mubr.f32.mxu0 0.0
      %4256 = vmatmul.mubr.f32.gmra.mrb[0].mxu0 %v4118
      %v4257 = vpop.f32.mrb[0].mxu0
      %v4258 = vadd.f32 0.0, %v4257
      %v4259 = vpop.f32.mrb[0].mxu0
      %4260 = vmatprep.mubr.f32.mxu0 0.0
      %4261 = vmatmul.mubr.f32.gmra.mrb[0].mxu0 %v4121
      %v4262 = vpop.f32.mrb[0].mxu0
      %v4263 = vadd.f32 0.0, %v4262
      %v4264 = vpop.f32.mrb[0].mxu0
      %4265 = vmatprep.mubr.f32.mxu0 0.0
      %4266 = vmatmul.mubr.f32.gmra.mrb[0].mxu0 %v4124
      %v4267 = vpop.f32.mrb[0].mxu0
      %v4268 = vadd.f32 0.0, %v4267
      %v4269 = vpop.f32.mrb[0].mxu0
      %4270 = vdwg.mxu0
      %v4271 = vadd.f32 %v4044, %v4193
      %v4272 = vadd.f32 %v4045, %v4198
      %v4273 = vadd.f32 %v4046, %v4203
      %v4274 = vadd.f32 %v4047, %v4208
      %v4275 = vadd.f32 %v4048, %v4213
      %v4276 = vadd.f32 %v4049, %v4218
      %v4277 = vadd.f32 %v4050, %v4223
      %v4278 = vadd.f32 %v4051, %v4228
      %v4279 = vadd.f32 %v4052, %v4233
      %v4280 = vadd.f32 %v4053, %v4238
      %v4281 = vadd.f32 %v4054, %v4243
      %v4282 = vadd.f32 %v4055, %v4248
      %v4283 = vadd.f32 %v4056, %v4253
      %v4284 = vadd.f32 %v4057, %v4258
      %v4285 = vadd.f32 %v4058, %v4263
      %v4286 = vadd.f32 %v4059, %v4268
      %s4287 = scalar_lea.vmem [#allocation3], 48
      %v4288 = vld [vmem:[%s4287] sm:$0xff]
      %v4289 = vld [vmem:[%s4287 + $0x8] sm:$0xff]
      %v4290 = vld [vmem:[%s4287 + $0x18] sm:$0xff]
      %v4291 = vld [vmem:[%s4287 + $0x20] sm:$0xff]
      %v4292 = vld [vmem:[%s4287 + $0x30] sm:$0xff]
      %v4293 = vld [vmem:[%s4287 + $0x38] sm:$0xff]
      %v4294 = vld [vmem:[%s4287 + $0x48] sm:$0xff]
      %v4295 = vld [vmem:[%s4287 + $0x50] sm:$0xff]
      %v4296 = vld [vmem:[%s4287 + $0x60] sm:$0xff]
      %v4297 = vld [vmem:[%s4287 + $0x68] sm:$0xff]
      %v4298 = vld [vmem:[%s4287 + $0x78] sm:$0xff]
      %v4299 = vld [vmem:[%s4287 + $0x80] sm:$0xff]
      %v4300 = vld [vmem:[%s4287 + $0x90] sm:$0xff]
      %v4301 = vld [vmem:[%s4287 + $0x98] sm:$0xff]
      %v4302 = vld [vmem:[%s4287 + $0xa8] sm:$0xff]
      %v4303 = vld [vmem:[%s4287 + $0xb0] sm:$0xff]
      %s4304 = scalar_lea.vmem %s4, 48
      %v4305 = vld [vmem:[%s4304] sm:$0xff]
      %v4307 = vsel %vm2921, %v4288, 0
      %v4310 = vsel %vm2921, %v4289, 0
      %v4313 = vsel %vm2921, %v4290, 0
      %v4316 = vsel %vm2921, %v4291, 0
      %v4319 = vsel %vm2921, %v4292, 0
      %v4322 = vsel %vm2921, %v4293, 0
      %v4325 = vsel %vm2921, %v4294, 0
      %v4328 = vsel %vm2921, %v4295, 0
      %v4331 = vsel %vm2921, %v4296, 0
      %v4334 = vsel %vm2921, %v4297, 0
      %v4337 = vsel %vm2921, %v4298, 0
      %v4340 = vsel %vm2921, %v4299, 0
      %v4343 = vsel %vm2921, %v4300, 0
      %v4346 = vsel %vm2921, %v4301, 0
      %v4349 = vsel %vm2921, %v4302, 0
      %v4352 = vsel %vm2921, %v4303, 0
      %4354 = vmatprep.subr.mxu0 0.0
      %4355 = vmatpush1.msra.mxu0 %v4305
      %4356 = vmatprep.subr.mxu0 0.0
      %4357 = vmatpush1.msra.mxu0 0.0
      %4358 = vmatprep.subr.mxu0 0.0
      %4359 = vmatpush1.msra.mxu0 0.0
      %4360 = vmatprep.subr.mxu0 0.0
      %4361 = vmatpush1.msra.mxu0 0.0
      %4362 = vmatprep.subr.mxu0 0.0
      %4363 = vmatpush1.msra.mxu0 0.0
      %4364 = vmatprep.subr.mxu0 0.0
      %4365 = vmatpush1.msra.mxu0 0.0
      %4366 = vmatprep.subr.mxu0 0.0
      %4367 = vmatpush1.msra.mxu0 0.0
      %4368 = vmatprep.subr.mxu0 0.0
      %4369 = vmatpush1.msra.mxu0 0.0
      %4370 = vmatprep.subr.mxu0 0.0
      %4371 = vmatpush1.msra.mxu0 0.0
      %4372 = vmatprep.subr.mxu0 0.0
      %4373 = vmatpush1.msra.mxu0 0.0
      %4374 = vmatprep.subr.mxu0 0.0
      %4375 = vmatpush1.msra.mxu0 0.0
      %4376 = vmatprep.subr.mxu0 0.0
      %4377 = vmatpush1.msra.mxu0 0.0
      %4378 = vmatprep.subr.mxu0 0.0
      %4379 = vmatpush1.msra.mxu0 0.0
      %4380 = vmatprep.subr.mxu0 0.0
      %4381 = vmatpush1.msra.mxu0 0.0
      %4382 = vmatprep.subr.mxu0 0.0
      %4383 = vmatpush1.msra.mxu0 0.0
      %4384 = vmatprep.subr.mxu0 0.0
      %4385 = vmatpush1.msra.mxu0 0.0
      %4386 = vmatprep.subr.mxu0 0.0
      %4387 = vmatpush1.msra.mxu0 0.0
      %4388 = vmatprep.subr.mxu0 0.0
      %4389 = vmatpush1.msra.mxu0 0.0
      %4390 = vmatprep.subr.mxu0 0.0
      %4391 = vmatpush1.msra.mxu0 0.0
      %4392 = vmatprep.subr.mxu0 0.0
      %4393 = vmatpush1.msra.mxu0 0.0
      %4394 = vmatprep.subr.mxu0 0.0
      %4395 = vmatpush1.msra.mxu0 0.0
      %4396 = vmatprep.subr.mxu0 0.0
      %4397 = vmatpush1.msra.mxu0 0.0
      %4398 = vmatprep.subr.mxu0 0.0
      %4399 = vmatpush1.msra.mxu0 0.0
      %4400 = vmatprep.subr.mxu0 0.0
      %4401 = vmatpush1.msra.mxu0 0.0
      %4402 = vmatprep.subr.mxu0 0.0
      %4403 = vmatpush1.msra.mxu0 0.0
      %4404 = vmatprep.subr.mxu0 0.0
      %4405 = vmatpush1.msra.mxu0 0.0
      %4406 = vmatprep.subr.mxu0 0.0
      %4407 = vmatpush1.msra.mxu0 0.0
      %4408 = vmatprep.subr.mxu0 0.0
      %4409 = vmatpush1.msra.mxu0 0.0
      %4410 = vmatprep.subr.mxu0 0.0
      %4411 = vmatpush1.msra.mxu0 0.0
      %4412 = vmatprep.subr.mxu0 0.0
      %4413 = vmatpush1.msra.mxu0 0.0
      %4414 = vmatprep.subr.mxu0 0.0
      %4415 = vmatpush1.msra.mxu0 0.0
      %4416 = vmatprep.subr.mxu0 0.0
      %4417 = vmatpush1.msra.mxu0 0.0
      %4418 = vmatprep.mubr.f32.mxu0 0.0
      %4419 = vmatmul.mubr.f32.gmra.mrb[0].mxu0 %v4307
      %v4420 = vpop.f32.mrb[0].mxu0
      %v4421 = vadd.f32 0.0, %v4420
      %v4422 = vpop.f32.mrb[0].mxu0
      %4423 = vmatprep.mubr.f32.mxu0 0.0
      %4424 = vmatmul.mubr.f32.gmra.mrb[0].mxu0 %v4310
      %v4425 = vpop.f32.mrb[0].mxu0
      %v4426 = vadd.f32 0.0, %v4425
      %v4427 = vpop.f32.mrb[0].mxu0
      %4428 = vmatprep.mubr.f32.mxu0 0.0
      %4429 = vmatmul.mubr.f32.gmra.mrb[0].mxu0 %v4313
      %v4430 = vpop.f32.mrb[0].mxu0
      %v4431 = vadd.f32 0.0, %v4430
      %v4432 = vpop.f32.mrb[0].mxu0
      %4433 = vmatprep.mubr.f32.mxu0 0.0
      %4434 = vmatmul.mubr.f32.gmra.mrb[0].mxu0 %v4316
      %v4435 = vpop.f32.mrb[0].mxu0
      %v4436 = vadd.f32 0.0, %v4435
      %v4437 = vpop.f32.mrb[0].mxu0
      %4438 = vmatprep.mubr.f32.mxu0 0.0
      %4439 = vmatmul.mubr.f32.gmra.mrb[0].mxu0 %v4319
      %v4440 = vpop.f32.mrb[0].mxu0
      %v4441 = vadd.f32 0.0, %v4440
      %v4442 = vpop.f32.mrb[0].mxu0
      %4443 = vmatprep.mubr.f32.mxu0 0.0
      %4444 = vmatmul.mubr.f32.gmra.mrb[0].mxu0 %v4322
      %v4445 = vpop.f32.mrb[0].mxu0
      %v4446 = vadd.f32 0.0, %v4445
      %v4447 = vpop.f32.mrb[0].mxu0
      %4448 = vmatprep.mubr.f32.mxu0 0.0
      %4449 = vmatmul.mubr.f32.gmra.mrb[0].mxu0 %v4325
      %v4450 = vpop.f32.mrb[0].mxu0
      %v4451 = vadd.f32 0.0, %v4450
      %v4452 = vpop.f32.mrb[0].mxu0
      %4453 = vmatprep.mubr.f32.mxu0 0.0
      %4454 = vmatmul.mubr.f32.gmra.mrb[0].mxu0 %v4328
      %v4455 = vpop.f32.mrb[0].mxu0
      %v4456 = vadd.f32 0.0, %v4455
      %v4457 = vpop.f32.mrb[0].mxu0
      %4458 = vmatprep.mubr.f32.mxu0 0.0
      %4459 = vmatmul.mubr.f32.gmra.mrb[0].mxu0 %v4331
      %v4460 = vpop.f32.mrb[0].mxu0
      %v4461 = vadd.f32 0.0, %v4460
      %v4462 = vpop.f32.mrb[0].mxu0
      %4463 = vmatprep.mubr.f32.mxu0 0.0
      %4464 = vmatmul.mubr.f32.gmra.mrb[0].mxu0 %v4334
      %v4465 = vpop.f32.mrb[0].mxu0
      %v4466 = vadd.f32 0.0, %v4465
      %v4467 = vpop.f32.mrb[0].mxu0
      %4468 = vmatprep.mubr.f32.mxu0 0.0
      %4469 = vmatmul.mubr.f32.gmra.mrb[0].mxu0 %v4337
      %v4470 = vpop.f32.mrb[0].mxu0
      %v4471 = vadd.f32 0.0, %v4470
      %v4472 = vpop.f32.mrb[0].mxu0
      %4473 = vmatprep.mubr.f32.mxu0 0.0
      %4474 = vmatmul.mubr.f32.gmra.mrb[0].mxu0 %v4340
      %v4475 = vpop.f32.mrb[0].mxu0
      %v4476 = vadd.f32 0.0, %v4475
      %v4477 = vpop.f32.mrb[0].mxu0
      %4478 = vmatprep.mubr.f32.mxu0 0.0
      %4479 = vmatmul.mubr.f32.gmra.mrb[0].mxu0 %v4343
      %v4480 = vpop.f32.mrb[0].mxu0
      %v4481 = vadd.f32 0.0, %v4480
      %v4482 = vpop.f32.mrb[0].mxu0
      %4483 = vmatprep.mubr.f32.mxu0 0.0
      %4484 = vmatmul.mubr.f32.gmra.mrb[0].mxu0 %v4346
      %v4485 = vpop.f32.mrb[0].mxu0
      %v4486 = vadd.f32 0.0, %v4485
      %v4487 = vpop.f32.mrb[0].mxu0
      %4488 = vmatprep.mubr.f32.mxu0 0.0
      %4489 = vmatmul.mubr.f32.gmra.mrb[0].mxu0 %v4349
      %v4490 = vpop.f32.mrb[0].mxu0
      %v4491 = vadd.f32 0.0, %v4490
      %v4492 = vpop.f32.mrb[0].mxu0
      %4493 = vmatprep.mubr.f32.mxu0 0.0
      %4494 = vmatmul.mubr.f32.gmra.mrb[0].mxu0 %v4352
      %v4495 = vpop.f32.mrb[0].mxu0
      %v4496 = vadd.f32 0.0, %v4495
      %v4497 = vpop.f32.mrb[0].mxu0
      %4498 = vdwg.mxu0
      %v4499 = vadd.f32 %v4271, %v4421
      %v4500 = vadd.f32 %v4272, %v4426
      %v4501 = vadd.f32 %v4273, %v4431
      %v4502 = vadd.f32 %v4274, %v4436
      %v4503 = vadd.f32 %v4275, %v4441
      %v4504 = vadd.f32 %v4276, %v4446
      %v4505 = vadd.f32 %v4277, %v4451
      %v4506 = vadd.f32 %v4278, %v4456
      %v4507 = vadd.f32 %v4279, %v4461
      %v4508 = vadd.f32 %v4280, %v4466
      %v4509 = vadd.f32 %v4281, %v4471
      %v4510 = vadd.f32 %v4282, %v4476
      %v4511 = vadd.f32 %v4283, %v4481
      %v4512 = vadd.f32 %v4284, %v4486
      %v4513 = vadd.f32 %v4285, %v4491
      %v4514 = vadd.f32 %v4286, %v4496
      %v4515 = vld [vmem:[%s4287 + $0x1] sm:$0xff]
      %v4516 = vld [vmem:[%s4287 + $0x9] sm:$0xff]
      %v4517 = vld [vmem:[%s4287 + $0x19] sm:$0xff]
      %v4518 = vld [vmem:[%s4287 + $0x21] sm:$0xff]
      %v4519 = vld [vmem:[%s4287 + $0x31] sm:$0xff]
      %v4520 = vld [vmem:[%s4287 + $0x39] sm:$0xff]
      %v4521 = vld [vmem:[%s4287 + $0x49] sm:$0xff]
      %v4522 = vld [vmem:[%s4287 + $0x51] sm:$0xff]
      %v4523 = vld [vmem:[%s4287 + $0x61] sm:$0xff]
      %v4524 = vld [vmem:[%s4287 + $0x69] sm:$0xff]
      %v4525 = vld [vmem:[%s4287 + $0x79] sm:$0xff]
      %v4526 = vld [vmem:[%s4287 + $0x81] sm:$0xff]
      %v4527 = vld [vmem:[%s4287 + $0x91] sm:$0xff]
      %v4528 = vld [vmem:[%s4287 + $0x99] sm:$0xff]
      %v4529 = vld [vmem:[%s4287 + $0xa9] sm:$0xff]
      %v4530 = vld [vmem:[%s4287 + $0xb1] sm:$0xff]
      %s4531 = scalar_lea.vmem %s4, 56
      %v4532 = vld [vmem:[%s4531] sm:$0xff]
      %v4534 = vsel %vm2921, %v4515, 0
      %v4537 = vsel %vm2921, %v4516, 0
      %v4540 = vsel %vm2921, %v4517, 0
      %v4543 = vsel %vm2921, %v4518, 0
      %v4546 = vsel %vm2921, %v4519, 0
      %v4549 = vsel %vm2921, %v4520, 0
      %v4552 = vsel %vm2921, %v4521, 0
      %v4555 = vsel %vm2921, %v4522, 0
      %v4558 = vsel %vm2921, %v4523, 0
      %v4561 = vsel %vm2921, %v4524, 0
      %v4564 = vsel %vm2921, %v4525, 0
      %v4567 = vsel %vm2921, %v4526, 0
      %v4570 = vsel %vm2921, %v4527, 0
      %v4573 = vsel %vm2921, %v4528, 0
      %v4576 = vsel %vm2921, %v4529, 0
      %v4579 = vsel %vm2921, %v4530, 0
      %4581 = vmatprep.subr.mxu0 0.0
      %4582 = vmatpush1.msra.mxu0 %v4532
      %4583 = vmatprep.subr.mxu0 0.0
      %4584 = vmatpush1.msra.mxu0 0.0
      %4585 = vmatprep.subr.mxu0 0.0
      %4586 = vmatpush1.msra.mxu0 0.0
      %4587 = vmatprep.subr.mxu0 0.0
      %4588 = vmatpush1.msra.mxu0 0.0
      %4589 = vmatprep.subr.mxu0 0.0
      %4590 = vmatpush1.msra.mxu0 0.0
      %4591 = vmatprep.subr.mxu0 0.0
      %4592 = vmatpush1.msra.mxu0 0.0
      %4593 = vmatprep.subr.mxu0 0.0
      %4594 = vmatpush1.msra.mxu0 0.0
      %4595 = vmatprep.subr.mxu0 0.0
      %4596 = vmatpush1.msra.mxu0 0.0
      %4597 = vmatprep.subr.mxu0 0.0
      %4598 = vmatpush1.msra.mxu0 0.0
      %4599 = vmatprep.subr.mxu0 0.0
      %4600 = vmatpush1.msra.mxu0 0.0
      %4601 = vmatprep.subr.mxu0 0.0
      %4602 = vmatpush1.msra.mxu0 0.0
      %4603 = vmatprep.subr.mxu0 0.0
      %4604 = vmatpush1.msra.mxu0 0.0
      %4605 = vmatprep.subr.mxu0 0.0
      %4606 = vmatpush1.msra.mxu0 0.0
      %4607 = vmatprep.subr.mxu0 0.0
      %4608 = vmatpush1.msra.mxu0 0.0
      %4609 = vmatprep.subr.mxu0 0.0
      %4610 = vmatpush1.msra.mxu0 0.0
      %4611 = vmatprep.subr.mxu0 0.0
      %4612 = vmatpush1.msra.mxu0 0.0
      %4613 = vmatprep.subr.mxu0 0.0
      %4614 = vmatpush1.msra.mxu0 0.0
      %4615 = vmatprep.subr.mxu0 0.0
      %4616 = vmatpush1.msra.mxu0 0.0
      %4617 = vmatprep.subr.mxu0 0.0
      %4618 = vmatpush1.msra.mxu0 0.0
      %4619 = vmatprep.subr.mxu0 0.0
      %4620 = vmatpush1.msra.mxu0 0.0
      %4621 = vmatprep.subr.mxu0 0.0
      %4622 = vmatpush1.msra.mxu0 0.0
      %4623 = vmatprep.subr.mxu0 0.0
      %4624 = vmatpush1.msra.mxu0 0.0
      %4625 = vmatprep.subr.mxu0 0.0
      %4626 = vmatpush1.msra.mxu0 0.0
      %4627 = vmatprep.subr.mxu0 0.0
      %4628 = vmatpush1.msra.mxu0 0.0
      %4629 = vmatprep.subr.mxu0 0.0
      %4630 = vmatpush1.msra.mxu0 0.0
      %4631 = vmatprep.subr.mxu0 0.0
      %4632 = vmatpush1.msra.mxu0 0.0
      %4633 = vmatprep.subr.mxu0 0.0
      %4634 = vmatpush1.msra.mxu0 0.0
      %4635 = vmatprep.subr.mxu0 0.0
      %4636 = vmatpush1.msra.mxu0 0.0
      %4637 = vmatprep.subr.mxu0 0.0
      %4638 = vmatpush1.msra.mxu0 0.0
      %4639 = vmatprep.subr.mxu0 0.0
      %4640 = vmatpush1.msra.mxu0 0.0
      %4641 = vmatprep.subr.mxu0 0.0
      %4642 = vmatpush1.msra.mxu0 0.0
      %4643 = vmatprep.subr.mxu0 0.0
      %4644 = vmatpush1.msra.mxu0 0.0
      %4645 = vmatprep.mubr.f32.mxu0 0.0
      %4646 = vmatmul.mubr.f32.gmra.mrb[0].mxu0 %v4534
      %v4647 = vpop.f32.mrb[0].mxu0
      %v4648 = vadd.f32 0.0, %v4647
      %v4649 = vpop.f32.mrb[0].mxu0
      %4650 = vmatprep.mubr.f32.mxu0 0.0
      %4651 = vmatmul.mubr.f32.gmra.mrb[0].mxu0 %v4537
      %v4652 = vpop.f32.mrb[0].mxu0
      %v4653 = vadd.f32 0.0, %v4652
      %v4654 = vpop.f32.mrb[0].mxu0
      %4655 = vmatprep.mubr.f32.mxu0 0.0
      %4656 = vmatmul.mubr.f32.gmra.mrb[0].mxu0 %v4540
      %v4657 = vpop.f32.mrb[0].mxu0
      %v4658 = vadd.f32 0.0, %v4657
      %v4659 = vpop.f32.mrb[0].mxu0
      %4660 = vmatprep.mubr.f32.mxu0 0.0
      %4661 = vmatmul.mubr.f32.gmra.mrb[0].mxu0 %v4543
      %v4662 = vpop.f32.mrb[0].mxu0
      %v4663 = vadd.f32 0.0, %v4662
      %v4664 = vpop.f32.mrb[0].mxu0
      %4665 = vmatprep.mubr.f32.mxu0 0.0
      %4666 = vmatmul.mubr.f32.gmra.mrb[0].mxu0 %v4546
      %v4667 = vpop.f32.mrb[0].mxu0
      %v4668 = vadd.f32 0.0, %v4667
      %v4669 = vpop.f32.mrb[0].mxu0
      %4670 = vmatprep.mubr.f32.mxu0 0.0
      %4671 = vmatmul.mubr.f32.gmra.mrb[0].mxu0 %v4549
      %v4672 = vpop.f32.mrb[0].mxu0
      %v4673 = vadd.f32 0.0, %v4672
      %v4674 = vpop.f32.mrb[0].mxu0
      %4675 = vmatprep.mubr.f32.mxu0 0.0
      %4676 = vmatmul.mubr.f32.gmra.mrb[0].mxu0 %v4552
      %v4677 = vpop.f32.mrb[0].mxu0
      %v4678 = vadd.f32 0.0, %v4677
      %v4679 = vpop.f32.mrb[0].mxu0
      %4680 = vmatprep.mubr.f32.mxu0 0.0
      %4681 = vmatmul.mubr.f32.gmra.mrb[0].mxu0 %v4555
      %v4682 = vpop.f32.mrb[0].mxu0
      %v4683 = vadd.f32 0.0, %v4682
      %v4684 = vpop.f32.mrb[0].mxu0
      %4685 = vmatprep.mubr.f32.mxu0 0.0
      %4686 = vmatmul.mubr.f32.gmra.mrb[0].mxu0 %v4558
      %v4687 = vpop.f32.mrb[0].mxu0
      %v4688 = vadd.f32 0.0, %v4687
      %v4689 = vpop.f32.mrb[0].mxu0
      %4690 = vmatprep.mubr.f32.mxu0 0.0
      %4691 = vmatmul.mubr.f32.gmra.mrb[0].mxu0 %v4561
      %v4692 = vpop.f32.mrb[0].mxu0
      %v4693 = vadd.f32 0.0, %v4692
      %v4694 = vpop.f32.mrb[0].mxu0
      %4695 = vmatprep.mubr.f32.mxu0 0.0
      %4696 = vmatmul.mubr.f32.gmra.mrb[0].mxu0 %v4564
      %v4697 = vpop.f32.mrb[0].mxu0
      %v4698 = vadd.f32 0.0, %v4697
      %v4699 = vpop.f32.mrb[0].mxu0
      %4700 = vmatprep.mubr.f32.mxu0 0.0
      %4701 = vmatmul.mubr.f32.gmra.mrb[0].mxu0 %v4567
      %v4702 = vpop.f32.mrb[0].mxu0
      %v4703 = vadd.f32 0.0, %v4702
      %v4704 = vpop.f32.mrb[0].mxu0
      %4705 = vmatprep.mubr.f32.mxu0 0.0
      %4706 = vmatmul.mubr.f32.gmra.mrb[0].mxu0 %v4570
      %v4707 = vpop.f32.mrb[0].mxu0
      %v4708 = vadd.f32 0.0, %v4707
      %v4709 = vpop.f32.mrb[0].mxu0
      %4710 = vmatprep.mubr.f32.mxu0 0.0
      %4711 = vmatmul.mubr.f32.gmra.mrb[0].mxu0 %v4573
      %v4712 = vpop.f32.mrb[0].mxu0
      %v4713 = vadd.f32 0.0, %v4712
      %v4714 = vpop.f32.mrb[0].mxu0
      %4715 = vmatprep.mubr.f32.mxu0 0.0
      %4716 = vmatmul.mubr.f32.gmra.mrb[0].mxu0 %v4576
      %v4717 = vpop.f32.mrb[0].mxu0
      %v4718 = vadd.f32 0.0, %v4717
      %v4719 = vpop.f32.mrb[0].mxu0
      %4720 = vmatprep.mubr.f32.mxu0 0.0
      %4721 = vmatmul.mubr.f32.gmra.mrb[0].mxu0 %v4579
      %v4722 = vpop.f32.mrb[0].mxu0
      %v4723 = vadd.f32 0.0, %v4722
      %v4724 = vpop.f32.mrb[0].mxu0
      %4725 = vdwg.mxu0
      %v4726 = vadd.f32 %v4499, %v4648
      %v4727 = vadd.f32 %v4500, %v4653
      %v4728 = vadd.f32 %v4501, %v4658
      %v4729 = vadd.f32 %v4502, %v4663
      %v4730 = vadd.f32 %v4503, %v4668
      %v4731 = vadd.f32 %v4504, %v4673
      %v4732 = vadd.f32 %v4505, %v4678
      %v4733 = vadd.f32 %v4506, %v4683
      %v4734 = vadd.f32 %v4507, %v4688
      %v4735 = vadd.f32 %v4508, %v4693
      %v4736 = vadd.f32 %v4509, %v4698
      %v4737 = vadd.f32 %v4510, %v4703
      %v4738 = vadd.f32 %v4511, %v4708
      %v4739 = vadd.f32 %v4512, %v4713
      %v4740 = vadd.f32 %v4513, %v4718
      %v4741 = vadd.f32 %v4514, %v4723
      %v4742 = vld [vmem:[%s4287 + $0x2] sm:$0xff]
      %v4743 = vld [vmem:[%s4287 + $0xa] sm:$0xff]
      %v4744 = vld [vmem:[%s4287 + $0x1a] sm:$0xff]
      %v4745 = vld [vmem:[%s4287 + $0x22] sm:$0xff]
      %v4746 = vld [vmem:[%s4287 + $0x32] sm:$0xff]
      %v4747 = vld [vmem:[%s4287 + $0x3a] sm:$0xff]
      %v4748 = vld [vmem:[%s4287 + $0x4a] sm:$0xff]
      %v4749 = vld [vmem:[%s4287 + $0x52] sm:$0xff]
      %v4750 = vld [vmem:[%s4287 + $0x62] sm:$0xff]
      %v4751 = vld [vmem:[%s4287 + $0x6a] sm:$0xff]
      %v4752 = vld [vmem:[%s4287 + $0x7a] sm:$0xff]
      %v4753 = vld [vmem:[%s4287 + $0x82] sm:$0xff]
      %v4754 = vld [vmem:[%s4287 + $0x92] sm:$0xff]
      %v4755 = vld [vmem:[%s4287 + $0x9a] sm:$0xff]
      %v4756 = vld [vmem:[%s4287 + $0xaa] sm:$0xff]
      %v4757 = vld [vmem:[%s4287 + $0xb2] sm:$0xff]
      %s4758 = scalar_lea.vmem %s4, 64
      %v4759 = vld [vmem:[%s4758] sm:$0xff]
      %v4761 = vsel %vm2921, %v4742, 0
      %v4764 = vsel %vm2921, %v4743, 0
      %v4767 = vsel %vm2921, %v4744, 0
      %v4770 = vsel %vm2921, %v4745, 0
      %v4773 = vsel %vm2921, %v4746, 0
      %v4776 = vsel %vm2921, %v4747, 0
      %v4779 = vsel %vm2921, %v4748, 0
      %v4782 = vsel %vm2921, %v4749, 0
      %v4785 = vsel %vm2921, %v4750, 0
      %v4788 = vsel %vm2921, %v4751, 0
      %v4791 = vsel %vm2921, %v4752, 0
      %v4794 = vsel %vm2921, %v4753, 0
      %v4797 = vsel %vm2921, %v4754, 0
      %v4800 = vsel %vm2921, %v4755, 0
      %v4803 = vsel %vm2921, %v4756, 0
      %v4806 = vsel %vm2921, %v4757, 0
      %4808 = vmatprep.subr.mxu0 0.0
      %4809 = vmatpush1.msra.mxu0 %v4759
      %4810 = vmatprep.subr.mxu0 0.0
      %4811 = vmatpush1.msra.mxu0 0.0
      %4812 = vmatprep.subr.mxu0 0.0
      %4813 = vmatpush1.msra.mxu0 0.0
      %4814 = vmatprep.subr.mxu0 0.0
      %4815 = vmatpush1.msra.mxu0 0.0
      %4816 = vmatprep.subr.mxu0 0.0
      %4817 = vmatpush1.msra.mxu0 0.0
      %4818 = vmatprep.subr.mxu0 0.0
      %4819 = vmatpush1.msra.mxu0 0.0
      %4820 = vmatprep.subr.mxu0 0.0
      %4821 = vmatpush1.msra.mxu0 0.0
      %4822 = vmatprep.subr.mxu0 0.0
      %4823 = vmatpush1.msra.mxu0 0.0
      %4824 = vmatprep.subr.mxu0 0.0
      %4825 = vmatpush1.msra.mxu0 0.0
      %4826 = vmatprep.subr.mxu0 0.0
      %4827 = vmatpush1.msra.mxu0 0.0
      %4828 = vmatprep.subr.mxu0 0.0
      %4829 = vmatpush1.msra.mxu0 0.0
      %4830 = vmatprep.subr.mxu0 0.0
      %4831 = vmatpush1.msra.mxu0 0.0
      %4832 = vmatprep.subr.mxu0 0.0
      %4833 = vmatpush1.msra.mxu0 0.0
      %4834 = vmatprep.subr.mxu0 0.0
      %4835 = vmatpush1.msra.mxu0 0.0
      %4836 = vmatprep.subr.mxu0 0.0
      %4837 = vmatpush1.msra.mxu0 0.0
      %4838 = vmatprep.subr.mxu0 0.0
      %4839 = vmatpush1.msra.mxu0 0.0
      %4840 = vmatprep.subr.mxu0 0.0
      %4841 = vmatpush1.msra.mxu0 0.0
      %4842 = vmatprep.subr.mxu0 0.0
      %4843 = vmatpush1.msra.mxu0 0.0
      %4844 = vmatprep.subr.mxu0 0.0
      %4845 = vmatpush1.msra.mxu0 0.0
      %4846 = vmatprep.subr.mxu0 0.0
      %4847 = vmatpush1.msra.mxu0 0.0
      %4848 = vmatprep.subr.mxu0 0.0
      %4849 = vmatpush1.msra.mxu0 0.0
      %4850 = vmatprep.subr.mxu0 0.0
      %4851 = vmatpush1.msra.mxu0 0.0
      %4852 = vmatprep.subr.mxu0 0.0
      %4853 = vmatpush1.msra.mxu0 0.0
      %4854 = vmatprep.subr.mxu0 0.0
      %4855 = vmatpush1.msra.mxu0 0.0
      %4856 = vmatprep.subr.mxu0 0.0
      %4857 = vmatpush1.msra.mxu0 0.0
      %4858 = vmatprep.subr.mxu0 0.0
      %4859 = vmatpush1.msra.mxu0 0.0
      %4860 = vmatprep.subr.mxu0 0.0
      %4861 = vmatpush1.msra.mxu0 0.0
      %4862 = vmatprep.subr.mxu0 0.0
      %4863 = vmatpush1.msra.mxu0 0.0
      %4864 = vmatprep.subr.mxu0 0.0
      %4865 = vmatpush1.msra.mxu0 0.0
      %4866 = vmatprep.subr.mxu0 0.0
      %4867 = vmatpush1.msra.mxu0 0.0
      %4868 = vmatprep.subr.mxu0 0.0
      %4869 = vmatpush1.msra.mxu0 0.0
      %4870 = vmatprep.subr.mxu0 0.0
      %4871 = vmatpush1.msra.mxu0 0.0
      %4872 = vmatprep.mubr.f32.mxu0 0.0
      %4873 = vmatmul.mubr.f32.gmra.mrb[0].mxu0 %v4761
      %v4874 = vpop.f32.mrb[0].mxu0
      %v4875 = vadd.f32 0.0, %v4874
      %v4876 = vpop.f32.mrb[0].mxu0
      %4877 = vmatprep.mubr.f32.mxu0 0.0
      %4878 = vmatmul.mubr.f32.gmra.mrb[0].mxu0 %v4764
      %v4879 = vpop.f32.mrb[0].mxu0
      %v4880 = vadd.f32 0.0, %v4879
      %v4881 = vpop.f32.mrb[0].mxu0
      %4882 = vmatprep.mubr.f32.mxu0 0.0
      %4883 = vmatmul.mubr.f32.gmra.mrb[0].mxu0 %v4767
      %v4884 = vpop.f32.mrb[0].mxu0
      %v4885 = vadd.f32 0.0, %v4884
      %v4886 = vpop.f32.mrb[0].mxu0
      %4887 = vmatprep.mubr.f32.mxu0 0.0
      %4888 = vmatmul.mubr.f32.gmra.mrb[0].mxu0 %v4770
      %v4889 = vpop.f32.mrb[0].mxu0
      %v4890 = vadd.f32 0.0, %v4889
      %v4891 = vpop.f32.mrb[0].mxu0
      %4892 = vmatprep.mubr.f32.mxu0 0.0
      %4893 = vmatmul.mubr.f32.gmra.mrb[0].mxu0 %v4773
      %v4894 = vpop.f32.mrb[0].mxu0
      %v4895 = vadd.f32 0.0, %v4894
      %v4896 = vpop.f32.mrb[0].mxu0
      %4897 = vmatprep.mubr.f32.mxu0 0.0
      %4898 = vmatmul.mubr.f32.gmra.mrb[0].mxu0 %v4776
      %v4899 = vpop.f32.mrb[0].mxu0
      %v4900 = vadd.f32 0.0, %v4899
      %v4901 = vpop.f32.mrb[0].mxu0
      %4902 = vmatprep.mubr.f32.mxu0 0.0
      %4903 = vmatmul.mubr.f32.gmra.mrb[0].mxu0 %v4779
      %v4904 = vpop.f32.mrb[0].mxu0
      %v4905 = vadd.f32 0.0, %v4904
      %v4906 = vpop.f32.mrb[0].mxu0
      %4907 = vmatprep.mubr.f32.mxu0 0.0
      %4908 = vmatmul.mubr.f32.gmra.mrb[0].mxu0 %v4782
      %v4909 = vpop.f32.mrb[0].mxu0
      %v4910 = vadd.f32 0.0, %v4909
      %v4911 = vpop.f32.mrb[0].mxu0
      %4912 = vmatprep.mubr.f32.mxu0 0.0
      %4913 = vmatmul.mubr.f32.gmra.mrb[0].mxu0 %v4785
      %v4914 = vpop.f32.mrb[0].mxu0
      %v4915 = vadd.f32 0.0, %v4914
      %v4916 = vpop.f32.mrb[0].mxu0
      %4917 = vmatprep.mubr.f32.mxu0 0.0
      %4918 = vmatmul.mubr.f32.gmra.mrb[0].mxu0 %v4788
      %v4919 = vpop.f32.mrb[0].mxu0
      %v4920 = vadd.f32 0.0, %v4919
      %v4921 = vpop.f32.mrb[0].mxu0
      %4922 = vmatprep.mubr.f32.mxu0 0.0
      %4923 = vmatmul.mubr.f32.gmra.mrb[0].mxu0 %v4791
      %v4924 = vpop.f32.mrb[0].mxu0
      %v4925 = vadd.f32 0.0, %v4924
      %v4926 = vpop.f32.mrb[0].mxu0
      %4927 = vmatprep.mubr.f32.mxu0 0.0
      %4928 = vmatmul.mubr.f32.gmra.mrb[0].mxu0 %v4794
      %v4929 = vpop.f32.mrb[0].mxu0
      %v4930 = vadd.f32 0.0, %v4929
      %v4931 = vpop.f32.mrb[0].mxu0
      %4932 = vmatprep.mubr.f32.mxu0 0.0
      %4933 = vmatmul.mubr.f32.gmra.mrb[0].mxu0 %v4797
      %v4934 = vpop.f32.mrb[0].mxu0
      %v4935 = vadd.f32 0.0, %v4934
      %v4936 = vpop.f32.mrb[0].mxu0
      %4937 = vmatprep.mubr.f32.mxu0 0.0
      %4938 = vmatmul.mubr.f32.gmra.mrb[0].mxu0 %v4800
      %v4939 = vpop.f32.mrb[0].mxu0
      %v4940 = vadd.f32 0.0, %v4939
      %v4941 = vpop.f32.mrb[0].mxu0
      %4942 = vmatprep.mubr.f32.mxu0 0.0
      %4943 = vmatmul.mubr.f32.gmra.mrb[0].mxu0 %v4803
      %v4944 = vpop.f32.mrb[0].mxu0
      %v4945 = vadd.f32 0.0, %v4944
      %v4946 = vpop.f32.mrb[0].mxu0
      %4947 = vmatprep.mubr.f32.mxu0 0.0
      %4948 = vmatmul.mubr.f32.gmra.mrb[0].mxu0 %v4806
      %v4949 = vpop.f32.mrb[0].mxu0
      %v4950 = vadd.f32 0.0, %v4949
      %v4951 = vpop.f32.mrb[0].mxu0
      %4952 = vdwg.mxu0
      %v4953 = vadd.f32 %v4726, %v4875
      %v4954 = vadd.f32 %v4727, %v4880
      %v4955 = vadd.f32 %v4728, %v4885
      %v4956 = vadd.f32 %v4729, %v4890
      %v4957 = vadd.f32 %v4730, %v4895
      %v4958 = vadd.f32 %v4731, %v4900
      %v4959 = vadd.f32 %v4732, %v4905
      %v4960 = vadd.f32 %v4733, %v4910
      %v4961 = vadd.f32 %v4734, %v4915
      %v4962 = vadd.f32 %v4735, %v4920
      %v4963 = vadd.f32 %v4736, %v4925
      %v4964 = vadd.f32 %v4737, %v4930
      %v4965 = vadd.f32 %v4738, %v4935
      %v4966 = vadd.f32 %v4739, %v4940
      %v4967 = vadd.f32 %v4740, %v4945
      %v4968 = vadd.f32 %v4741, %v4950
      %v4969 = vld [vmem:[%s5] sm:$0x1]
      %v4971 = vlaneseq
      %v4972 = vshrl.u32 %v4971, 7
      %v4973 = vsub.s32 0, %v4972
      %v4974 = vrot.slane %v4969, %v4973
      %v4976 = vmul.f32 %v4953, %v4974
      %v4977 = vmul.f32 %v4954, %v4974
      %v4978 = vmul.f32 %v4955, %v4974
      %v4979 = vmul.f32 %v4956, %v4974
      %v4980 = vmul.f32 %v4957, %v4974
      %v4981 = vmul.f32 %v4958, %v4974
      %v4982 = vmul.f32 %v4959, %v4974
      %v4983 = vmul.f32 %v4960, %v4974
      %v4984 = vmul.f32 %v4961, %v4974
      %v4985 = vmul.f32 %v4962, %v4974
      %v4986 = vmul.f32 %v4963, %v4974
      %v4987 = vmul.f32 %v4964, %v4974
      %v4988 = vmul.f32 %v4965, %v4974
      %v4989 = vmul.f32 %v4966, %v4974
      %v4990 = vmul.f32 %v4967, %v4974
      %v4991 = vmul.f32 %v4968, %v4974
      %v4992 = vld [vmem:[%s6] sm:$0x1]
      %v4994 = vlaneseq
      %v4995 = vshrl.u32 %v4994, 7
      %v4996 = vsub.s32 0, %v4995
      %v4997 = vrot.slane %v4992, %v4996
      %v4999 = vadd.f32 %v4976, %v4997
      %v5000 = vadd.f32 %v4977, %v4997
      %v5001 = vadd.f32 %v4978, %v4997
      %v5002 = vadd.f32 %v4979, %v4997
      %v5003 = vadd.f32 %v4980, %v4997
      %v5004 = vadd.f32 %v4981, %v4997
      %v5005 = vadd.f32 %v4982, %v4997
      %v5006 = vadd.f32 %v4983, %v4997
      %v5007 = vadd.f32 %v4984, %v4997
      %v5008 = vadd.f32 %v4985, %v4997
      %v5009 = vadd.f32 %v4986, %v4997
      %v5010 = vadd.f32 %v4987, %v4997
      %v5011 = vadd.f32 %v4988, %v4997
      %v5012 = vadd.f32 %v4989, %v4997
      %v5013 = vadd.f32 %v4990, %v4997
      %v5014 = vadd.f32 %v4991, %v4997
      %v5015 = vmax.f32 %v4999, 0.0
      %v5016 = vmax.f32 %v5000, 0.0
      %v5017 = vmax.f32 %v5001, 0.0
      %v5018 = vmax.f32 %v5002, 0.0
      %v5019 = vmax.f32 %v5003, 0.0
      %v5020 = vmax.f32 %v5004, 0.0
      %v5021 = vmax.f32 %v5005, 0.0
      %v5022 = vmax.f32 %v5006, 0.0
      %v5023 = vmax.f32 %v5007, 0.0
      %v5024 = vmax.f32 %v5008, 0.0
      %v5025 = vmax.f32 %v5009, 0.0
      %v5026 = vmax.f32 %v5010, 0.0
      %v5027 = vmax.f32 %v5011, 0.0
      %v5028 = vmax.f32 %v5012, 0.0
      %v5029 = vmax.f32 %v5013, 0.0
      %v5030 = vmax.f32 %v5014, 0.0
      %5031 = vst.msk [vmem:[%s302] sm:$0xff] %vm2921, %v5015
      %5032 = vst.msk [vmem:[%s302 + $0x8] sm:$0xff] %vm2921, %v5016
      %5033 = vst.msk [vmem:[%s302 + $0x10] sm:$0xff] %vm2921, %v5017
      %5034 = vst.msk [vmem:[%s302 + $0x18] sm:$0xff] %vm2921, %v5018
      %5035 = vst.msk [vmem:[%s302 + $0x20] sm:$0xff] %vm2921, %v5019
      %5036 = vst.msk [vmem:[%s302 + $0x28] sm:$0xff] %vm2921, %v5020
      %5037 = vst.msk [vmem:[%s302 + $0x30] sm:$0xff] %vm2921, %v5021
      %5038 = vst.msk [vmem:[%s302 + $0x38] sm:$0xff] %vm2921, %v5022
      %5039 = vst.msk [vmem:[%s302 + $0x40] sm:$0xff] %vm2921, %v5023
      %5040 = vst.msk [vmem:[%s302 + $0x48] sm:$0xff] %vm2921, %v5024
      %5041 = vst.msk [vmem:[%s302 + $0x50] sm:$0xff] %vm2921, %v5025
      %5042 = vst.msk [vmem:[%s302 + $0x58] sm:$0xff] %vm2921, %v5026
      %5043 = vst.msk [vmem:[%s302 + $0x60] sm:$0xff] %vm2921, %v5027
      %5044 = vst.msk [vmem:[%s302 + $0x68] sm:$0xff] %vm2921, %v5028
      %5045 = vst.msk [vmem:[%s302 + $0x70] sm:$0xff] %vm2921, %v5029
      %5046 = vst.msk [vmem:[%s302 + $0x78] sm:$0xff] %vm2921, %v5030
      %s5047 = smul.u32 8, %s23
      %p5048 = scmp.lt.s32.totalorder %s22, 1
      %s5049 = scalar_select %p5048, %s22, 1
      %p5050 = scmp.lt.s32.totalorder %s5047, 15
      %s5051 = scalar_select %p5050, %s5047, 15
      %s5052 = smul.addr %s5051, 2
      %s5053 = smul.addr %s5049, 32
      %s5054 = sadd.s32 %s5052, %s5053
      %s5055 = smul.addr %s5054, 8
      %s5056 = scalar_lea.vmem %s7, %s5055
      // Predicated region
      $region65: #{tpu_custom_call.1} parent=47 // pred_check
        %p5057 = pneg %p202
      $region66: #{tpu_custom_call.1} parent=47 // pred_check_branch
        %5059 = sbr.rel (%p5057) target = $region68
      $region67: #{tpu_custom_call.1} parent=47 // pred_region
        %s5060 = smul.u32 8, %s23
      $region68: #{tpu_custom_call.1} parent=47 // pred_fallthru
        _
    $region48: #{tpu_custom_call.1} parent=5 // pred_fallthru
      _
    %p5061 = scmp.le.s32.totalorder 2, %s13
    // Predicated region
    $region69: #{tpu_custom_call.1} parent=5 // pred_check
      %p5062 = pneg %p5061
    $region70: #{tpu_custom_call.1} parent=5 // pred_check_branch
      %5064 = sbr.rel (%p5062) target = $region72
    $region71: #{tpu_custom_call.1} parent=5 // pred_region
      %s5065 = ssub.s32 %s13, 2
      // Predicated region
      $region73: #{tpu_custom_call.1} parent=71 // pred_check
        %p5066 = pneg %p208
      $region74: #{tpu_custom_call.1} parent=71 // pred_check_branch
        %5068 = sbr.rel (%p5066) target = $region76
      $region75: #{tpu_custom_call.1} parent=71 // pred_region
        %s5069 = smul.u32 8, %s25
        %p5070 = scmp.lt.s32.totalorder %s24, 1
        %s5071 = scalar_select %p5070, %s24, 1
        %p5072 = scmp.lt.s32.totalorder %s5069, 15
        %s5073 = scalar_select %p5072, %s5069, 15
        %s5074 = smul.addr %s5073, 2
        %s5075 = smul.addr %s5071, 32
        %s5076 = sadd.s32 %s5074, %s5075
        %s5077 = smul.addr %s5076, 8
        %s5078 = scalar_lea.vmem %s7, %s5077
      $region76: #{tpu_custom_call.1} parent=71 // pred_fallthru
        _
    $region72: #{tpu_custom_call.1} parent=5 // pred_fallthru
      _
  $region6: #{tpu_custom_call.1} parent=0 // loop_footer
    %s17 = sadd.s32 1, %s13
  $region7: #{tpu_custom_call.1} parent=0 // loop_footer_branch
    %12 = sbr.rel target = $region3
  $region8: #{tpu_custom_call.1} parent=0 // loop_exit
    _

</llo_original>
